<compile_context>
chip_gen: v6e
topology: v6e:2x2x1
jax: 0.10.0
libtpu: 0.0.40
codegen_flags: <defaults>
</compile_context>

<pallas_src>
import jax
import jax.numpy as jnp
from jax import lax
from jax.experimental import pallas as pl
from jax.experimental.pallas import tpu as pltpu

MXU_DTYPE = jnp.bfloat16       # conv matmul inputs (accumulation stays f32)
BN_EPS = 1e-5                  # PyTorch BatchNorm2d default
VMEM_LIMIT = 32 * 1024 * 1024  # safe on v5e/v6e/v7x; all blocks here are KB-scale


def _interp_matrix(n_in, n_out):
    """Bilinear interpolation matrix, align_corners=True (UpsamplingBilinear2d)."""
    if n_in == 1:
        return jnp.ones((n_out, 1), jnp.float32)
    src = jnp.arange(n_out, dtype=jnp.float32) * (n_in - 1) / (n_out - 1)
    lo = jnp.clip(jnp.floor(src).astype(jnp.int32), 0, n_in - 2)
    frac = src - lo.astype(jnp.float32)
    rows = jnp.arange(n_out)
    m = jnp.zeros((n_out, n_in), jnp.float32)
    m = m.at[rows, lo].add(1.0 - frac)
    m = m.at[rows, lo + 1].add(frac)
    return m


def _pick_channel_tile(cout, h, w, budget_bytes=12 * 1024 * 1024):
    """Largest channel tile whose double-buffered K2 in+out blocks fit the budget."""
    per_c = (h * w + (2 * h) * (2 * w)) * 4 * 2        # f32 in + out, x2 buffers
    valid = [d for d in range(1, cout + 1)
             if cout % d == 0 and (d % 8 == 0 or d == cout)]
    fitting = [d for d in valid if d * per_c <= budget_bytes]
    return max(fitting) if fitting else min(valid)


# ---------------------------------------------------------------------------
# K1: 3x3 conv on one output row (in-kernel im2col via 3 shifted row refs)
#     + per-row BatchNorm Welford partials.
# ---------------------------------------------------------------------------
def _conv_bnstats_kernel(x0_ref, x1_ref, x2_ref, w_ref, y_ref, st_ref):
    # x{0,1,2}_ref: (1, 1, Cin, W+2) bf16 padded input rows h, h+1, h+2
    #               of the (N, H+2, Cin, W+2) layout.
    # w_ref:        (9, Cout, Cin) bf16, tap k = kh*3 + kw.
    # y_ref:        (1, 1, Cout, W) f32 conv output row (NHCW layout).
    # st_ref:       (1, 1, Cout, 2) f32 per-row [sum, M2] Welford partials.
    cout = y_ref.shape[2]
    w_out = y_ref.shape[3]
    xs = (x0_ref[0, 0], x1_ref[0, 0], x2_ref[0, 0])          # each (Cin, W+2)
    acc = jnp.zeros((cout, w_out), jnp.float32)
    for kh in range(3):                                       # static unroll
        for kw in range(3):
            acc += jnp.dot(w_ref[kh * 3 + kw], xs[kh][:, kw:kw + w_out],
                           preferred_element_type=jnp.float32)
    y_ref[0, 0] = acc
    row_sum = jnp.sum(acc, axis=1, keepdims=True)             # (Cout, 1)
    row_mean = row_sum * (1.0 / w_out)
    row_m2 = jnp.sum((acc - row_mean) ** 2, axis=1, keepdims=True)
    st_ref[0, 0] = jnp.concatenate([row_sum, row_m2], axis=1)  # (Cout, 2)


# ---------------------------------------------------------------------------
# K2: folded BN affine + ReLU + separable bilinear x2 upsample, NCHW output.
# ---------------------------------------------------------------------------
def _bn_relu_upsample_kernel(y_ref, sc_ref, sh_ref, ah_ref, awt_ref, o_ref):
    # y_ref:  (1, H, TC, W) f32 conv output slab (NHCW layout).
    # sc_ref / sh_ref: (Cout,) f32 folded BN scale / shift in SMEM.
    # ah_ref: (H2, H) row-interp matrix; awt_ref: (W, W2) col-interp transposed.
    # o_ref:  (1, TC, H2, W2) f32 -- NCHW output block (W2 on the lane axis).
    tc = y_ref.shape[2]
    cb = pl.program_id(1)
    ah = ah_ref[...]
    awt = awt_ref[...]
    for c in range(tc):                          # static unroll; TC is small
        sc = sc_ref[cb * tc + c]
        sh = sh_ref[cb * tc + c]
        a = jnp.maximum(y_ref[0, :, c, :] * sc + sh, 0.0)                # (H, W)
        rows = jnp.dot(ah, a, preferred_element_type=jnp.float32)        # (H2, W)
        o_ref[0, c] = jnp.dot(rows, awt, preferred_element_type=jnp.float32)


@jax.jit
def unet_up_forward(x_nchw, weight_oihw, bias, gamma, beta):
    """Forward of unetUp. Returns NCHW float32 output of shape (N, Cout, 2H, 2W)."""
    f32 = jnp.float32
    N, Cin, H, W = x_nchw.shape
    Cout, Cin_w, KH, KW = weight_oihw.shape
    assert Cin == Cin_w and KH == 3 and KW == 3
    H2, W2 = 2 * H, 2 * W
    Wp = W + 2
    # Conv bias is a per-channel constant; training-mode BN cancels it exactly
    # (batch mean shifts by the bias, variance is unchanged) -> drop it.
    del bias

    # ---- wrapper glue (small, fused by XLA): NCHW -> padded NHCW, bf16 ----
    x_nhcw = jnp.transpose(x_nchw, (0, 2, 1, 3)).astype(f32)
    x_pad = jnp.pad(x_nhcw, ((0, 0), (1, 1), (0, 0), (1, 1))).astype(MXU_DTYPE)

    # weight (O, I, KH, KW) -> (KH*KW, O, I), tap k = kh*3 + kw
    w_taps = jnp.transpose(weight_oihw, (2, 3, 0, 1)).reshape(KH * KW, Cout, Cin)
    w_taps = w_taps.astype(MXU_DTYPE)

    # ---- K1: conv rows + per-row BN Welford partials ----
    k1_cost = pl.CostEstimate(
        flops=2 * N * H * W * Cout * KH * KW * Cin + 6 * N * H * W * Cout,
        transcendentals=0,
        bytes_accessed=(3 * x_pad.size + w_taps.size) * 2
        + N * H * Cout * (W + 2) * 4)
    y, stats = pl.pallas_call(
        _conv_bnstats_kernel,
        grid=(N, H),
        in_specs=[
            pl.BlockSpec((1, 1, Cin, Wp), lambda n, h: (n, h, 0, 0)),
            pl.BlockSpec((1, 1, Cin, Wp), lambda n, h: (n, h + 1, 0, 0)),
            pl.BlockSpec((1, 1, Cin, Wp), lambda n, h: (n, h + 2, 0, 0)),
            pl.BlockSpec((KH * KW, Cout, Cin), lambda n, h: (0, 0, 0)),
        ],
        out_specs=(
            pl.BlockSpec((1, 1, Cout, W), lambda n, h: (n, h, 0, 0)),
            pl.BlockSpec((1, 1, Cout, 2), lambda n, h: (n, h, 0, 0)),
        ),
        out_shape=(
            jax.ShapeDtypeStruct((N, H, Cout, W), f32),
            jax.ShapeDtypeStruct((N, H, Cout, 2), f32),
        ),
        compiler_params=pltpu.CompilerParams(
            dimension_semantics=("parallel", "parallel"),
            vmem_limit_bytes=VMEM_LIMIT),
        cost_estimate=k1_cost,
    )(x_pad, x_pad, x_pad, w_taps)

    # ---- finalize BN batch stats: Chan/Welford combine of per-row partials ----
    R = N * H * W
    row_sum = stats[..., 0]                               # (N, H, Cout)
    row_m2 = stats[..., 1]
    total = jnp.sum(row_sum, axis=(0, 1))                 # (Cout,)
    mean = total / R
    row_mean = row_sum / W
    m2 = jnp.sum(row_m2, axis=(0, 1)) \
        + W * jnp.sum((row_mean - mean) ** 2, axis=(0, 1))
    var = jnp.maximum(m2 / R, 0.0)                        # biased, as BN training
    inv_std = lax.rsqrt(var + BN_EPS)
    scale = gamma.astype(f32) * inv_std                   # BN(y) = y*scale + shift
    shift = beta.astype(f32) - mean * scale

    a_h = _interp_matrix(H, H2)                           # (H2, H)
    a_wt = _interp_matrix(W, W2).T                        # (W, W2)

    # ---- K2: BN affine + ReLU + bilinear x2 (both axes), NCHW output ----
    TC = _pick_channel_tile(Cout, H, W)
    k2_cost = pl.CostEstimate(
        flops=N * Cout * (2 * H2 * H * W + 2 * H2 * W * W2 + 3 * H * W),
        transcendentals=0,
        bytes_accessed=(N * H * Cout * W + N * Cout * H2 * W2
                        + H2 * H + W * W2 + 2 * Cout) * 4)
    out = pl.pallas_call(
        _bn_relu_upsample_kernel,
        grid=(N, Cout // TC),
        in_specs=[
            pl.BlockSpec((1, H, TC, W), lambda n, cb: (n, 0, cb, 0)),
            pl.BlockSpec(memory_space=pltpu.MemorySpace.SMEM),
            pl.BlockSpec(memory_space=pltpu.MemorySpace.SMEM),
            pl.BlockSpec((H2, H), lambda n, cb: (0, 0)),
            pl.BlockSpec((W, W2), lambda n, cb: (0, 0)),
        ],
        out_specs=pl.BlockSpec((1, TC, H2, W2), lambda n, cb: (n, cb, 0, 0)),
        out_shape=jax.ShapeDtypeStruct((N, Cout, H2, W2), f32),
        compiler_params=pltpu.CompilerParams(
            dimension_semantics=("parallel", "parallel"),
            vmem_limit_bytes=VMEM_LIMIT),
        cost_estimate=k2_cost,
    )(y, scale, shift, a_h, a_wt)
    return out


def unet_up_reference(x_nchw, weight_oihw, bias, gamma, beta, eps=BN_EPS):
    """Pure-JAX reference matching PyTorch unetUp.forward (training-mode BN)."""
    f32 = jnp.float32
    y = lax.conv_general_dilated(
        x_nchw.astype(f32), weight_oihw.astype(f32),
        window_strides=(1, 1), padding=((1, 1), (1, 1)),
        dimension_numbers=("NCHW", "OIHW", "NCHW"),
        precision=lax.Precision.HIGHEST,
    ) + bias.reshape(1, -1, 1, 1)
    mean = jnp.mean(y, axis=(0, 2, 3), keepdims=True)
    var = jnp.mean((y - mean) ** 2, axis=(0, 2, 3), keepdims=True)
    yn = (y - mean) * lax.rsqrt(var + eps) * gamma.reshape(1, -1, 1, 1) \
        + beta.reshape(1, -1, 1, 1)
    a = jnp.maximum(yn, 0.0)

    # Bilinear x2 upsample, align_corners=True, gather form.
    N, C, H, W = a.shape

    def coords(n_in, n_out):
        src = jnp.arange(n_out, dtype=f32) * (n_in - 1) / (n_out - 1)
        lo = jnp.clip(jnp.floor(src).astype(jnp.int32), 0, n_in - 2)
        return lo, src - lo.astype(f32)

    hlo, hf = coords(H, 2 * H)
    wlo, wf = coords(W, 2 * W)
    rows = a[:, :, hlo, :] * (1 - hf)[None, None, :, None] \
        + a[:, :, hlo + 1, :] * hf[None, None, :, None]
    out = rows[:, :, :, wlo] * (1 - wf) + rows[:, :, :, wlo + 1] * wf
    return out


if __name__ == "__main__":
    # unetUp(in_size=4, out_size=8) on input (2, 4, 16, 16) -> (2, 8, 32, 32)
    N, Cin, H, W = 2, 4, 16, 16
    Cout = 8

    key = jax.random.PRNGKey(0)
    kx, kwt, kb, kg, kbe = jax.random.split(key, 5)
    x = jax.random.normal(kx, (N, Cin, H, W), dtype=jnp.float32)
    weight = 0.1 * jax.random.normal(kwt, (Cout, Cin, 3, 3), dtype=jnp.float32)
    bias = 0.1 * jax.random.normal(kb, (Cout,), dtype=jnp.float32)
    gamma = 1.0 + 0.1 * jax.random.normal(kg, (Cout,), dtype=jnp.float32)
    beta = 0.1 * jax.random.normal(kbe, (Cout,), dtype=jnp.float32)

    out = unet_up_forward(x, weight, bias, gamma, beta)
    out = jax.block_until_ready(out)

    ref = unet_up_reference(x, weight, bias, gamma, beta)
    assert out.shape == (N, Cout, 2 * H, 2 * W), out.shape
    # Conv matmul runs with bf16 MXU inputs (f32 accumulation), so compare
    # against the full-f32 reference at 2e-2.
    max_err = float(jnp.max(jnp.abs(out - ref)))
    assert jnp.allclose(out, ref, rtol=2e-2, atol=2e-2), max_err

    print("KERNEL_OK")
</pallas_src>

<mosaic_0001>
module attributes {stable_mosaic.version = 11 : i64} {
  func.func private @main(%arg0: i32) attributes {dimension_semantics = [#tpu.dimension_semantics<core_parallel>], iteration_bounds = array<i64: 2>, tpu.core_type = #tpu.core_type<sc_scalar_subcore>, window_params = []} {
    return
  }
}

module attributes {stable_mosaic.version = 11 : i64} {
  func.func private @main(%arg0: i32) attributes {dimension_semantics = [#tpu.dimension_semantics<core_parallel>], iteration_bounds = array<i64: 2>, tpu.core_type = #tpu.core_type<sc_scalar_subcore>, window_params = []} {
    return
  }
}

module attributes {stable_mosaic.version = 11 : i64} {
  func.func @_conv_bnstats_kernel(%arg0: i32, %arg1: i32, %arg2: memref<1x1x4x18xbf16, #tpu.memory_space<vmem>>, %arg3: memref<1x1x4x18xbf16, #tpu.memory_space<vmem>>, %arg4: memref<1x1x4x18xbf16, #tpu.memory_space<vmem>>, %arg5: memref<9x8x4xbf16, #tpu.memory_space<vmem>>, %arg6: memref<1x1x8x16xf32, #tpu.memory_space<vmem>>, %arg7: memref<1x1x8x2xf32, #tpu.memory_space<vmem>>) attributes {dimension_semantics = [#tpu.dimension_semantics<parallel>, #tpu.dimension_semantics<parallel>], iteration_bounds = array<i64: 2, 16>, scalar_prefetch = 0 : i64, scratch_operands = 0 : i64, tpu.core_type = #tpu.core_type<tc>, window_params = [{transform_indices = @transform_0, window_bounds = array<i64: 1, 1, 4, 18>}, {transform_indices = @transform_1, window_bounds = array<i64: 1, 1, 4, 18>}, {transform_indices = @transform_2, window_bounds = array<i64: 1, 1, 4, 18>}, {pipeline_mode = #tpu.pipeline_mode<synchronous>, transform_indices = @transform_3, window_bounds = array<i64: 9, 8, 4>}, {transform_indices = @transform_4, window_bounds = array<i64: 1, 1, 8, 16>}, {transform_indices = @transform_5, window_bounds = array<i64: 1, 1, 8, 2>}]} {
    %c0 = arith.constant 0 : index
    %c0_0 = arith.constant 0 : index
    %c0_1 = arith.constant 0 : index
    %c0_2 = arith.constant 0 : index
    %0 = vector.load %arg2[%c0, %c0_0, %c0_1, %c0_2] : memref<1x1x4x18xbf16, #tpu.memory_space<vmem>>, vector<1x1x4x18xbf16>
    %1 = vector.shape_cast %0 : vector<1x1x4x18xbf16> to vector<4x18xbf16>
    %c0_3 = arith.constant 0 : index
    %c0_4 = arith.constant 0 : index
    %c0_5 = arith.constant 0 : index
    %c0_6 = arith.constant 0 : index
    %2 = vector.load %arg3[%c0_3, %c0_4, %c0_5, %c0_6] : memref<1x1x4x18xbf16, #tpu.memory_space<vmem>>, vector<1x1x4x18xbf16>
    %3 = vector.shape_cast %2 : vector<1x1x4x18xbf16> to vector<4x18xbf16>
    %c0_7 = arith.constant 0 : index
    %c0_8 = arith.constant 0 : index
    %c0_9 = arith.constant 0 : index
    %c0_10 = arith.constant 0 : index
    %4 = vector.load %arg4[%c0_7, %c0_8, %c0_9, %c0_10] : memref<1x1x4x18xbf16, #tpu.memory_space<vmem>>, vector<1x1x4x18xbf16>
    %5 = vector.shape_cast %4 : vector<1x1x4x18xbf16> to vector<4x18xbf16>
    %cst = arith.constant 0.000000e+00 : f32
    %6 = vector.broadcast %cst : f32 to vector<8x16xf32>
    %c0_11 = arith.constant 0 : index
    %c0_12 = arith.constant 0 : index
    %c0_13 = arith.constant 0 : index
    %7 = vector.load %arg5[%c0_11, %c0_12, %c0_13] : memref<9x8x4xbf16, #tpu.memory_space<vmem>>, vector<1x8x4xbf16>
    %8 = vector.shape_cast %7 : vector<1x8x4xbf16> to vector<8x4xbf16>
    %9 = vector.extract_strided_slice %1 {offsets = [0, 0], sizes = [4, 16], strides = [1, 1]} : vector<4x18xbf16> to vector<4x16xbf16>
    %cst_14 = arith.constant dense<0.000000e+00> : vector<8x16xf32>
    %10 = tpu.matmul %8, %9, %cst_14 {dimension_numbers = #tpu.dot_dimension_numbers<[1], [0], [0], [1], [0, 0, 1, 1], [], []>} : vector<8x4xbf16>, vector<4x16xbf16>, vector<8x16xf32> -> vector<8x16xf32>
    %11 = arith.addf %6, %10 : vector<8x16xf32>
    %c1 = arith.constant 1 : index
    %c0_15 = arith.constant 0 : index
    %c0_16 = arith.constant 0 : index
    %12 = vector.load %arg5[%c1, %c0_15, %c0_16] : memref<9x8x4xbf16, #tpu.memory_space<vmem>>, vector<1x8x4xbf16>
    %13 = vector.shape_cast %12 : vector<1x8x4xbf16> to vector<8x4xbf16>
    %14 = vector.extract_strided_slice %1 {offsets = [0, 1], sizes = [4, 16], strides = [1, 1]} : vector<4x18xbf16> to vector<4x16xbf16>
    %cst_17 = arith.constant dense<0.000000e+00> : vector<8x16xf32>
    %15 = tpu.matmul %13, %14, %cst_17 {dimension_numbers = #tpu.dot_dimension_numbers<[1], [0], [0], [1], [0, 0, 1, 1], [], []>} : vector<8x4xbf16>, vector<4x16xbf16>, vector<8x16xf32> -> vector<8x16xf32>
    %16 = arith.addf %11, %15 : vector<8x16xf32>
    %c2 = arith.constant 2 : index
    %c0_18 = arith.constant 0 : index
    %c0_19 = arith.constant 0 : index
    %17 = vector.load %arg5[%c2, %c0_18, %c0_19] : memref<9x8x4xbf16, #tpu.memory_space<vmem>>, vector<1x8x4xbf16>
    %18 = vector.shape_cast %17 : vector<1x8x4xbf16> to vector<8x4xbf16>
    %19 = vector.extract_strided_slice %1 {offsets = [0, 2], sizes = [4, 16], strides = [1, 1]} : vector<4x18xbf16> to vector<4x16xbf16>
    %cst_20 = arith.constant dense<0.000000e+00> : vector<8x16xf32>
    %20 = tpu.matmul %18, %19, %cst_20 {dimension_numbers = #tpu.dot_dimension_numbers<[1], [0], [0], [1], [0, 0, 1, 1], [], []>} : vector<8x4xbf16>, vector<4x16xbf16>, vector<8x16xf32> -> vector<8x16xf32>
    %21 = arith.addf %16, %20 : vector<8x16xf32>
    %c3 = arith.constant 3 : index
    %c0_21 = arith.constant 0 : index
    %c0_22 = arith.constant 0 : index
    %22 = vector.load %arg5[%c3, %c0_21, %c0_22] : memref<9x8x4xbf16, #tpu.memory_space<vmem>>, vector<1x8x4xbf16>
    %23 = vector.shape_cast %22 : vector<1x8x4xbf16> to vector<8x4xbf16>
    %24 = vector.extract_strided_slice %3 {offsets = [0, 0], sizes = [4, 16], strides = [1, 1]} : vector<4x18xbf16> to vector<4x16xbf16>
    %cst_23 = arith.constant dense<0.000000e+00> : vector<8x16xf32>
    %25 = tpu.matmul %23, %24, %cst_23 {dimension_numbers = #tpu.dot_dimension_numbers<[1], [0], [0], [1], [0, 0, 1, 1], [], []>} : vector<8x4xbf16>, vector<4x16xbf16>, vector<8x16xf32> -> vector<8x16xf32>
    %26 = arith.addf %21, %25 : vector<8x16xf32>
    %c4 = arith.constant 4 : index
    %c0_24 = arith.constant 0 : index
    %c0_25 = arith.constant 0 : index
    %27 = vector.load %arg5[%c4, %c0_24, %c0_25] : memref<9x8x4xbf16, #tpu.memory_space<vmem>>, vector<1x8x4xbf16>
    %28 = vector.shape_cast %27 : vector<1x8x4xbf16> to vector<8x4xbf16>
    %29 = vector.extract_strided_slice %3 {offsets = [0, 1], sizes = [4, 16], strides = [1, 1]} : vector<4x18xbf16> to vector<4x16xbf16>
    %cst_26 = arith.constant dense<0.000000e+00> : vector<8x16xf32>
    %30 = tpu.matmul %28, %29, %cst_26 {dimension_numbers = #tpu.dot_dimension_numbers<[1], [0], [0], [1], [0, 0, 1, 1], [], []>} : vector<8x4xbf16>, vector<4x16xbf16>, vector<8x16xf32> -> vector<8x16xf32>
    %31 = arith.addf %26, %30 : vector<8x16xf32>
    %c5 = arith.constant 5 : index
    %c0_27 = arith.constant 0 : index
    %c0_28 = arith.constant 0 : index
    %32 = vector.load %arg5[%c5, %c0_27, %c0_28] : memref<9x8x4xbf16, #tpu.memory_space<vmem>>, vector<1x8x4xbf16>
    %33 = vector.shape_cast %32 : vector<1x8x4xbf16> to vector<8x4xbf16>
    %34 = vector.extract_strided_slice %3 {offsets = [0, 2], sizes = [4, 16], strides = [1, 1]} : vector<4x18xbf16> to vector<4x16xbf16>
    %cst_29 = arith.constant dense<0.000000e+00> : vector<8x16xf32>
    %35 = tpu.matmul %33, %34, %cst_29 {dimension_numbers = #tpu.dot_dimension_numbers<[1], [0], [0], [1], [0, 0, 1, 1], [], []>} : vector<8x4xbf16>, vector<4x16xbf16>, vector<8x16xf32> -> vector<8x16xf32>
    %36 = arith.addf %31, %35 : vector<8x16xf32>
    %c6 = arith.constant 6 : index
    %c0_30 = arith.constant 0 : index
    %c0_31 = arith.constant 0 : index
    %37 = vector.load %arg5[%c6, %c0_30, %c0_31] : memref<9x8x4xbf16, #tpu.memory_space<vmem>>, vector<1x8x4xbf16>
    %38 = vector.shape_cast %37 : vector<1x8x4xbf16> to vector<8x4xbf16>
    %39 = vector.extract_strided_slice %5 {offsets = [0, 0], sizes = [4, 16], strides = [1, 1]} : vector<4x18xbf16> to vector<4x16xbf16>
    %cst_32 = arith.constant dense<0.000000e+00> : vector<8x16xf32>
    %40 = tpu.matmul %38, %39, %cst_32 {dimension_numbers = #tpu.dot_dimension_numbers<[1], [0], [0], [1], [0, 0, 1, 1], [], []>} : vector<8x4xbf16>, vector<4x16xbf16>, vector<8x16xf32> -> vector<8x16xf32>
    %41 = arith.addf %36, %40 : vector<8x16xf32>
    %c7 = arith.constant 7 : index
    %c0_33 = arith.constant 0 : index
    %c0_34 = arith.constant 0 : index
    %42 = vector.load %arg5[%c7, %c0_33, %c0_34] : memref<9x8x4xbf16, #tpu.memory_space<vmem>>, vector<1x8x4xbf16>
    %43 = vector.shape_cast %42 : vector<1x8x4xbf16> to vector<8x4xbf16>
    %44 = vector.extract_strided_slice %5 {offsets = [0, 1], sizes = [4, 16], strides = [1, 1]} : vector<4x18xbf16> to vector<4x16xbf16>
    %cst_35 = arith.constant dense<0.000000e+00> : vector<8x16xf32>
    %45 = tpu.matmul %43, %44, %cst_35 {dimension_numbers = #tpu.dot_dimension_numbers<[1], [0], [0], [1], [0, 0, 1, 1], [], []>} : vector<8x4xbf16>, vector<4x16xbf16>, vector<8x16xf32> -> vector<8x16xf32>
    %46 = arith.addf %41, %45 : vector<8x16xf32>
    %c8 = arith.constant 8 : index
    %c0_36 = arith.constant 0 : index
    %c0_37 = arith.constant 0 : index
    %47 = vector.load %arg5[%c8, %c0_36, %c0_37] : memref<9x8x4xbf16, #tpu.memory_space<vmem>>, vector<1x8x4xbf16>
    %48 = vector.shape_cast %47 : vector<1x8x4xbf16> to vector<8x4xbf16>
    %49 = vector.extract_strided_slice %5 {offsets = [0, 2], sizes = [4, 16], strides = [1, 1]} : vector<4x18xbf16> to vector<4x16xbf16>
    %cst_38 = arith.constant dense<0.000000e+00> : vector<8x16xf32>
    %50 = tpu.matmul %48, %49, %cst_38 {dimension_numbers = #tpu.dot_dimension_numbers<[1], [0], [0], [1], [0, 0, 1, 1], [], []>} : vector<8x4xbf16>, vector<4x16xbf16>, vector<8x16xf32> -> vector<8x16xf32>
    %51 = arith.addf %46, %50 : vector<8x16xf32>
    %c0_39 = arith.constant 0 : index
    %c0_40 = arith.constant 0 : index
    %c0_41 = arith.constant 0 : index
    %c0_42 = arith.constant 0 : index
    %52 = vector.load %arg6[%c0_39, %c0_40, %c0_41, %c0_42] : memref<1x1x8x16xf32, #tpu.memory_space<vmem>>, vector<1x1x8x16xf32>
    %53 = vector.shape_cast %52 : vector<1x1x8x16xf32> to vector<8x16xf32>
    %54 = vector.shape_cast %51 : vector<8x16xf32> to vector<1x1x8x16xf32>
    tpu.vector_store %arg6[%c0_39, %c0_40, %c0_41, %c0_42], %54 {strides = array<i32>} : memref<1x1x8x16xf32, #tpu.memory_space<vmem>>, vector<1x1x8x16xf32>,
    %cst_43 = arith.constant dense<0.000000e+00> : vector<8xf32>
    %55 = vector.multi_reduction <add>, %51, %cst_43 [1] : vector<8x16xf32> to vector<8xf32>
    %56 = vector.shape_cast %55 : vector<8xf32> to vector<8x1xf32>
    %cst_44 = arith.constant 6.250000e-02 : f32
    %57 = vector.broadcast %cst_44 : f32 to vector<8x1xf32>
    %58 = arith.mulf %56, %57 : vector<8x1xf32>
    %59 = vector.broadcast %58 : vector<8x1xf32> to vector<8x16xf32>
    %60 = arith.subf %51, %59 : vector<8x16xf32>
    %61 = arith.mulf %60, %60 : vector<8x16xf32>
    %cst_45 = arith.constant dense<0.000000e+00> : vector<8xf32>
    %62 = vector.multi_reduction <add>, %61, %cst_45 [1] : vector<8x16xf32> to vector<8xf32>
    %63 = vector.shape_cast %62 : vector<8xf32> to vector<8x1xf32>
    %64 = tpu.concatenate %56, %63 in 1 : vector<8x1xf32>, vector<8x1xf32> -> vector<8x2xf32>
    %c0_46 = arith.constant 0 : index
    %c0_47 = arith.constant 0 : index
    %c0_48 = arith.constant 0 : index
    %c0_49 = arith.constant 0 : index
    %65 = vector.load %arg7[%c0_46, %c0_47, %c0_48, %c0_49] : memref<1x1x8x2xf32, #tpu.memory_space<vmem>>, vector<1x1x8x2xf32>
    %66 = vector.shape_cast %65 : vector<1x1x8x2xf32> to vector<8x2xf32>
    %67 = vector.shape_cast %64 : vector<8x2xf32> to vector<1x1x8x2xf32>
    tpu.vector_store %arg7[%c0_46, %c0_47, %c0_48, %c0_49], %67 {strides = array<i32>} : memref<1x1x8x2xf32, #tpu.memory_space<vmem>>, vector<1x1x8x2xf32>,
    return
  }
  func.func @transform_0(%arg0: i32, %arg1: i32) -> (i32, i32, i32, i32) {
    %c0_i32 = arith.constant 0 : i32
    %c0_i32_0 = arith.constant 0 : i32
    %c0_i32_1 = arith.constant 0 : i32
    return %arg0, %arg1, %c0_i32, %c0_i32_0 : i32, i32, i32, i32
  }
  func.func @transform_1(%arg0: i32, %arg1: i32) -> (i32, i32, i32, i32) {
    %c1_i32 = arith.constant 1 : i32
    %0 = arith.addi %arg1, %c1_i32 : i32
    %c0_i32 = arith.constant 0 : i32
    %c0_i32_0 = arith.constant 0 : i32
    %c0_i32_1 = arith.constant 0 : i32
    return %arg0, %0, %c0_i32, %c0_i32_0 : i32, i32, i32, i32
  }
  func.func @transform_2(%arg0: i32, %arg1: i32) -> (i32, i32, i32, i32) {
    %c2_i32 = arith.constant 2 : i32
    %0 = arith.addi %arg1, %c2_i32 : i32
    %c0_i32 = arith.constant 0 : i32
    %c0_i32_0 = arith.constant 0 : i32
    %c0_i32_1 = arith.constant 0 : i32
    return %arg0, %0, %c0_i32, %c0_i32_0 : i32, i32, i32, i32
  }
  func.func @transform_3(%arg0: i32, %arg1: i32) -> (i32, i32, i32) {
    %c0_i32 = arith.constant 0 : i32
    %c0_i32_0 = arith.constant 0 : i32
    %c0_i32_1 = arith.constant 0 : i32
    %c0_i32_2 = arith.constant 0 : i32
    return %c0_i32, %c0_i32_0, %c0_i32_1 : i32, i32, i32
  }
  func.func @transform_4(%arg0: i32, %arg1: i32) -> (i32, i32, i32, i32) {
    %c0_i32 = arith.constant 0 : i32
    %c0_i32_0 = arith.constant 0 : i32
    %c0_i32_1 = arith.constant 0 : i32
    return %arg0, %arg1, %c0_i32, %c0_i32_0 : i32, i32, i32, i32
  }
  func.func @transform_5(%arg0: i32, %arg1: i32) -> (i32, i32, i32, i32) {
    %c0_i32 = arith.constant 0 : i32
    %c0_i32_0 = arith.constant 0 : i32
    %c0_i32_1 = arith.constant 0 : i32
    return %arg0, %arg1, %c0_i32, %c0_i32_0 : i32, i32, i32, i32
  }
}

module attributes {stable_mosaic.version = 11 : i64} {
  func.func @_bn_relu_upsample_kernel(%arg0: i32, %arg1: i32, %arg2: memref<1x16x8x16xf32, #tpu.memory_space<vmem>>, %arg3: memref<8xf32, #tpu.memory_space<smem>>, %arg4: memref<8xf32, #tpu.memory_space<smem>>, %arg5: memref<32x16xf32, #tpu.memory_space<vmem>>, %arg6: memref<16x32xf32, #tpu.memory_space<vmem>>, %arg7: memref<1x8x32x32xf32, #tpu.memory_space<vmem>>) attributes {dimension_semantics = [#tpu.dimension_semantics<parallel>, #tpu.dimension_semantics<parallel>], iteration_bounds = array<i64: 2, 1>, scalar_prefetch = 0 : i64, scratch_operands = 0 : i64, tpu.core_type = #tpu.core_type<tc>, window_params = [{transform_indices = @transform_0, window_bounds = array<i64: 1, 16, 8, 16>}, {transform_indices = @transform_1, window_bounds = array<i64: 8>}, {transform_indices = @transform_2, window_bounds = array<i64: 8>}, {pipeline_mode = #tpu.pipeline_mode<synchronous>, transform_indices = @transform_3, window_bounds = array<i64: 32, 16>}, {pipeline_mode = #tpu.pipeline_mode<synchronous>, transform_indices = @transform_4, window_bounds = array<i64: 16, 32>}, {transform_indices = @transform_5, window_bounds = array<i64: 1, 8, 32, 32>}]} {
    %c0 = arith.constant 0 : index
    %c0_0 = arith.constant 0 : index
    %0 = vector.load %arg5[%c0, %c0_0] : memref<32x16xf32, #tpu.memory_space<vmem>>, vector<32x16xf32>
    %c0_1 = arith.constant 0 : index
    %c0_2 = arith.constant 0 : index
    %1 = vector.load %arg6[%c0_1, %c0_2] : memref<16x32xf32, #tpu.memory_space<vmem>>, vector<16x32xf32>
    %c8_i32 = arith.constant 8 : i32
    %2 = arith.muli %arg1, %c8_i32 : i32
    %c0_i32 = arith.constant 0 : i32
    %3 = arith.addi %2, %c0_i32 : i32
    %4 = arith.index_cast %3 : i32 to index
    %5 = memref.load %arg3[%4] : memref<8xf32, #tpu.memory_space<smem>>
    %c8_i32_3 = arith.constant 8 : i32
    %6 = arith.muli %arg1, %c8_i32_3 : i32
    %c0_i32_4 = arith.constant 0 : i32
    %7 = arith.addi %6, %c0_i32_4 : i32
    %8 = arith.index_cast %7 : i32 to index
    %9 = memref.load %arg4[%8] : memref<8xf32, #tpu.memory_space<smem>>
    %c0_5 = arith.constant 0 : index
    %c0_6 = arith.constant 0 : index
    %c0_7 = arith.constant 0 : index
    %c0_8 = arith.constant 0 : index
    %10 = vector.load %arg2[%c0_5, %c0_6, %c0_7, %c0_8] : memref<1x16x8x16xf32, #tpu.memory_space<vmem>>, vector<1x16x1x16xf32>
    %11 = vector.shape_cast %10 : vector<1x16x1x16xf32> to vector<16x16xf32>
    %12 = vector.broadcast %5 : f32 to vector<16x16xf32>
    %13 = arith.mulf %11, %12 : vector<16x16xf32>
    %14 = vector.broadcast %9 : f32 to vector<16x16xf32>
    %15 = arith.addf %13, %14 : vector<16x16xf32>
    %cst = arith.constant 0.000000e+00 : f32
    %16 = vector.broadcast %cst : f32 to vector<16x16xf32>
    %17 = arith.maximumf %15, %16 : vector<16x16xf32>
    %cst_9 = arith.constant dense<0.000000e+00> : vector<32x16xf32>
    %18 = tpu.matmul %0, %17, %cst_9 {dimension_numbers = #tpu.dot_dimension_numbers<[1], [0], [0], [1], [0, 0, 1, 1], [], []>} : vector<32x16xf32>, vector<16x16xf32>, vector<32x16xf32> -> vector<32x16xf32>
    %cst_10 = arith.constant dense<0.000000e+00> : vector<32x32xf32>
    %19 = tpu.matmul %18, %1, %cst_10 {dimension_numbers = #tpu.dot_dimension_numbers<[1], [0], [0], [1], [0, 0, 1, 1], [], []>} : vector<32x16xf32>, vector<16x32xf32>, vector<32x32xf32> -> vector<32x32xf32>
    %c0_11 = arith.constant 0 : index
    %c0_12 = arith.constant 0 : index
    %c0_13 = arith.constant 0 : index
    %c0_14 = arith.constant 0 : index
    %20 = vector.load %arg7[%c0_11, %c0_12, %c0_13, %c0_14] : memref<1x8x32x32xf32, #tpu.memory_space<vmem>>, vector<1x1x32x32xf32>
    %21 = vector.shape_cast %20 : vector<1x1x32x32xf32> to vector<32x32xf32>
    %22 = vector.shape_cast %19 : vector<32x32xf32> to vector<1x1x32x32xf32>
    tpu.vector_store %arg7[%c0_11, %c0_12, %c0_13, %c0_14], %22 {strides = array<i32>} : memref<1x8x32x32xf32, #tpu.memory_space<vmem>>, vector<1x1x32x32xf32>,
    %c8_i32_15 = arith.constant 8 : i32
    %23 = arith.muli %arg1, %c8_i32_15 : i32
    %c1_i32 = arith.constant 1 : i32
    %24 = arith.addi %23, %c1_i32 : i32
    %25 = arith.index_cast %24 : i32 to index
    %26 = memref.load %arg3[%25] : memref<8xf32, #tpu.memory_space<smem>>
    %c8_i32_16 = arith.constant 8 : i32
    %27 = arith.muli %arg1, %c8_i32_16 : i32
    %c1_i32_17 = arith.constant 1 : i32
    %28 = arith.addi %27, %c1_i32_17 : i32
    %29 = arith.index_cast %28 : i32 to index
    %30 = memref.load %arg4[%29] : memref<8xf32, #tpu.memory_space<smem>>
    %c0_18 = arith.constant 0 : index
    %c0_19 = arith.constant 0 : index
    %c1 = arith.constant 1 : index
    %c0_20 = arith.constant 0 : index
    %31 = vector.load %arg2[%c0_18, %c0_19, %c1, %c0_20] : memref<1x16x8x16xf32, #tpu.memory_space<vmem>>, vector<1x16x1x16xf32>
    %32 = vector.shape_cast %31 : vector<1x16x1x16xf32> to vector<16x16xf32>
    %33 = vector.broadcast %26 : f32 to vector<16x16xf32>
    %34 = arith.mulf %32, %33 : vector<16x16xf32>
    %35 = vector.broadcast %30 : f32 to vector<16x16xf32>
    %36 = arith.addf %34, %35 : vector<16x16xf32>
    %cst_21 = arith.constant 0.000000e+00 : f32
    %37 = vector.broadcast %cst_21 : f32 to vector<16x16xf32>
    %38 = arith.maximumf %36, %37 : vector<16x16xf32>
    %cst_22 = arith.constant dense<0.000000e+00> : vector<32x16xf32>
    %39 = tpu.matmul %0, %38, %cst_22 {dimension_numbers = #tpu.dot_dimension_numbers<[1], [0], [0], [1], [0, 0, 1, 1], [], []>} : vector<32x16xf32>, vector<16x16xf32>, vector<32x16xf32> -> vector<32x16xf32>
    %cst_23 = arith.constant dense<0.000000e+00> : vector<32x32xf32>
    %40 = tpu.matmul %39, %1, %cst_23 {dimension_numbers = #tpu.dot_dimension_numbers<[1], [0], [0], [1], [0, 0, 1, 1], [], []>} : vector<32x16xf32>, vector<16x32xf32>, vector<32x32xf32> -> vector<32x32xf32>
    %c0_24 = arith.constant 0 : index
    %c1_25 = arith.constant 1 : index
    %c0_26 = arith.constant 0 : index
    %c0_27 = arith.constant 0 : index
    %41 = vector.load %arg7[%c0_24, %c1_25, %c0_26, %c0_27] : memref<1x8x32x32xf32, #tpu.memory_space<vmem>>, vector<1x1x32x32xf32>
    %42 = vector.shape_cast %41 : vector<1x1x32x32xf32> to vector<32x32xf32>
    %43 = vector.shape_cast %40 : vector<32x32xf32> to vector<1x1x32x32xf32>
    tpu.vector_store %arg7[%c0_24, %c1_25, %c0_26, %c0_27], %43 {strides = array<i32>} : memref<1x8x32x32xf32, #tpu.memory_space<vmem>>, vector<1x1x32x32xf32>,
    %c8_i32_28 = arith.constant 8 : i32
    %44 = arith.muli %arg1, %c8_i32_28 : i32
    %c2_i32 = arith.constant 2 : i32
    %45 = arith.addi %44, %c2_i32 : i32
    %46 = arith.index_cast %45 : i32 to index
    %47 = memref.load %arg3[%46] : memref<8xf32, #tpu.memory_space<smem>>
    %c8_i32_29 = arith.constant 8 : i32
    %48 = arith.muli %arg1, %c8_i32_29 : i32
    %c2_i32_30 = arith.constant 2 : i32
    %49 = arith.addi %48, %c2_i32_30 : i32
    %50 = arith.index_cast %49 : i32 to index
    %51 = memref.load %arg4[%50] : memref<8xf32, #tpu.memory_space<smem>>
    %c0_31 = arith.constant 0 : index
    %c0_32 = arith.constant 0 : index
    %c2 = arith.constant 2 : index
    %c0_33 = arith.constant 0 : index
    %52 = vector.load %arg2[%c0_31, %c0_32, %c2, %c0_33] : memref<1x16x8x16xf32, #tpu.memory_space<vmem>>, vector<1x16x1x16xf32>
    %53 = vector.shape_cast %52 : vector<1x16x1x16xf32> to vector<16x16xf32>
    %54 = vector.broadcast %47 : f32 to vector<16x16xf32>
    %55 = arith.mulf %53, %54 : vector<16x16xf32>
    %56 = vector.broadcast %51 : f32 to vector<16x16xf32>
    %57 = arith.addf %55, %56 : vector<16x16xf32>
    %cst_34 = arith.constant 0.000000e+00 : f32
    %58 = vector.broadcast %cst_34 : f32 to vector<16x16xf32>
    %59 = arith.maximumf %57, %58 : vector<16x16xf32>
    %cst_35 = arith.constant dense<0.000000e+00> : vector<32x16xf32>
    %60 = tpu.matmul %0, %59, %cst_35 {dimension_numbers = #tpu.dot_dimension_numbers<[1], [0], [0], [1], [0, 0, 1, 1], [], []>} : vector<32x16xf32>, vector<16x16xf32>, vector<32x16xf32> -> vector<32x16xf32>
    %cst_36 = arith.constant dense<0.000000e+00> : vector<32x32xf32>
    %61 = tpu.matmul %60, %1, %cst_36 {dimension_numbers = #tpu.dot_dimension_numbers<[1], [0], [0], [1], [0, 0, 1, 1], [], []>} : vector<32x16xf32>, vector<16x32xf32>, vector<32x32xf32> -> vector<32x32xf32>
    %c0_37 = arith.constant 0 : index
    %c2_38 = arith.constant 2 : index
    %c0_39 = arith.constant 0 : index
    %c0_40 = arith.constant 0 : index
    %62 = vector.load %arg7[%c0_37, %c2_38, %c0_39, %c0_40] : memref<1x8x32x32xf32, #tpu.memory_space<vmem>>, vector<1x1x32x32xf32>
    %63 = vector.shape_cast %62 : vector<1x1x32x32xf32> to vector<32x32xf32>
    %64 = vector.shape_cast %61 : vector<32x32xf32> to vector<1x1x32x32xf32>
    tpu.vector_store %arg7[%c0_37, %c2_38, %c0_39, %c0_40], %64 {strides = array<i32>} : memref<1x8x32x32xf32, #tpu.memory_space<vmem>>, vector<1x1x32x32xf32>,
    %c8_i32_41 = arith.constant 8 : i32
    %65 = arith.muli %arg1, %c8_i32_41 : i32
    %c3_i32 = arith.constant 3 : i32
    %66 = arith.addi %65, %c3_i32 : i32
    %67 = arith.index_cast %66 : i32 to index
    %68 = memref.load %arg3[%67] : memref<8xf32, #tpu.memory_space<smem>>
    %c8_i32_42 = arith.constant 8 : i32
    %69 = arith.muli %arg1, %c8_i32_42 : i32
    %c3_i32_43 = arith.constant 3 : i32
    %70 = arith.addi %69, %c3_i32_43 : i32
    %71 = arith.index_cast %70 : i32 to index
    %72 = memref.load %arg4[%71] : memref<8xf32, #tpu.memory_space<smem>>
    %c0_44 = arith.constant 0 : index
    %c0_45 = arith.constant 0 : index
    %c3 = arith.constant 3 : index
    %c0_46 = arith.constant 0 : index
    %73 = vector.load %arg2[%c0_44, %c0_45, %c3, %c0_46] : memref<1x16x8x16xf32, #tpu.memory_space<vmem>>, vector<1x16x1x16xf32>
    %74 = vector.shape_cast %73 : vector<1x16x1x16xf32> to vector<16x16xf32>
    %75 = vector.broadcast %68 : f32 to vector<16x16xf32>
    %76 = arith.mulf %74, %75 : vector<16x16xf32>
    %77 = vector.broadcast %72 : f32 to vector<16x16xf32>
    %78 = arith.addf %76, %77 : vector<16x16xf32>
    %cst_47 = arith.constant 0.000000e+00 : f32
    %79 = vector.broadcast %cst_47 : f32 to vector<16x16xf32>
    %80 = arith.maximumf %78, %79 : vector<16x16xf32>
    %cst_48 = arith.constant dense<0.000000e+00> : vector<32x16xf32>
    %81 = tpu.matmul %0, %80, %cst_48 {dimension_numbers = #tpu.dot_dimension_numbers<[1], [0], [0], [1], [0, 0, 1, 1], [], []>} : vector<32x16xf32>, vector<16x16xf32>, vector<32x16xf32> -> vector<32x16xf32>
    %cst_49 = arith.constant dense<0.000000e+00> : vector<32x32xf32>
    %82 = tpu.matmul %81, %1, %cst_49 {dimension_numbers = #tpu.dot_dimension_numbers<[1], [0], [0], [1], [0, 0, 1, 1], [], []>} : vector<32x16xf32>, vector<16x32xf32>, vector<32x32xf32> -> vector<32x32xf32>
    %c0_50 = arith.constant 0 : index
    %c3_51 = arith.constant 3 : index
    %c0_52 = arith.constant 0 : index
    %c0_53 = arith.constant 0 : index
    %83 = vector.load %arg7[%c0_50, %c3_51, %c0_52, %c0_53] : memref<1x8x32x32xf32, #tpu.memory_space<vmem>>, vector<1x1x32x32xf32>
    %84 = vector.shape_cast %83 : vector<1x1x32x32xf32> to vector<32x32xf32>
    %85 = vector.shape_cast %82 : vector<32x32xf32> to vector<1x1x32x32xf32>
    tpu.vector_store %arg7[%c0_50, %c3_51, %c0_52, %c0_53], %85 {strides = array<i32>} : memref<1x8x32x32xf32, #tpu.memory_space<vmem>>, vector<1x1x32x32xf32>,
    %c8_i32_54 = arith.constant 8 : i32
    %86 = arith.muli %arg1, %c8_i32_54 : i32
    %c4_i32 = arith.constant 4 : i32
    %87 = arith.addi %86, %c4_i32 : i32
    %88 = arith.index_cast %87 : i32 to index
    %89 = memref.load %arg3[%88] : memref<8xf32, #tpu.memory_space<smem>>
    %c8_i32_55 = arith.constant 8 : i32
    %90 = arith.muli %arg1, %c8_i32_55 : i32
    %c4_i32_56 = arith.constant 4 : i32
    %91 = arith.addi %90, %c4_i32_56 : i32
    %92 = arith.index_cast %91 : i32 to index
    %93 = memref.load %arg4[%92] : memref<8xf32, #tpu.memory_space<smem>>
    %c0_57 = arith.constant 0 : index
    %c0_58 = arith.constant 0 : index
    %c4 = arith.constant 4 : index
    %c0_59 = arith.constant 0 : index
    %94 = vector.load %arg2[%c0_57, %c0_58, %c4, %c0_59] : memref<1x16x8x16xf32, #tpu.memory_space<vmem>>, vector<1x16x1x16xf32>
    %95 = vector.shape_cast %94 : vector<1x16x1x16xf32> to vector<16x16xf32>
    %96 = vector.broadcast %89 : f32 to vector<16x16xf32>
    %97 = arith.mulf %95, %96 : vector<16x16xf32>
    %98 = vector.broadcast %93 : f32 to vector<16x16xf32>
    %99 = arith.addf %97, %98 : vector<16x16xf32>
    %cst_60 = arith.constant 0.000000e+00 : f32
    %100 = vector.broadcast %cst_60 : f32 to vector<16x16xf32>
    %101 = arith.maximumf %99, %100 : vector<16x16xf32>
    %cst_61 = arith.constant dense<0.000000e+00> : vector<32x16xf32>
    %102 = tpu.matmul %0, %101, %cst_61 {dimension_numbers = #tpu.dot_dimension_numbers<[1], [0], [0], [1], [0, 0, 1, 1], [], []>} : vector<32x16xf32>, vector<16x16xf32>, vector<32x16xf32> -> vector<32x16xf32>
    %cst_62 = arith.constant dense<0.000000e+00> : vector<32x32xf32>
    %103 = tpu.matmul %102, %1, %cst_62 {dimension_numbers = #tpu.dot_dimension_numbers<[1], [0], [0], [1], [0, 0, 1, 1], [], []>} : vector<32x16xf32>, vector<16x32xf32>, vector<32x32xf32> -> vector<32x32xf32>
    %c0_63 = arith.constant 0 : index
    %c4_64 = arith.constant 4 : index
    %c0_65 = arith.constant 0 : index
    %c0_66 = arith.constant 0 : index
    %104 = vector.load %arg7[%c0_63, %c4_64, %c0_65, %c0_66] : memref<1x8x32x32xf32, #tpu.memory_space<vmem>>, vector<1x1x32x32xf32>
    %105 = vector.shape_cast %104 : vector<1x1x32x32xf32> to vector<32x32xf32>
    %106 = vector.shape_cast %103 : vector<32x32xf32> to vector<1x1x32x32xf32>
    tpu.vector_store %arg7[%c0_63, %c4_64, %c0_65, %c0_66], %106 {strides = array<i32>} : memref<1x8x32x32xf32, #tpu.memory_space<vmem>>, vector<1x1x32x32xf32>,
    %c8_i32_67 = arith.constant 8 : i32
    %107 = arith.muli %arg1, %c8_i32_67 : i32
    %c5_i32 = arith.constant 5 : i32
    %108 = arith.addi %107, %c5_i32 : i32
    %109 = arith.index_cast %108 : i32 to index
    %110 = memref.load %arg3[%109] : memref<8xf32, #tpu.memory_space<smem>>
    %c8_i32_68 = arith.constant 8 : i32
    %111 = arith.muli %arg1, %c8_i32_68 : i32
    %c5_i32_69 = arith.constant 5 : i32
    %112 = arith.addi %111, %c5_i32_69 : i32
    %113 = arith.index_cast %112 : i32 to index
    %114 = memref.load %arg4[%113] : memref<8xf32, #tpu.memory_space<smem>>
    %c0_70 = arith.constant 0 : index
    %c0_71 = arith.constant 0 : index
    %c5 = arith.constant 5 : index
    %c0_72 = arith.constant 0 : index
    %115 = vector.load %arg2[%c0_70, %c0_71, %c5, %c0_72] : memref<1x16x8x16xf32, #tpu.memory_space<vmem>>, vector<1x16x1x16xf32>
    %116 = vector.shape_cast %115 : vector<1x16x1x16xf32> to vector<16x16xf32>
    %117 = vector.broadcast %110 : f32 to vector<16x16xf32>
    %118 = arith.mulf %116, %117 : vector<16x16xf32>
    %119 = vector.broadcast %114 : f32 to vector<16x16xf32>
    %120 = arith.addf %118, %119 : vector<16x16xf32>
    %cst_73 = arith.constant 0.000000e+00 : f32
    %121 = vector.broadcast %cst_73 : f32 to vector<16x16xf32>
    %122 = arith.maximumf %120, %121 : vector<16x16xf32>
    %cst_74 = arith.constant dense<0.000000e+00> : vector<32x16xf32>
    %123 = tpu.matmul %0, %122, %cst_74 {dimension_numbers = #tpu.dot_dimension_numbers<[1], [0], [0], [1], [0, 0, 1, 1], [], []>} : vector<32x16xf32>, vector<16x16xf32>, vector<32x16xf32> -> vector<32x16xf32>
    %cst_75 = arith.constant dense<0.000000e+00> : vector<32x32xf32>
    %124 = tpu.matmul %123, %1, %cst_75 {dimension_numbers = #tpu.dot_dimension_numbers<[1], [0], [0], [1], [0, 0, 1, 1], [], []>} : vector<32x16xf32>, vector<16x32xf32>, vector<32x32xf32> -> vector<32x32xf32>
    %c0_76 = arith.constant 0 : index
    %c5_77 = arith.constant 5 : index
    %c0_78 = arith.constant 0 : index
    %c0_79 = arith.constant 0 : index
    %125 = vector.load %arg7[%c0_76, %c5_77, %c0_78, %c0_79] : memref<1x8x32x32xf32, #tpu.memory_space<vmem>>, vector<1x1x32x32xf32>
    %126 = vector.shape_cast %125 : vector<1x1x32x32xf32> to vector<32x32xf32>
    %127 = vector.shape_cast %124 : vector<32x32xf32> to vector<1x1x32x32xf32>
    tpu.vector_store %arg7[%c0_76, %c5_77, %c0_78, %c0_79], %127 {strides = array<i32>} : memref<1x8x32x32xf32, #tpu.memory_space<vmem>>, vector<1x1x32x32xf32>,
    %c8_i32_80 = arith.constant 8 : i32
    %128 = arith.muli %arg1, %c8_i32_80 : i32
    %c6_i32 = arith.constant 6 : i32
    %129 = arith.addi %128, %c6_i32 : i32
    %130 = arith.index_cast %129 : i32 to index
    %131 = memref.load %arg3[%130] : memref<8xf32, #tpu.memory_space<smem>>
    %c8_i32_81 = arith.constant 8 : i32
    %132 = arith.muli %arg1, %c8_i32_81 : i32
    %c6_i32_82 = arith.constant 6 : i32
    %133 = arith.addi %132, %c6_i32_82 : i32
    %134 = arith.index_cast %133 : i32 to index
    %135 = memref.load %arg4[%134] : memref<8xf32, #tpu.memory_space<smem>>
    %c0_83 = arith.constant 0 : index
    %c0_84 = arith.constant 0 : index
    %c6 = arith.constant 6 : index
    %c0_85 = arith.constant 0 : index
    %136 = vector.load %arg2[%c0_83, %c0_84, %c6, %c0_85] : memref<1x16x8x16xf32, #tpu.memory_space<vmem>>, vector<1x16x1x16xf32>
    %137 = vector.shape_cast %136 : vector<1x16x1x16xf32> to vector<16x16xf32>
    %138 = vector.broadcast %131 : f32 to vector<16x16xf32>
    %139 = arith.mulf %137, %138 : vector<16x16xf32>
    %140 = vector.broadcast %135 : f32 to vector<16x16xf32>
    %141 = arith.addf %139, %140 : vector<16x16xf32>
    %cst_86 = arith.constant 0.000000e+00 : f32
    %142 = vector.broadcast %cst_86 : f32 to vector<16x16xf32>
    %143 = arith.maximumf %141, %142 : vector<16x16xf32>
    %cst_87 = arith.constant dense<0.000000e+00> : vector<32x16xf32>
    %144 = tpu.matmul %0, %143, %cst_87 {dimension_numbers = #tpu.dot_dimension_numbers<[1], [0], [0], [1], [0, 0, 1, 1], [], []>} : vector<32x16xf32>, vector<16x16xf32>, vector<32x16xf32> -> vector<32x16xf32>
    %cst_88 = arith.constant dense<0.000000e+00> : vector<32x32xf32>
    %145 = tpu.matmul %144, %1, %cst_88 {dimension_numbers = #tpu.dot_dimension_numbers<[1], [0], [0], [1], [0, 0, 1, 1], [], []>} : vector<32x16xf32>, vector<16x32xf32>, vector<32x32xf32> -> vector<32x32xf32>
    %c0_89 = arith.constant 0 : index
    %c6_90 = arith.constant 6 : index
    %c0_91 = arith.constant 0 : index
    %c0_92 = arith.constant 0 : index
    %146 = vector.load %arg7[%c0_89, %c6_90, %c0_91, %c0_92] : memref<1x8x32x32xf32, #tpu.memory_space<vmem>>, vector<1x1x32x32xf32>
    %147 = vector.shape_cast %146 : vector<1x1x32x32xf32> to vector<32x32xf32>
    %148 = vector.shape_cast %145 : vector<32x32xf32> to vector<1x1x32x32xf32>
    tpu.vector_store %arg7[%c0_89, %c6_90, %c0_91, %c0_92], %148 {strides = array<i32>} : memref<1x8x32x32xf32, #tpu.memory_space<vmem>>, vector<1x1x32x32xf32>,
    %c8_i32_93 = arith.constant 8 : i32
    %149 = arith.muli %arg1, %c8_i32_93 : i32
    %c7_i32 = arith.constant 7 : i32
    %150 = arith.addi %149, %c7_i32 : i32
    %151 = arith.index_cast %150 : i32 to index
    %152 = memref.load %arg3[%151] : memref<8xf32, #tpu.memory_space<smem>>
    %c8_i32_94 = arith.constant 8 : i32
    %153 = arith.muli %arg1, %c8_i32_94 : i32
    %c7_i32_95 = arith.constant 7 : i32
    %154 = arith.addi %153, %c7_i32_95 : i32
    %155 = arith.index_cast %154 : i32 to index
    %156 = memref.load %arg4[%155] : memref<8xf32, #tpu.memory_space<smem>>
    %c0_96 = arith.constant 0 : index
    %c0_97 = arith.constant 0 : index
    %c7 = arith.constant 7 : index
    %c0_98 = arith.constant 0 : index
    %157 = vector.load %arg2[%c0_96, %c0_97, %c7, %c0_98] : memref<1x16x8x16xf32, #tpu.memory_space<vmem>>, vector<1x16x1x16xf32>
    %158 = vector.shape_cast %157 : vector<1x16x1x16xf32> to vector<16x16xf32>
    %159 = vector.broadcast %152 : f32 to vector<16x16xf32>
    %160 = arith.mulf %158, %159 : vector<16x16xf32>
    %161 = vector.broadcast %156 : f32 to vector<16x16xf32>
    %162 = arith.addf %160, %161 : vector<16x16xf32>
    %cst_99 = arith.constant 0.000000e+00 : f32
    %163 = vector.broadcast %cst_99 : f32 to vector<16x16xf32>
    %164 = arith.maximumf %162, %163 : vector<16x16xf32>
    %cst_100 = arith.constant dense<0.000000e+00> : vector<32x16xf32>
    %165 = tpu.matmul %0, %164, %cst_100 {dimension_numbers = #tpu.dot_dimension_numbers<[1], [0], [0], [1], [0, 0, 1, 1], [], []>} : vector<32x16xf32>, vector<16x16xf32>, vector<32x16xf32> -> vector<32x16xf32>
    %cst_101 = arith.constant dense<0.000000e+00> : vector<32x32xf32>
    %166 = tpu.matmul %165, %1, %cst_101 {dimension_numbers = #tpu.dot_dimension_numbers<[1], [0], [0], [1], [0, 0, 1, 1], [], []>} : vector<32x16xf32>, vector<16x32xf32>, vector<32x32xf32> -> vector<32x32xf32>
    %c0_102 = arith.constant 0 : index
    %c7_103 = arith.constant 7 : index
    %c0_104 = arith.constant 0 : index
    %c0_105 = arith.constant 0 : index
    %167 = vector.load %arg7[%c0_102, %c7_103, %c0_104, %c0_105] : memref<1x8x32x32xf32, #tpu.memory_space<vmem>>, vector<1x1x32x32xf32>
    %168 = vector.shape_cast %167 : vector<1x1x32x32xf32> to vector<32x32xf32>
    %169 = vector.shape_cast %166 : vector<32x32xf32> to vector<1x1x32x32xf32>
    tpu.vector_store %arg7[%c0_102, %c7_103, %c0_104, %c0_105], %169 {strides = array<i32>} : memref<1x8x32x32xf32, #tpu.memory_space<vmem>>, vector<1x1x32x32xf32>,
    return
  }
  func.func @transform_0(%arg0: i32, %arg1: i32) -> (i32, i32, i32, i32) {
    %c0_i32 = arith.constant 0 : i32
    %c0_i32_0 = arith.constant 0 : i32
    %c0_i32_1 = arith.constant 0 : i32
    return %arg0, %c0_i32, %arg1, %c0_i32_0 : i32, i32, i32, i32
  }
  func.func @transform_1(%arg0: i32, %arg1: i32) -> i32 {
    %c0_i32 = arith.constant 0 : i32
    %c0_i32_0 = arith.constant 0 : i32
    return %c0_i32 : i32
  }
  func.func @transform_2(%arg0: i32, %arg1: i32) -> i32 {
    %c0_i32 = arith.constant 0 : i32
    %c0_i32_0 = arith.constant 0 : i32
    return %c0_i32 : i32
  }
  func.func @transform_3(%arg0: i32, %arg1: i32) -> (i32, i32) {
    %c0_i32 = arith.constant 0 : i32
    %c0_i32_0 = arith.constant 0 : i32
    %c0_i32_1 = arith.constant 0 : i32
    return %c0_i32, %c0_i32_0 : i32, i32
  }
  func.func @transform_4(%arg0: i32, %arg1: i32) -> (i32, i32) {
    %c0_i32 = arith.constant 0 : i32
    %c0_i32_0 = arith.constant 0 : i32
    %c0_i32_1 = arith.constant 0 : i32
    return %c0_i32, %c0_i32_0 : i32, i32
  }
  func.func @transform_5(%arg0: i32, %arg1: i32) -> (i32, i32, i32, i32) {
    %c0_i32 = arith.constant 0 : i32
    %c0_i32_0 = arith.constant 0 : i32
    %c0_i32_1 = arith.constant 0 : i32
    return %arg0, %arg1, %c0_i32, %c0_i32_0 : i32, i32, i32, i32
  }
}

</mosaic_0001>

<llo_original>
// kernel: unet_up_forward.2
$region0: #{unet_up_forward.2}
  #allocation0 [shape = 'u32[]', space=smem, size = 0x4, offset = 0x4, fixed_abs, tag = 'smem constant byte address 0x4 - core index']
  #allocation1 [shape = 'u32[144,128]{1,0:T(1,128)}', space=vmem, size = 0x12000, scoped, tag = 'internal scratch']
  %s0 = inlined_call_operand.vmem [shape: bf16[2,18,4,18], index: 0, kind: input, shape index: {}, may-alias: {0,1,2}]
  %s1 = inlined_call_operand.vmem [shape: bf16[2,18,4,18], index: 1, kind: input, shape index: {}, may-alias: {0,1,2}]
  %s2 = inlined_call_operand.vmem [shape: bf16[2,18,4,18], index: 2, kind: input, shape index: {}, may-alias: {0,1,2}]
  %s3 = inlined_call_operand.vmem [shape: bf16[9,8,4], index: 3, kind: input, shape index: {}]
  %s4 = inlined_call_operand.vmem [shape: f32[2,16,8,16], index: 4, kind: output, shape index: {0}]
  %s5 = inlined_call_operand.vmem [shape: f32[2,16,8,2], index: 5, kind: output, shape index: {1}]
  %6 = xla_tuple %s4, %s5
  %s7 = sld [smem:[#allocation0]]
  $region57: #{unet_up_forward.2} parent=0
    _
  %s9 = ssub.s32 1, %s7
  %s10 = scalar_select 0, %s9, %s7
  loop: start=0, step=1, limit=34
  $region2: #{unet_up_forward.2} parent=0 // loop_pre_header
    _
  $region3: #{unet_up_forward.2} parent=0 // loop_header
    %s12 = sphi 0, %s16
    %p13 = scmp.ge.s32.totalorder %s12, 34
    %s19 = sphi 0, %s31
    %s20 = sphi 0, %s27
    %s21 = sphi 0, %s19
    %s22 = sphi 0, %s20
    %s23 = sphi 0, %s21
    %s24 = sphi 0, %s22
    %s36 = sphi 0, %s38
    %s39 = sphi 0, %s36
    %s40 = sphi 0, %s39
    %s56 = sphi 0, %s40
    %s66 = sphi 0, %s68
    %s69 = sphi 0, %s66
    %s70 = sphi 0, %s69
    %s86 = sphi 0, %s70
    %s96 = sphi 0, %s98
    %s99 = sphi 0, %s96
    %s100 = sphi 0, %s99
    %s116 = sphi 0, %s100
    %s120 = sphi 0, %s120
    %s122 = sphi 0, %s120
    %s123 = sphi 0, %s122
    %s137 = sphi 0, %s123
    %s145 = sphi 0, %s147
    %s148 = sphi 0, %s145
    %s149 = sphi 0, %s148
    %s165 = sphi 0, %s149
    %s173 = sphi 0, %s175
    %s176 = sphi 0, %s173
    %s177 = sphi 0, %s176
    %s193 = sphi 0, %s177
  $region4: #{unet_up_forward.2} parent=0 // loop_header_branch
    %15 = sbr.rel (%p13) target = $region8
  $region5: #{unet_up_forward.2} parent=0 // loop_body
    %s17 = ssub.s32 %s12, 1
    %s18 = ssub.s32 %s12, 2
    %s25 = sadd.s32 1, %s20
    %p26 = scmp.ge.s32.totalorder %s25, 16
    %s27 = scalar_select %p26, 0, %s25
    %s28 = sadd.s32 1, %s19
    %s29 = scalar_select %p26, %s28, %s19
    %p30 = scmp.ge.s32.totalorder %s29, 2
    %s31 = scalar_select %p30, 0, %s29
    %s32 = ssub.s32 %s19, %s31
    %s33 = ssub.s32 %s20, %s27
    %s34 = sor.u32 %s32, %s33
    %p35 = scmp.eq.s32.totalorder %s34, 0
    %s37 = sadd.s32 %s36, 1
    %s38 = scalar_select %p35, %s36, %s37
    %p41 = pneg %p35
    %p42 = scmp.eq.s32.totalorder %s12, 31
    %p43 = por %p41, %p42
    %p44 = scmp.ne.s32.totalorder %s36, %s39
    %p45 = scmp.eq.s32.totalorder %s12, 0
    %p46 = por %p44, %p45
    %p47 = scmp.ne.s32.totalorder %s36, %s39
    %p48 = scmp.eq.s32.totalorder %s17, 31
    %p49 = por %p47, %p48
    %p50 = scmp.ne.s32.totalorder %s39, %s40
    %p51 = scmp.eq.s32.totalorder %s17, 0
    %p52 = por %p50, %p51
    %p53 = scmp.ne.s32.totalorder %s39, %s40
    %p54 = scmp.eq.s32.totalorder %s18, 31
    %p55 = por %p53, %p54
    %p57 = scmp.ne.s32.totalorder %s40, %s56
    %p58 = scmp.eq.s32.totalorder %s18, 0
    %p59 = por %p57, %p58
    %s60 = sadd.s32 %s20, 1
    %s61 = sadd.s32 %s27, 1
    %s62 = ssub.s32 %s19, %s31
    %s63 = ssub.s32 %s60, %s61
    %s64 = sor.u32 %s62, %s63
    %p65 = scmp.eq.s32.totalorder %s64, 0
    %s67 = sadd.s32 %s66, 1
    %s68 = scalar_select %p65, %s66, %s67
    %p71 = pneg %p65
    %p72 = scmp.eq.s32.totalorder %s12, 31
    %p73 = por %p71, %p72
    %p74 = scmp.ne.s32.totalorder %s66, %s69
    %p75 = scmp.eq.s32.totalorder %s12, 0
    %p76 = por %p74, %p75
    %p77 = scmp.ne.s32.totalorder %s66, %s69
    %p78 = scmp.eq.s32.totalorder %s17, 31
    %p79 = por %p77, %p78
    %p80 = scmp.ne.s32.totalorder %s69, %s70
    %p81 = scmp.eq.s32.totalorder %s17, 0
    %p82 = por %p80, %p81
    %p83 = scmp.ne.s32.totalorder %s69, %s70
    %p84 = scmp.eq.s32.totalorder %s18, 31
    %p85 = por %p83, %p84
    %p87 = scmp.ne.s32.totalorder %s70, %s86
    %p88 = scmp.eq.s32.totalorder %s18, 0
    %p89 = por %p87, %p88
    %s90 = sadd.s32 %s20, 2
    %s91 = sadd.s32 %s27, 2
    %s92 = ssub.s32 %s19, %s31
    %s93 = ssub.s32 %s90, %s91
    %s94 = sor.u32 %s92, %s93
    %p95 = scmp.eq.s32.totalorder %s94, 0
    %s97 = sadd.s32 %s96, 1
    %s98 = scalar_select %p95, %s96, %s97
    %p101 = pneg %p95
    %p102 = scmp.eq.s32.totalorder %s12, 31
    %p103 = por %p101, %p102
    %p104 = scmp.ne.s32.totalorder %s96, %s99
    %p105 = scmp.eq.s32.totalorder %s12, 0
    %p106 = por %p104, %p105
    %p107 = scmp.ne.s32.totalorder %s96, %s99
    %p108 = scmp.eq.s32.totalorder %s17, 31
    %p109 = por %p107, %p108
    %p110 = scmp.ne.s32.totalorder %s99, %s100
    %p111 = scmp.eq.s32.totalorder %s17, 0
    %p112 = por %p110, %p111
    %p113 = scmp.ne.s32.totalorder %s99, %s100
    %p114 = scmp.eq.s32.totalorder %s18, 31
    %p115 = por %p113, %p114
    %p117 = scmp.ne.s32.totalorder %s100, %s116
    %p118 = scmp.eq.s32.totalorder %s18, 0
    %p119 = por %p117, %p118
    %s121 = sadd.s32 %s120, 1
    %p124 = scmp.eq.s32.totalorder %s12, 31
    %p125 = scmp.ne.s32.totalorder %s120, %s122
    %p126 = scmp.eq.s32.totalorder %s12, 0
    %p127 = por %p125, %p126
    %p128 = scmp.ne.s32.totalorder %s120, %s122
    %p129 = scmp.eq.s32.totalorder %s17, 31
    %p130 = por %p128, %p129
    %p131 = scmp.ne.s32.totalorder %s122, %s123
    %p132 = scmp.eq.s32.totalorder %s17, 0
    %p133 = por %p131, %p132
    %p134 = scmp.ne.s32.totalorder %s122, %s123
    %p135 = scmp.eq.s32.totalorder %s18, 31
    %p136 = por %p134, %p135
    %p138 = scmp.ne.s32.totalorder %s123, %s137
    %p139 = scmp.eq.s32.totalorder %s18, 0
    %p140 = por %p138, %p139
    %s141 = ssub.s32 %s19, %s31
    %s142 = ssub.s32 %s20, %s27
    %s143 = sor.u32 %s141, %s142
    %p144 = scmp.eq.s32.totalorder %s143, 0
    %s146 = sadd.s32 %s145, 1
    %s147 = scalar_select %p144, %s145, %s146
    %p150 = pneg %p144
    %p151 = scmp.eq.s32.totalorder %s12, 31
    %p152 = por %p150, %p151
    %p153 = scmp.ne.s32.totalorder %s145, %s148
    %p154 = scmp.eq.s32.totalorder %s12, 0
    %p155 = por %p153, %p154
    %p156 = scmp.ne.s32.totalorder %s145, %s148
    %p157 = scmp.eq.s32.totalorder %s17, 31
    %p158 = por %p156, %p157
    %p159 = scmp.ne.s32.totalorder %s148, %s149
    %p160 = scmp.eq.s32.totalorder %s17, 0
    %p161 = por %p159, %p160
    %p162 = scmp.ne.s32.totalorder %s148, %s149
    %p163 = scmp.eq.s32.totalorder %s18, 31
    %p164 = por %p162, %p163
    %p166 = scmp.ne.s32.totalorder %s149, %s165
    %p167 = scmp.eq.s32.totalorder %s18, 0
    %p168 = por %p166, %p167
    %s169 = ssub.s32 %s19, %s31
    %s170 = ssub.s32 %s20, %s27
    %s171 = sor.u32 %s169, %s170
    %p172 = scmp.eq.s32.totalorder %s171, 0
    %s174 = sadd.s32 %s173, 1
    %s175 = scalar_select %p172, %s173, %s174
    %p178 = pneg %p172
    %p179 = scmp.eq.s32.totalorder %s12, 31
    %p180 = por %p178, %p179
    %p181 = scmp.ne.s32.totalorder %s173, %s176
    %p182 = scmp.eq.s32.totalorder %s12, 0
    %p183 = por %p181, %p182
    %p184 = scmp.ne.s32.totalorder %s173, %s176
    %p185 = scmp.eq.s32.totalorder %s17, 31
    %p186 = por %p184, %p185
    %p187 = scmp.ne.s32.totalorder %s176, %s177
    %p188 = scmp.eq.s32.totalorder %s17, 0
    %p189 = por %p187, %p188
    %p190 = scmp.ne.s32.totalorder %s176, %s177
    %p191 = scmp.eq.s32.totalorder %s18, 31
    %p192 = por %p190, %p191
    %p194 = scmp.ne.s32.totalorder %s177, %s193
    %p195 = scmp.eq.s32.totalorder %s18, 0
    %p196 = por %p194, %p195
    %p197 = scmp.le.s32.totalorder 1, %s12
    %p198 = scmp.lt.s32.totalorder %s12, 33
    %p199 = pnand %p197, %p198
    %p200 = pneg %p199
    // Predicated region
    $region9: #{unet_up_forward.2} parent=5 // pred_check
      _
    $region10: #{unet_up_forward.2} parent=5 // pred_check_branch
      %202 = sbr.rel (%p199) target = $region12
    $region11: #{unet_up_forward.2} parent=5 // pred_region
      %s203 = ssub.s32 %s12, 1
      // Predicated region
      $region13: #{unet_up_forward.2} parent=11 // pred_check
        %p204 = pneg %p133
      $region14: #{unet_up_forward.2} parent=11 // pred_check_branch
        %206 = sbr.rel (%p204) target = $region16
      $region15: #{unet_up_forward.2} parent=11 // pred_region
        _
      $region16: #{unet_up_forward.2} parent=11 // pred_fallthru
        _
    $region12: #{unet_up_forward.2} parent=5 // pred_fallthru
      _
    %p207 = scmp.lt.s32.totalorder %s12, 32
    // Predicated region
    $region17: #{unet_up_forward.2} parent=5 // pred_check
      %p208 = pneg %p207
    $region18: #{unet_up_forward.2} parent=5 // pred_check_branch
      %210 = sbr.rel (%p208) target = $region20
    $region19: #{unet_up_forward.2} parent=5 // pred_region
      // Predicated region
      $region21: #{unet_up_forward.2} parent=19 // pred_check
        %p211 = pneg %p46
      $region22: #{unet_up_forward.2} parent=19 // pred_check_branch
        %213 = sbr.rel (%p211) target = $region24
      $region23: #{unet_up_forward.2} parent=19 // pred_region
        %p214 = scmp.lt.s32.totalorder %s19, 1
        %s215 = scalar_select %p214, %s19, 1
        %p216 = scmp.lt.s32.totalorder %s20, 17
        %s217 = scalar_select %p216, %s20, 17
        %s218 = smul.addr %s215, 18
        %s219 = sadd.s32 %s217, %s218
        %s220 = smul.addr %s219, 2
        %s221 = scalar_lea.vmem %s0, %s220
      $region24: #{unet_up_forward.2} parent=19 // pred_fallthru
        _
      // Predicated region
      $region25: #{unet_up_forward.2} parent=19 // pred_check
        %p222 = pneg %p76
      $region26: #{unet_up_forward.2} parent=19 // pred_check_branch
        %224 = sbr.rel (%p222) target = $region28
      $region27: #{unet_up_forward.2} parent=19 // pred_region
        %s225 = sadd.s32 %s20, 1
        %p226 = scmp.lt.s32.totalorder %s19, 1
        %s227 = scalar_select %p226, %s19, 1
        %p228 = scmp.lt.s32.totalorder %s225, 17
        %s229 = scalar_select %p228, %s225, 17
        %s230 = smul.addr %s227, 18
        %s231 = sadd.s32 %s229, %s230
        %s232 = smul.addr %s231, 2
        %s233 = scalar_lea.vmem %s1, %s232
        %s234 = sadd.s32 %s20, 1
      $region28: #{unet_up_forward.2} parent=19 // pred_fallthru
        _
      // Predicated region
      $region29: #{unet_up_forward.2} parent=19 // pred_check
        %p235 = pneg %p106
      $region30: #{unet_up_forward.2} parent=19 // pred_check_branch
        %237 = sbr.rel (%p235) target = $region32
      $region31: #{unet_up_forward.2} parent=19 // pred_region
        %s238 = sadd.s32 %s20, 2
        %p239 = scmp.lt.s32.totalorder %s19, 1
        %s240 = scalar_select %p239, %s19, 1
        %p241 = scmp.lt.s32.totalorder %s238, 17
        %s242 = scalar_select %p241, %s238, 17
        %s243 = smul.addr %s240, 18
        %s244 = sadd.s32 %s242, %s243
        %s245 = smul.addr %s244, 2
        %s246 = scalar_lea.vmem %s2, %s245
        %s247 = sadd.s32 %s20, 2
      $region32: #{unet_up_forward.2} parent=19 // pred_fallthru
        _
    $region20: #{unet_up_forward.2} parent=5 // pred_fallthru
      _
    %p248 = scmp.le.s32.totalorder 1, %s12
    %p249 = scmp.lt.s32.totalorder %s12, 33
    %p250 = pnand %p248, %p249
    %p251 = pneg %p250
    // Predicated region
    $region33: #{unet_up_forward.2} parent=5 // pred_check
      _
    $region34: #{unet_up_forward.2} parent=5 // pred_check_branch
      %253 = sbr.rel (%p250) target = $region36
    $region35: #{unet_up_forward.2} parent=5 // pred_region
      %s254 = ssub.s32 %s12, 1
      %p255 = scmp.lt.s32.totalorder %s21, 1
      %s256 = scalar_select %p255, %s21, 1
      %p257 = scmp.lt.s32.totalorder %s22, 17
      %s258 = scalar_select %p257, %s22, 17
      %s259 = smul.addr %s256, 18
      %s260 = sadd.s32 %s258, %s259
      %s261 = smul.addr %s260, 2
      %s262 = scalar_lea.vmem %s0, %s261
      %p263 = pneg %p52
      %p264 = pneg %p49
      %s265 = sadd.s32 %s22, 1
      %p266 = scmp.lt.s32.totalorder %s21, 1
      %s267 = scalar_select %p266, %s21, 1
      %p268 = scmp.lt.s32.totalorder %s265, 17
      %s269 = scalar_select %p268, %s265, 17
      %s270 = smul.addr %s267, 18
      %s271 = sadd.s32 %s269, %s270
      %s272 = smul.addr %s271, 2
      %s273 = scalar_lea.vmem %s1, %s272
      %p274 = pneg %p82
      %p275 = pneg %p79
      %s276 = sadd.s32 %s22, 2
      %p277 = scmp.lt.s32.totalorder %s21, 1
      %s278 = scalar_select %p277, %s21, 1
      %p279 = scmp.lt.s32.totalorder %s276, 17
      %s280 = scalar_select %p279, %s276, 17
      %s281 = smul.addr %s278, 18
      %s282 = sadd.s32 %s280, %s281
      %s283 = smul.addr %s282, 2
      %s284 = scalar_lea.vmem %s2, %s283
      %p285 = pneg %p112
      %p286 = pneg %p109
      %p287 = pneg %p133
      %p288 = pneg %p130
      %p289 = pneg %p161
      %p290 = pneg %p158
      %p291 = scmp.lt.s32.totalorder %s21, 1
      %s292 = scalar_select %p291, %s21, 1
      %p293 = scmp.lt.s32.totalorder %s22, 15
      %s294 = scalar_select %p293, %s22, 15
      %s295 = smul.addr %s292, 16
      %s296 = sadd.s32 %s294, %s295
      %s297 = smul.addr %s296, 8
      %s298 = scalar_lea.vmem %s4, %s297
      %p299 = pneg %p189
      %p300 = pneg %p186
      %p301 = scmp.lt.s32.totalorder %s21, 1
      %s302 = scalar_select %p301, %s21, 1
      %p303 = scmp.lt.s32.totalorder %s22, 15
      %s304 = scalar_select %p303, %s22, 15
      %s305 = smul.addr %s302, 16
      %s306 = sadd.s32 %s304, %s305
      %s307 = smul.addr %s306, 8
      %s308 = scalar_lea.vmem %s5, %s307
      %p309 = scmp.lt.s32.totalorder %s21, 1
      %s310 = scalar_select %p309, %s21, 1
      %p311 = scmp.lt.s32.totalorder %s22, 17
      %s312 = scalar_select %p311, %s22, 17
      %s313 = smul.addr %s310, 18
      %s314 = sadd.s32 %s312, %s313
      %s315 = smul.addr %s314, 2
      %s316 = scalar_lea.vmem %s0, %s315
      %s317 = sadd.s32 %s22, 1
      %p318 = scmp.lt.s32.totalorder %s21, 1
      %s319 = scalar_select %p318, %s21, 1
      %p320 = scmp.lt.s32.totalorder %s317, 17
      %s321 = scalar_select %p320, %s317, 17
      %s322 = smul.addr %s319, 18
      %s323 = sadd.s32 %s321, %s322
      %s324 = smul.addr %s323, 2
      %s325 = scalar_lea.vmem %s1, %s324
      %s326 = sadd.s32 %s22, 1
      %s327 = sadd.s32 %s22, 2
      %p328 = scmp.lt.s32.totalorder %s21, 1
      %s329 = scalar_select %p328, %s21, 1
      %p330 = scmp.lt.s32.totalorder %s327, 17
      %s331 = scalar_select %p330, %s327, 17
      %s332 = smul.addr %s329, 18
      %s333 = sadd.s32 %s331, %s332
      %s334 = smul.addr %s333, 2
      %s335 = scalar_lea.vmem %s2, %s334
      %s336 = sadd.s32 %s22, 2
      %p337 = scmp.lt.s32.totalorder %s21, 1
      %s338 = scalar_select %p337, %s21, 1
      %p339 = scmp.lt.s32.totalorder %s22, 15
      %s340 = scalar_select %p339, %s22, 15
      %s341 = smul.addr %s338, 16
      %s342 = sadd.s32 %s340, %s341
      %s343 = smul.addr %s342, 8
      %s344 = scalar_lea.vmem %s4, %s343
      %p345 = scmp.lt.s32.totalorder %s21, 1
      %s346 = scalar_select %p345, %s21, 1
      %p347 = scmp.lt.s32.totalorder %s22, 15
      %s348 = scalar_select %p347, %s22, 15
      %s349 = smul.addr %s346, 16
      %s350 = sadd.s32 %s348, %s349
      %s351 = smul.addr %s350, 8
      %s352 = scalar_lea.vmem %s5, %s351
      %v354 = vld [vmem:[%s316] sm:$0x3]
      %v355 = vld [vmem:[%s325] sm:$0x3]
      %v356 = vld [vmem:[%s335] sm:$0x3]
      %v357 = vld [vmem:[%s3] sm:$0xf]
      %s358 = scalar_lea.vmem %s3, 4
      %v359 = vld [vmem:[%s358] sm:$0xf]
      %v362 = vunpack.c.l.s4 1983009808
      %v363 = vunpack.c.0.s8 %v362
      %v364 = vlaneseq
      %v365 = vshrl.u32 %v364, 7
      %v366 = vsub.s32 %v363, %v365
      %v367 = vrot.slane %v354, %v366
      %368 = vrot.lane.b32.xlu0 %v367, 127
      %v369 = vpop.permute.xlu0 %368
      %vm370 = vcmask 31744
      %v372 = vsel %vm370, %v359, 0
      %vm374 = vcmask 1041408
      %v376 = vsel %vm374, %v369, 0
      %378 = vmatprep.subr.bf16.mxu0 0
      %379 = vmatpush1.bf16.msra.mxu0 0
      %380 = vmatprep.subr.bf16.mxu0 0
      %381 = vmatpush1.bf16.msra.mxu0 0
      %382 = vmatprep.subr.bf16.mxu0 0
      %383 = vmatpush1.bf16.msra.mxu0 0
      %384 = vmatprep.subr.bf16.mxu0 0
      %385 = vmatpush1.bf16.msra.mxu0 0
      %386 = vmatprep.subr.bf16.mxu0 0
      %387 = vmatpush1.bf16.msra.mxu0 0
      %388 = vmatprep.subr.bf16.mxu0 0
      %389 = vmatpush1.bf16.msra.mxu0 0
      %390 = vmatprep.subr.bf16.mxu0 0
      %391 = vmatpush1.bf16.msra.mxu0 0
      %392 = vmatprep.subr.bf16.mxu0 0
      %393 = vmatpush1.bf16.msra.mxu0 %v376
      %394 = vmatprep.subr.bf16.mxu0 0
      %395 = vmatpush2.bf16.msra.mxu0 0
      %396 = vmatprep.subr.bf16.mxu0 0
      %397 = vmatpush2.bf16.msra.mxu0 0
      %398 = vmatprep.subr.bf16.mxu0 0
      %399 = vmatpush2.bf16.msra.mxu0 0
      %400 = vmatprep.subr.bf16.mxu0 0
      %401 = vmatpush2.bf16.msra.mxu0 0
      %402 = vmatprep.subr.bf16.mxu0 0
      %403 = vmatpush2.bf16.msra.mxu0 0
      %404 = vmatprep.subr.bf16.mxu0 0
      %405 = vmatpush2.bf16.msra.mxu0 0
      %406 = vmatprep.subr.bf16.mxu0 0
      %407 = vmatpush2.bf16.msra.mxu0 0
      %408 = vmatprep.subr.bf16.mxu0 0
      %409 = vmatpush2.bf16.msra.mxu0 0
      %410 = vmatprep.mubr.bf16.mxu0 0
      %411 = vmatmul.mubr.bf16.gmra.mxu0 %v372
      %v412 = vpop.f32.mrf.mxu0
      %v413 = vadd.f32 0.0, %v412
      %v414 = vpop.f32.mrf.mxu0
      %v415 = vpop.f32.mrf.mxu0
      %v416 = vpop.f32.mrf.mxu0
      %417 = vdwg.mxu0
      %v419 = vsel %vm370, %v357, 0
      %v422 = vsel %vm374, %v354, 0
      %424 = vmatprep.subr.bf16.mxu0 0
      %425 = vmatpush1.bf16.msra.mxu0 0
      %426 = vmatprep.subr.bf16.mxu0 0
      %427 = vmatpush1.bf16.msra.mxu0 0
      %428 = vmatprep.subr.bf16.mxu0 0
      %429 = vmatpush1.bf16.msra.mxu0 0
      %430 = vmatprep.subr.bf16.mxu0 0
      %431 = vmatpush1.bf16.msra.mxu0 0
      %432 = vmatprep.subr.bf16.mxu0 0
      %433 = vmatpush1.bf16.msra.mxu0 0
      %434 = vmatprep.subr.bf16.mxu0 0
      %435 = vmatpush1.bf16.msra.mxu0 0
      %436 = vmatprep.subr.bf16.mxu0 0
      %437 = vmatpush1.bf16.msra.mxu0 0
      %438 = vmatprep.subr.bf16.mxu0 0
      %439 = vmatpush1.bf16.msra.mxu0 %v422
      %440 = vmatprep.subr.bf16.mxu0 0
      %441 = vmatpush2.bf16.msra.mxu0 0
      %442 = vmatprep.subr.bf16.mxu0 0
      %443 = vmatpush2.bf16.msra.mxu0 0
      %444 = vmatprep.subr.bf16.mxu0 0
      %445 = vmatpush2.bf16.msra.mxu0 0
      %446 = vmatprep.subr.bf16.mxu0 0
      %447 = vmatpush2.bf16.msra.mxu0 0
      %448 = vmatprep.subr.bf16.mxu0 0
      %449 = vmatpush2.bf16.msra.mxu0 0
      %450 = vmatprep.subr.bf16.mxu0 0
      %451 = vmatpush2.bf16.msra.mxu0 0
      %452 = vmatprep.subr.bf16.mxu0 0
      %453 = vmatpush2.bf16.msra.mxu0 0
      %454 = vmatprep.subr.bf16.mxu0 0
      %455 = vmatpush2.bf16.msra.mxu0 0
      %456 = vmatprep.mubr.bf16.mxu0 0
      %457 = vmatmul.mubr.bf16.gmra.mxu0 %v419
      %v458 = vpop.f32.mrf.mxu0
      %v459 = vadd.f32 %v413, %v458
      %v460 = vpop.f32.mrf.mxu0
      %v461 = vpop.f32.mrf.mxu0
      %v462 = vpop.f32.mrf.mxu0
      %463 = vdwg.mxu0
      %s464 = scalar_lea.vmem %s3, 8
      %v465 = vld [vmem:[%s464] sm:$0xf]
      %466 = vrot.lane.b32.xlu0 %v367, 126
      %v467 = vpop.permute.xlu0 %466
      %v469 = vsel %vm370, %v465, 0
      %v472 = vsel %vm374, %v467, 0
      %474 = vmatprep.subr.bf16.mxu0 0
      %475 = vmatpush1.bf16.msra.mxu0 0
      %476 = vmatprep.subr.bf16.mxu0 0
      %477 = vmatpush1.bf16.msra.mxu0 0
      %478 = vmatprep.subr.bf16.mxu0 0
      %479 = vmatpush1.bf16.msra.mxu0 0
      %480 = vmatprep.subr.bf16.mxu0 0
      %481 = vmatpush1.bf16.msra.mxu0 0
      %482 = vmatprep.subr.bf16.mxu0 0
      %483 = vmatpush1.bf16.msra.mxu0 0
      %484 = vmatprep.subr.bf16.mxu0 0
      %485 = vmatpush1.bf16.msra.mxu0 0
      %486 = vmatprep.subr.bf16.mxu0 0
      %487 = vmatpush1.bf16.msra.mxu0 0
      %488 = vmatprep.subr.bf16.mxu0 0
      %489 = vmatpush1.bf16.msra.mxu0 %v472
      %490 = vmatprep.subr.bf16.mxu0 0
      %491 = vmatpush2.bf16.msra.mxu0 0
      %492 = vmatprep.subr.bf16.mxu0 0
      %493 = vmatpush2.bf16.msra.mxu0 0
      %494 = vmatprep.subr.bf16.mxu0 0
      %495 = vmatpush2.bf16.msra.mxu0 0
      %496 = vmatprep.subr.bf16.mxu0 0
      %497 = vmatpush2.bf16.msra.mxu0 0
      %498 = vmatprep.subr.bf16.mxu0 0
      %499 = vmatpush2.bf16.msra.mxu0 0
      %500 = vmatprep.subr.bf16.mxu0 0
      %501 = vmatpush2.bf16.msra.mxu0 0
      %502 = vmatprep.subr.bf16.mxu0 0
      %503 = vmatpush2.bf16.msra.mxu0 0
      %504 = vmatprep.subr.bf16.mxu0 0
      %505 = vmatpush2.bf16.msra.mxu0 0
      %506 = vmatprep.mubr.bf16.mxu0 0
      %507 = vmatmul.mubr.bf16.gmra.mxu0 %v469
      %v508 = vpop.f32.mrf.mxu0
      %v509 = vadd.f32 0.0, %v508
      %v510 = vpop.f32.mrf.mxu0
      %v511 = vpop.f32.mrf.mxu0
      %v512 = vpop.f32.mrf.mxu0
      %513 = vdwg.mxu0
      %v514 = vadd.f32 %v459, %v509
      %s515 = scalar_lea.vmem %s3, 12
      %v516 = vld [vmem:[%s515] sm:$0xf]
      %v518 = vsel %vm370, %v516, 0
      %v521 = vsel %vm374, %v355, 0
      %523 = vmatprep.subr.bf16.mxu0 0
      %524 = vmatpush1.bf16.msra.mxu0 0
      %525 = vmatprep.subr.bf16.mxu0 0
      %526 = vmatpush1.bf16.msra.mxu0 0
      %527 = vmatprep.subr.bf16.mxu0 0
      %528 = vmatpush1.bf16.msra.mxu0 0
      %529 = vmatprep.subr.bf16.mxu0 0
      %530 = vmatpush1.bf16.msra.mxu0 0
      %531 = vmatprep.subr.bf16.mxu0 0
      %532 = vmatpush1.bf16.msra.mxu0 0
      %533 = vmatprep.subr.bf16.mxu0 0
      %534 = vmatpush1.bf16.msra.mxu0 0
      %535 = vmatprep.subr.bf16.mxu0 0
      %536 = vmatpush1.bf16.msra.mxu0 0
      %537 = vmatprep.subr.bf16.mxu0 0
      %538 = vmatpush1.bf16.msra.mxu0 %v521
      %539 = vmatprep.subr.bf16.mxu0 0
      %540 = vmatpush2.bf16.msra.mxu0 0
      %541 = vmatprep.subr.bf16.mxu0 0
      %542 = vmatpush2.bf16.msra.mxu0 0
      %543 = vmatprep.subr.bf16.mxu0 0
      %544 = vmatpush2.bf16.msra.mxu0 0
      %545 = vmatprep.subr.bf16.mxu0 0
      %546 = vmatpush2.bf16.msra.mxu0 0
      %547 = vmatprep.subr.bf16.mxu0 0
      %548 = vmatpush2.bf16.msra.mxu0 0
      %549 = vmatprep.subr.bf16.mxu0 0
      %550 = vmatpush2.bf16.msra.mxu0 0
      %551 = vmatprep.subr.bf16.mxu0 0
      %552 = vmatpush2.bf16.msra.mxu0 0
      %553 = vmatprep.subr.bf16.mxu0 0
      %554 = vmatpush2.bf16.msra.mxu0 0
      %555 = vmatprep.mubr.bf16.mxu0 0
      %556 = vmatmul.mubr.bf16.gmra.mxu0 %v518
      %v557 = vpop.f32.mrf.mxu0
      %v558 = vadd.f32 0.0, %v557
      %v559 = vpop.f32.mrf.mxu0
      %v560 = vpop.f32.mrf.mxu0
      %v561 = vpop.f32.mrf.mxu0
      %562 = vdwg.mxu0
      %v563 = vadd.f32 %v514, %v558
      %s564 = scalar_lea.vmem %s3, 16
      %v565 = vld [vmem:[%s564] sm:$0xf]
      %v568 = vunpack.c.l.s4 1983009808
      %v569 = vunpack.c.0.s8 %v568
      %v570 = vlaneseq
      %v571 = vshrl.u32 %v570, 7
      %v572 = vsub.s32 %v569, %v571
      %v573 = vrot.slane %v355, %v572
      %574 = vrot.lane.b32.xlu0 %v573, 127
      %v575 = vpop.permute.xlu0 %574
      %v577 = vsel %vm370, %v565, 0
      %v580 = vsel %vm374, %v575, 0
      %582 = vmatprep.subr.bf16.mxu0 0
      %583 = vmatpush1.bf16.msra.mxu0 0
      %584 = vmatprep.subr.bf16.mxu0 0
      %585 = vmatpush1.bf16.msra.mxu0 0
      %586 = vmatprep.subr.bf16.mxu0 0
      %587 = vmatpush1.bf16.msra.mxu0 0
      %588 = vmatprep.subr.bf16.mxu0 0
      %589 = vmatpush1.bf16.msra.mxu0 0
      %590 = vmatprep.subr.bf16.mxu0 0
      %591 = vmatpush1.bf16.msra.mxu0 0
      %592 = vmatprep.subr.bf16.mxu0 0
      %593 = vmatpush1.bf16.msra.mxu0 0
      %594 = vmatprep.subr.bf16.mxu0 0
      %595 = vmatpush1.bf16.msra.mxu0 0
      %596 = vmatprep.subr.bf16.mxu0 0
      %597 = vmatpush1.bf16.msra.mxu0 %v580
      %598 = vmatprep.subr.bf16.mxu0 0
      %599 = vmatpush2.bf16.msra.mxu0 0
      %600 = vmatprep.subr.bf16.mxu0 0
      %601 = vmatpush2.bf16.msra.mxu0 0
      %602 = vmatprep.subr.bf16.mxu0 0
      %603 = vmatpush2.bf16.msra.mxu0 0
      %604 = vmatprep.subr.bf16.mxu0 0
      %605 = vmatpush2.bf16.msra.mxu0 0
      %606 = vmatprep.subr.bf16.mxu0 0
      %607 = vmatpush2.bf16.msra.mxu0 0
      %608 = vmatprep.subr.bf16.mxu0 0
      %609 = vmatpush2.bf16.msra.mxu0 0
      %610 = vmatprep.subr.bf16.mxu0 0
      %611 = vmatpush2.bf16.msra.mxu0 0
      %612 = vmatprep.subr.bf16.mxu0 0
      %613 = vmatpush2.bf16.msra.mxu0 0
      %614 = vmatprep.mubr.bf16.mxu0 0
      %615 = vmatmul.mubr.bf16.gmra.mxu0 %v577
      %v616 = vpop.f32.mrf.mxu0
      %v617 = vadd.f32 0.0, %v616
      %v618 = vpop.f32.mrf.mxu0
      %v619 = vpop.f32.mrf.mxu0
      %v620 = vpop.f32.mrf.mxu0
      %621 = vdwg.mxu0
      %v622 = vadd.f32 %v563, %v617
      %s623 = scalar_lea.vmem %s3, 20
      %v624 = vld [vmem:[%s623] sm:$0xf]
      %625 = vrot.lane.b32.xlu0 %v573, 126
      %v626 = vpop.permute.xlu0 %625
      %v628 = vsel %vm370, %v624, 0
      %v631 = vsel %vm374, %v626, 0
      %633 = vmatprep.subr.bf16.mxu0 0
      %634 = vmatpush1.bf16.msra.mxu0 0
      %635 = vmatprep.subr.bf16.mxu0 0
      %636 = vmatpush1.bf16.msra.mxu0 0
      %637 = vmatprep.subr.bf16.mxu0 0
      %638 = vmatpush1.bf16.msra.mxu0 0
      %639 = vmatprep.subr.bf16.mxu0 0
      %640 = vmatpush1.bf16.msra.mxu0 0
      %641 = vmatprep.subr.bf16.mxu0 0
      %642 = vmatpush1.bf16.msra.mxu0 0
      %643 = vmatprep.subr.bf16.mxu0 0
      %644 = vmatpush1.bf16.msra.mxu0 0
      %645 = vmatprep.subr.bf16.mxu0 0
      %646 = vmatpush1.bf16.msra.mxu0 0
      %647 = vmatprep.subr.bf16.mxu0 0
      %648 = vmatpush1.bf16.msra.mxu0 %v631
      %649 = vmatprep.subr.bf16.mxu0 0
      %650 = vmatpush2.bf16.msra.mxu0 0
      %651 = vmatprep.subr.bf16.mxu0 0
      %652 = vmatpush2.bf16.msra.mxu0 0
      %653 = vmatprep.subr.bf16.mxu0 0
      %654 = vmatpush2.bf16.msra.mxu0 0
      %655 = vmatprep.subr.bf16.mxu0 0
      %656 = vmatpush2.bf16.msra.mxu0 0
      %657 = vmatprep.subr.bf16.mxu0 0
      %658 = vmatpush2.bf16.msra.mxu0 0
      %659 = vmatprep.subr.bf16.mxu0 0
      %660 = vmatpush2.bf16.msra.mxu0 0
      %661 = vmatprep.subr.bf16.mxu0 0
      %662 = vmatpush2.bf16.msra.mxu0 0
      %663 = vmatprep.subr.bf16.mxu0 0
      %664 = vmatpush2.bf16.msra.mxu0 0
      %665 = vmatprep.mubr.bf16.mxu0 0
      %666 = vmatmul.mubr.bf16.gmra.mxu0 %v628
      %v667 = vpop.f32.mrf.mxu0
      %v668 = vadd.f32 0.0, %v667
      %v669 = vpop.f32.mrf.mxu0
      %v670 = vpop.f32.mrf.mxu0
      %v671 = vpop.f32.mrf.mxu0
      %672 = vdwg.mxu0
      %v673 = vadd.f32 %v622, %v668
      %s674 = scalar_lea.vmem %s3, 24
      %v675 = vld [vmem:[%s674] sm:$0xf]
      %v677 = vsel %vm370, %v675, 0
      %v680 = vsel %vm374, %v356, 0
      %682 = vmatprep.subr.bf16.mxu0 0
      %683 = vmatpush1.bf16.msra.mxu0 0
      %684 = vmatprep.subr.bf16.mxu0 0
      %685 = vmatpush1.bf16.msra.mxu0 0
      %686 = vmatprep.subr.bf16.mxu0 0
      %687 = vmatpush1.bf16.msra.mxu0 0
      %688 = vmatprep.subr.bf16.mxu0 0
      %689 = vmatpush1.bf16.msra.mxu0 0
      %690 = vmatprep.subr.bf16.mxu0 0
      %691 = vmatpush1.bf16.msra.mxu0 0
      %692 = vmatprep.subr.bf16.mxu0 0
      %693 = vmatpush1.bf16.msra.mxu0 0
      %694 = vmatprep.subr.bf16.mxu0 0
      %695 = vmatpush1.bf16.msra.mxu0 0
      %696 = vmatprep.subr.bf16.mxu0 0
      %697 = vmatpush1.bf16.msra.mxu0 %v680
      %698 = vmatprep.subr.bf16.mxu0 0
      %699 = vmatpush2.bf16.msra.mxu0 0
      %700 = vmatprep.subr.bf16.mxu0 0
      %701 = vmatpush2.bf16.msra.mxu0 0
      %702 = vmatprep.subr.bf16.mxu0 0
      %703 = vmatpush2.bf16.msra.mxu0 0
      %704 = vmatprep.subr.bf16.mxu0 0
      %705 = vmatpush2.bf16.msra.mxu0 0
      %706 = vmatprep.subr.bf16.mxu0 0
      %707 = vmatpush2.bf16.msra.mxu0 0
      %708 = vmatprep.subr.bf16.mxu0 0
      %709 = vmatpush2.bf16.msra.mxu0 0
      %710 = vmatprep.subr.bf16.mxu0 0
      %711 = vmatpush2.bf16.msra.mxu0 0
      %712 = vmatprep.subr.bf16.mxu0 0
      %713 = vmatpush2.bf16.msra.mxu0 0
      %714 = vmatprep.mubr.bf16.mxu0 0
      %715 = vmatmul.mubr.bf16.gmra.mxu0 %v677
      %v716 = vpop.f32.mrf.mxu0
      %v717 = vadd.f32 0.0, %v716
      %v718 = vpop.f32.mrf.mxu0
      %v719 = vpop.f32.mrf.mxu0
      %v720 = vpop.f32.mrf.mxu0
      %721 = vdwg.mxu0
      %v722 = vadd.f32 %v673, %v717
      %s723 = scalar_lea.vmem %s3, 28
      %v724 = vld [vmem:[%s723] sm:$0xf]
      %v727 = vunpack.c.l.s4 1983009808
      %v728 = vunpack.c.0.s8 %v727
      %v729 = vlaneseq
      %v730 = vshrl.u32 %v729, 7
      %v731 = vsub.s32 %v728, %v730
      %v732 = vrot.slane %v356, %v731
      %733 = vrot.lane.b32.xlu0 %v732, 127
      %v734 = vpop.permute.xlu0 %733
      %v736 = vsel %vm370, %v724, 0
      %v739 = vsel %vm374, %v734, 0
      %741 = vmatprep.subr.bf16.mxu0 0
      %742 = vmatpush1.bf16.msra.mxu0 0
      %743 = vmatprep.subr.bf16.mxu0 0
      %744 = vmatpush1.bf16.msra.mxu0 0
      %745 = vmatprep.subr.bf16.mxu0 0
      %746 = vmatpush1.bf16.msra.mxu0 0
      %747 = vmatprep.subr.bf16.mxu0 0
      %748 = vmatpush1.bf16.msra.mxu0 0
      %749 = vmatprep.subr.bf16.mxu0 0
      %750 = vmatpush1.bf16.msra.mxu0 0
      %751 = vmatprep.subr.bf16.mxu0 0
      %752 = vmatpush1.bf16.msra.mxu0 0
      %753 = vmatprep.subr.bf16.mxu0 0
      %754 = vmatpush1.bf16.msra.mxu0 0
      %755 = vmatprep.subr.bf16.mxu0 0
      %756 = vmatpush1.bf16.msra.mxu0 %v739
      %757 = vmatprep.subr.bf16.mxu0 0
      %758 = vmatpush2.bf16.msra.mxu0 0
      %759 = vmatprep.subr.bf16.mxu0 0
      %760 = vmatpush2.bf16.msra.mxu0 0
      %761 = vmatprep.subr.bf16.mxu0 0
      %762 = vmatpush2.bf16.msra.mxu0 0
      %763 = vmatprep.subr.bf16.mxu0 0
      %764 = vmatpush2.bf16.msra.mxu0 0
      %765 = vmatprep.subr.bf16.mxu0 0
      %766 = vmatpush2.bf16.msra.mxu0 0
      %767 = vmatprep.subr.bf16.mxu0 0
      %768 = vmatpush2.bf16.msra.mxu0 0
      %769 = vmatprep.subr.bf16.mxu0 0
      %770 = vmatpush2.bf16.msra.mxu0 0
      %771 = vmatprep.subr.bf16.mxu0 0
      %772 = vmatpush2.bf16.msra.mxu0 0
      %773 = vmatprep.mubr.bf16.mxu0 0
      %774 = vmatmul.mubr.bf16.gmra.mxu0 %v736
      %v775 = vpop.f32.mrf.mxu0
      %v776 = vadd.f32 0.0, %v775
      %v777 = vpop.f32.mrf.mxu0
      %v778 = vpop.f32.mrf.mxu0
      %v779 = vpop.f32.mrf.mxu0
      %780 = vdwg.mxu0
      %v781 = vadd.f32 %v722, %v776
      %s782 = scalar_lea.vmem %s3, 32
      %v783 = vld [vmem:[%s782] sm:$0xf]
      %784 = vrot.lane.b32.xlu0 %v732, 126
      %v785 = vpop.permute.xlu0 %784
      %v787 = vsel %vm370, %v783, 0
      %v790 = vsel %vm374, %v785, 0
      %792 = vmatprep.subr.bf16.mxu0 0
      %793 = vmatpush1.bf16.msra.mxu0 0
      %794 = vmatprep.subr.bf16.mxu0 0
      %795 = vmatpush1.bf16.msra.mxu0 0
      %796 = vmatprep.subr.bf16.mxu0 0
      %797 = vmatpush1.bf16.msra.mxu0 0
      %798 = vmatprep.subr.bf16.mxu0 0
      %799 = vmatpush1.bf16.msra.mxu0 0
      %800 = vmatprep.subr.bf16.mxu0 0
      %801 = vmatpush1.bf16.msra.mxu0 0
      %802 = vmatprep.subr.bf16.mxu0 0
      %803 = vmatpush1.bf16.msra.mxu0 0
      %804 = vmatprep.subr.bf16.mxu0 0
      %805 = vmatpush1.bf16.msra.mxu0 0
      %806 = vmatprep.subr.bf16.mxu0 0
      %807 = vmatpush1.bf16.msra.mxu0 %v790
      %808 = vmatprep.subr.bf16.mxu0 0
      %809 = vmatpush2.bf16.msra.mxu0 0
      %810 = vmatprep.subr.bf16.mxu0 0
      %811 = vmatpush2.bf16.msra.mxu0 0
      %812 = vmatprep.subr.bf16.mxu0 0
      %813 = vmatpush2.bf16.msra.mxu0 0
      %814 = vmatprep.subr.bf16.mxu0 0
      %815 = vmatpush2.bf16.msra.mxu0 0
      %816 = vmatprep.subr.bf16.mxu0 0
      %817 = vmatpush2.bf16.msra.mxu0 0
      %818 = vmatprep.subr.bf16.mxu0 0
      %819 = vmatpush2.bf16.msra.mxu0 0
      %820 = vmatprep.subr.bf16.mxu0 0
      %821 = vmatpush2.bf16.msra.mxu0 0
      %822 = vmatprep.subr.bf16.mxu0 0
      %823 = vmatpush2.bf16.msra.mxu0 0
      %824 = vmatprep.mubr.bf16.mxu0 0
      %825 = vmatmul.mubr.bf16.gmra.mxu0 %v787
      %v826 = vpop.f32.mrf.mxu0
      %v827 = vadd.f32 0.0, %v826
      %v828 = vpop.f32.mrf.mxu0
      %v829 = vpop.f32.mrf.mxu0
      %v830 = vpop.f32.mrf.mxu0
      %831 = vdwg.mxu0
      %v832 = vadd.f32 %v781, %v827
      %vm833 = vcmask 130048
      %834 = vst.msk [vmem:[%s344] sm:$0xff] %vm833, %v832
      %v835 = vsel %vm833, %v832, 0.0
      %836 = vadd.xlane.f32.xlu0 %v835
      %v837 = vpop.xlane.xlu0 %836
      %v838 = vmul.f32 %v837, 0.0625
      %v839 = vsub.f32 %v832, %v838
      %v840 = vmul.f32 %v839, %v839
      %v841 = vsel %vm833, %v840, 0.0
      %842 = vadd.xlane.f32.xlu0 %v841
      %v843 = vpop.xlane.xlu0 %842
      %vm844 = vcmask 7168
      %v845 = vsel %vm844, %v837, %v843
      %vm846 = vcmask 15360
      %847 = vst.msk [vmem:[%s352] sm:$0xff] %vm846, %v845
      %p848 = scmp.lt.s32.totalorder %s21, 1
      %s849 = scalar_select %p848, %s21, 1
      %p850 = scmp.lt.s32.totalorder %s22, 15
      %s851 = scalar_select %p850, %s22, 15
      %s852 = smul.addr %s849, 16
      %s853 = sadd.s32 %s851, %s852
      %s854 = smul.addr %s853, 8
      %s855 = scalar_lea.vmem %s4, %s854
      %p856 = scmp.lt.s32.totalorder %s21, 1
      %s857 = scalar_select %p856, %s21, 1
      %p858 = scmp.lt.s32.totalorder %s22, 15
      %s859 = scalar_select %p858, %s22, 15
      %s860 = smul.addr %s857, 16
      %s861 = sadd.s32 %s859, %s860
      %s862 = smul.addr %s861, 8
      %s863 = scalar_lea.vmem %s5, %s862
      // Predicated region
      $region37: #{unet_up_forward.2} parent=35 // pred_check
        %p864 = pneg %p158
      $region38: #{unet_up_forward.2} parent=35 // pred_check_branch
        %866 = sbr.rel (%p864) target = $region40
      $region39: #{unet_up_forward.2} parent=35 // pred_region
        _
      $region40: #{unet_up_forward.2} parent=35 // pred_fallthru
        _
      // Predicated region
      $region41: #{unet_up_forward.2} parent=35 // pred_check
        %p867 = pneg %p186
      $region42: #{unet_up_forward.2} parent=35 // pred_check_branch
        %869 = sbr.rel (%p867) target = $region44
      $region43: #{unet_up_forward.2} parent=35 // pred_region
        _
      $region44: #{unet_up_forward.2} parent=35 // pred_fallthru
        _
    $region36: #{unet_up_forward.2} parent=5 // pred_fallthru
      _
    %p870 = scmp.le.s32.totalorder 2, %s12
    // Predicated region
    $region45: #{unet_up_forward.2} parent=5 // pred_check
      %p871 = pneg %p870
    $region46: #{unet_up_forward.2} parent=5 // pred_check_branch
      %873 = sbr.rel (%p871) target = $region48
    $region47: #{unet_up_forward.2} parent=5 // pred_region
      %s874 = ssub.s32 %s12, 2
      // Predicated region
      $region49: #{unet_up_forward.2} parent=47 // pred_check
        %p875 = pneg %p164
      $region50: #{unet_up_forward.2} parent=47 // pred_check_branch
        %877 = sbr.rel (%p875) target = $region52
      $region51: #{unet_up_forward.2} parent=47 // pred_region
        %p878 = scmp.lt.s32.totalorder %s23, 1
        %s879 = scalar_select %p878, %s23, 1
        %p880 = scmp.lt.s32.totalorder %s24, 15
        %s881 = scalar_select %p880, %s24, 15
        %s882 = smul.addr %s879, 16
        %s883 = sadd.s32 %s881, %s882
        %s884 = smul.addr %s883, 8
        %s885 = scalar_lea.vmem %s4, %s884
      $region52: #{unet_up_forward.2} parent=47 // pred_fallthru
        _
      // Predicated region
      $region53: #{unet_up_forward.2} parent=47 // pred_check
        %p886 = pneg %p192
      $region54: #{unet_up_forward.2} parent=47 // pred_check_branch
        %888 = sbr.rel (%p886) target = $region56
      $region55: #{unet_up_forward.2} parent=47 // pred_region
        %p889 = scmp.lt.s32.totalorder %s23, 1
        %s890 = scalar_select %p889, %s23, 1
        %p891 = scmp.lt.s32.totalorder %s24, 15
        %s892 = scalar_select %p891, %s24, 15
        %s893 = smul.addr %s890, 16
        %s894 = sadd.s32 %s892, %s893
        %s895 = smul.addr %s894, 8
        %s896 = scalar_lea.vmem %s5, %s895
      $region56: #{unet_up_forward.2} parent=47 // pred_fallthru
        _
    $region48: #{unet_up_forward.2} parent=5 // pred_fallthru
      _
  $region6: #{unet_up_forward.2} parent=0 // loop_footer
    %s16 = sadd.s32 1, %s12
  $region7: #{unet_up_forward.2} parent=0 // loop_footer_branch
    %11 = sbr.rel target = $region3
  $region8: #{unet_up_forward.2} parent=0 // loop_exit
    _

// kernel: unet_up_forward.3
$region0: #{unet_up_forward.3}
  #allocation0 [shape = 'u32[]', space=smem, size = 0x4, offset = 0x4, fixed_abs, tag = 'smem constant byte address 0x4 - core index']
  #allocation1 [shape = 'u32[144,128]{1,0:T(1,128)}', space=vmem, size = 0x12000, scoped, tag = 'internal scratch']
  %s0 = inlined_call_operand.vmem [shape: f32[2,16,8,16], index: 0, kind: input, shape index: {}]
  %s1 = inlined_call_operand.vmem [shape: f32[8], index: 1, kind: input, shape index: {}]
  %s2 = inlined_call_operand.vmem [shape: f32[8], index: 2, kind: input, shape index: {}]
  %s3 = inlined_call_operand.vmem [shape: f32[32,16], index: 3, kind: input, shape index: {}]
  %s4 = inlined_call_operand.vmem [shape: f32[16,32], index: 4, kind: input, shape index: {}]
  %s5 = inlined_call_operand.hbm [shape: f32[2,8,32,32], index: 5, kind: output, shape index: {}]
  %s6 = sld [smem:[#allocation0]]
  $region61: #{unet_up_forward.3} parent=0
    _
  %s8 = ssub.s32 1, %s6
  %s9 = scalar_select 0, %s8, %s6
  $region1: #{unet_up_forward.3} parent=0
    #allocation2 [shape = 'u8[512]{0}', space=smem, size = 0x200, scoped, tag = 'input window, operand 1, single buffered']
    #allocation3 [shape = 's32[2]{0}', space=sflag, size = 0x8, scoped, tag = 'scoped memory for unet_up_forward.3']
    #allocation4 [shape = 's32[2]{0}', space=sflag, size = 0x8, scoped, tag = 'scoped memory for unet_up_forward.3']
    #allocation5 [shape = 'u8[512]{0}', space=smem, size = 0x200, scoped, tag = 'input window, operand 2, single buffered']
    #allocation6 [shape = 's32[1]{0}', space=sflag, size = 0x4, scoped, tag = 'scoped memory for unet_up_forward.3']
    #allocation7 [shape = 'u8[262144]{0}', space=vmem, size = 0x40000, scoped, tag = 'output window, operand 0']
    %10 = vsyncpa [#allocation4], 0
    %11 = vsyncpa [#allocation6], 0
    %12 = vsyncpa [#allocation3], 0
    %s13 = scalar_lea.sflag [#allocation3], 1
    %14 = vsyncpa %s13, 0
    loop: start=0, step=1, limit=4
    $region2: #{unet_up_forward.3} parent=1 // loop_pre_header
      _
    $region3: #{unet_up_forward.3} parent=1 // loop_header
      %s16 = sphi 0, %s20
      %p17 = scmp.ge.s32.totalorder %s16, 4
      %s23 = sphi 0, %s35
      %s24 = sphi 0, %s31
      %s25 = sphi 0, %s23
      %s26 = sphi 0, %s24
      %s27 = sphi 0, %s25
      %s28 = sphi 0, %s26
      %s40 = sphi 0, %s42
      %s43 = sphi 0, %s40
      %s44 = sphi 0, %s43
      %s60 = sphi 0, %s44
      %s64 = sphi 0, %s64
      %s66 = sphi 0, %s64
      %s67 = sphi 0, %s66
      %s81 = sphi 0, %s67
      %s85 = sphi 0, %s85
      %s87 = sphi 0, %s85
      %s88 = sphi 0, %s87
      %s102 = sphi 0, %s88
      %s106 = sphi 0, %s106
      %s108 = sphi 0, %s106
      %s109 = sphi 0, %s108
      %s123 = sphi 0, %s109
      %s127 = sphi 0, %s127
      %s129 = sphi 0, %s127
      %s130 = sphi 0, %s129
      %s144 = sphi 0, %s130
      %s152 = sphi 0, %s154
      %s155 = sphi 0, %s152
      %s156 = sphi 0, %s155
      %s172 = sphi 0, %s156
    $region4: #{unet_up_forward.3} parent=1 // loop_header_branch
      %19 = sbr.rel (%p17) target = $region8
    $region5: #{unet_up_forward.3} parent=1 // loop_body
      %s21 = ssub.s32 %s16, 1
      %s22 = ssub.s32 %s16, 2
      %s29 = sadd.s32 1, %s24
      %p30 = scmp.ge.s32.totalorder %s29, 1
      %s31 = scalar_select %p30, 0, %s29
      %s32 = sadd.s32 1, %s23
      %s33 = scalar_select %p30, %s32, %s23
      %p34 = scmp.ge.s32.totalorder %s33, 2
      %s35 = scalar_select %p34, 0, %s33
      %s36 = ssub.s32 %s23, %s35
      %s37 = ssub.s32 %s24, %s31
      %s38 = sor.u32 %s36, %s37
      %p39 = scmp.eq.s32.totalorder %s38, 0
      %s41 = sadd.s32 %s40, 1
      %s42 = scalar_select %p39, %s40, %s41
      %p45 = pneg %p39
      %p46 = scmp.eq.s32.totalorder %s16, 1
      %p47 = por %p45, %p46
      %p48 = scmp.ne.s32.totalorder %s40, %s43
      %p49 = scmp.eq.s32.totalorder %s16, 0
      %p50 = por %p48, %p49
      %p51 = scmp.ne.s32.totalorder %s40, %s43
      %p52 = scmp.eq.s32.totalorder %s21, 1
      %p53 = por %p51, %p52
      %p54 = scmp.ne.s32.totalorder %s43, %s44
      %p55 = scmp.eq.s32.totalorder %s21, 0
      %p56 = por %p54, %p55
      %p57 = scmp.ne.s32.totalorder %s43, %s44
      %p58 = scmp.eq.s32.totalorder %s22, 1
      %p59 = por %p57, %p58
      %p61 = scmp.ne.s32.totalorder %s44, %s60
      %p62 = scmp.eq.s32.totalorder %s22, 0
      %p63 = por %p61, %p62
      %s65 = sadd.s32 %s64, 1
      %p68 = scmp.eq.s32.totalorder %s16, 1
      %p69 = scmp.ne.s32.totalorder %s64, %s66
      %p70 = scmp.eq.s32.totalorder %s16, 0
      %p71 = por %p69, %p70
      %p72 = scmp.ne.s32.totalorder %s64, %s66
      %p73 = scmp.eq.s32.totalorder %s21, 1
      %p74 = por %p72, %p73
      %p75 = scmp.ne.s32.totalorder %s66, %s67
      %p76 = scmp.eq.s32.totalorder %s21, 0
      %p77 = por %p75, %p76
      %p78 = scmp.ne.s32.totalorder %s66, %s67
      %p79 = scmp.eq.s32.totalorder %s22, 1
      %p80 = por %p78, %p79
      %p82 = scmp.ne.s32.totalorder %s67, %s81
      %p83 = scmp.eq.s32.totalorder %s22, 0
      %p84 = por %p82, %p83
      %s86 = sadd.s32 %s85, 1
      %p89 = scmp.eq.s32.totalorder %s16, 1
      %p90 = scmp.ne.s32.totalorder %s85, %s87
      %p91 = scmp.eq.s32.totalorder %s16, 0
      %p92 = por %p90, %p91
      %p93 = scmp.ne.s32.totalorder %s85, %s87
      %p94 = scmp.eq.s32.totalorder %s21, 1
      %p95 = por %p93, %p94
      %p96 = scmp.ne.s32.totalorder %s87, %s88
      %p97 = scmp.eq.s32.totalorder %s21, 0
      %p98 = por %p96, %p97
      %p99 = scmp.ne.s32.totalorder %s87, %s88
      %p100 = scmp.eq.s32.totalorder %s22, 1
      %p101 = por %p99, %p100
      %p103 = scmp.ne.s32.totalorder %s88, %s102
      %p104 = scmp.eq.s32.totalorder %s22, 0
      %p105 = por %p103, %p104
      %s107 = sadd.s32 %s106, 1
      %p110 = scmp.eq.s32.totalorder %s16, 1
      %p111 = scmp.ne.s32.totalorder %s106, %s108
      %p112 = scmp.eq.s32.totalorder %s16, 0
      %p113 = por %p111, %p112
      %p114 = scmp.ne.s32.totalorder %s106, %s108
      %p115 = scmp.eq.s32.totalorder %s21, 1
      %p116 = por %p114, %p115
      %p117 = scmp.ne.s32.totalorder %s108, %s109
      %p118 = scmp.eq.s32.totalorder %s21, 0
      %p119 = por %p117, %p118
      %p120 = scmp.ne.s32.totalorder %s108, %s109
      %p121 = scmp.eq.s32.totalorder %s22, 1
      %p122 = por %p120, %p121
      %p124 = scmp.ne.s32.totalorder %s109, %s123
      %p125 = scmp.eq.s32.totalorder %s22, 0
      %p126 = por %p124, %p125
      %s128 = sadd.s32 %s127, 1
      %p131 = scmp.eq.s32.totalorder %s16, 1
      %p132 = scmp.ne.s32.totalorder %s127, %s129
      %p133 = scmp.eq.s32.totalorder %s16, 0
      %p134 = por %p132, %p133
      %p135 = scmp.ne.s32.totalorder %s127, %s129
      %p136 = scmp.eq.s32.totalorder %s21, 1
      %p137 = por %p135, %p136
      %p138 = scmp.ne.s32.totalorder %s129, %s130
      %p139 = scmp.eq.s32.totalorder %s21, 0
      %p140 = por %p138, %p139
      %p141 = scmp.ne.s32.totalorder %s129, %s130
      %p142 = scmp.eq.s32.totalorder %s22, 1
      %p143 = por %p141, %p142
      %p145 = scmp.ne.s32.totalorder %s130, %s144
      %p146 = scmp.eq.s32.totalorder %s22, 0
      %p147 = por %p145, %p146
      %s148 = ssub.s32 %s23, %s35
      %s149 = ssub.s32 %s24, %s31
      %s150 = sor.u32 %s148, %s149
      %p151 = scmp.eq.s32.totalorder %s150, 0
      %s153 = sadd.s32 %s152, 1
      %s154 = scalar_select %p151, %s152, %s153
      %p157 = pneg %p151
      %p158 = scmp.eq.s32.totalorder %s16, 1
      %p159 = por %p157, %p158
      %p160 = scmp.ne.s32.totalorder %s152, %s155
      %p161 = scmp.eq.s32.totalorder %s16, 0
      %p162 = por %p160, %p161
      %p163 = scmp.ne.s32.totalorder %s152, %s155
      %p164 = scmp.eq.s32.totalorder %s21, 1
      %p165 = por %p163, %p164
      %p166 = scmp.ne.s32.totalorder %s155, %s156
      %p167 = scmp.eq.s32.totalorder %s21, 0
      %p168 = por %p166, %p167
      %p169 = scmp.ne.s32.totalorder %s155, %s156
      %p170 = scmp.eq.s32.totalorder %s22, 1
      %p171 = por %p169, %p170
      %p173 = scmp.ne.s32.totalorder %s156, %s172
      %p174 = scmp.eq.s32.totalorder %s22, 0
      %p175 = por %p173, %p174
      %p176 = scmp.le.s32.totalorder 1, %s16
      %p177 = scmp.lt.s32.totalorder %s16, 3
      %p178 = pnand %p176, %p177
      %p179 = pneg %p178
      // Predicated region
      $region9: #{unet_up_forward.3} parent=5 // pred_check
        _
      $region10: #{unet_up_forward.3} parent=5 // pred_check_branch
        %181 = sbr.rel (%p178) target = $region12
      $region11: #{unet_up_forward.3} parent=5 // pred_region
        %s182 = ssub.s32 %s16, 1
        // Predicated region
        $region13: #{unet_up_forward.3} parent=11 // pred_check
          %p183 = pneg %p77
        $region14: #{unet_up_forward.3} parent=11 // pred_check_branch
          %185 = sbr.rel (%p183) target = $region16
        $region15: #{unet_up_forward.3} parent=11 // pred_region
          %s187 = ssub.s32 16, 16
          %188 = vsyncadd [#allocation4], %s187
          %s190 = sshll.u32 %s1, 4
          %s191 = int_to_ptr.vmem [resolvable:$true] %s190
          %193 = dma.vmem_to_smem %s191, 16, [#allocation2], [#allocation4]
        $region16: #{unet_up_forward.3} parent=11 // pred_fallthru
          _
        // Predicated region
        $region17: #{unet_up_forward.3} parent=11 // pred_check
          %p194 = pneg %p98
        $region18: #{unet_up_forward.3} parent=11 // pred_check_branch
          %196 = sbr.rel (%p194) target = $region20
        $region19: #{unet_up_forward.3} parent=11 // pred_region
          %s198 = ssub.s32 16, 16
          %199 = vsyncadd [#allocation6], %s198
          %s201 = sshll.u32 %s2, 4
          %s202 = int_to_ptr.vmem [resolvable:$true] %s201
          %204 = dma.vmem_to_smem %s202, 16, [#allocation5], [#allocation6]
        $region20: #{unet_up_forward.3} parent=11 // pred_fallthru
          _
        // Predicated region
        $region21: #{unet_up_forward.3} parent=11 // pred_check
          %p205 = pneg %p119
        $region22: #{unet_up_forward.3} parent=11 // pred_check_branch
          %207 = sbr.rel (%p205) target = $region24
        $region23: #{unet_up_forward.3} parent=11 // pred_region
          _
        $region24: #{unet_up_forward.3} parent=11 // pred_fallthru
          _
        // Predicated region
        $region25: #{unet_up_forward.3} parent=11 // pred_check
          %p208 = pneg %p140
        $region26: #{unet_up_forward.3} parent=11 // pred_check_branch
          %210 = sbr.rel (%p208) target = $region28
        $region27: #{unet_up_forward.3} parent=11 // pred_region
          _
        $region28: #{unet_up_forward.3} parent=11 // pred_fallthru
          _
      $region12: #{unet_up_forward.3} parent=5 // pred_fallthru
        _
      %p211 = scmp.lt.s32.totalorder %s16, 2
      // Predicated region
      $region29: #{unet_up_forward.3} parent=5 // pred_check
        %p212 = pneg %p211
      $region30: #{unet_up_forward.3} parent=5 // pred_check_branch
        %214 = sbr.rel (%p212) target = $region32
      $region31: #{unet_up_forward.3} parent=5 // pred_region
        // Predicated region
        $region33: #{unet_up_forward.3} parent=31 // pred_check
          %p215 = pneg %p50
        $region34: #{unet_up_forward.3} parent=31 // pred_check_branch
          %217 = sbr.rel (%p215) target = $region36
        $region35: #{unet_up_forward.3} parent=31 // pred_region
          %p218 = scmp.lt.s32.totalorder %s23, 1
          %s219 = scalar_select %p218, %s23, 1
          %p220 = scmp.lt.s32.totalorder %s24, 0
          %s221 = scalar_select %p220, %s24, 0
          %s222 = smul.addr %s219, 16
          %s223 = sadd.s32 %s221, %s222
          %s224 = smul.addr %s223, 8
          %s225 = scalar_lea.vmem %s0, %s224
        $region36: #{unet_up_forward.3} parent=31 // pred_fallthru
          _
      $region32: #{unet_up_forward.3} parent=5 // pred_fallthru
        _
      %p226 = scmp.le.s32.totalorder 1, %s16
      %p227 = scmp.lt.s32.totalorder %s16, 3
      %p228 = pnand %p226, %p227
      %p229 = pneg %p228
      // Predicated region
      $region37: #{unet_up_forward.3} parent=5 // pred_check
        _
      $region38: #{unet_up_forward.3} parent=5 // pred_check_branch
        %231 = sbr.rel (%p228) target = $region40
      $region39: #{unet_up_forward.3} parent=5 // pred_region
        %s232 = ssub.s32 %s16, 1
        // Predicated region
        $region41: #{unet_up_forward.3} parent=39 // pred_check
          %p233 = pneg %p77
        $region42: #{unet_up_forward.3} parent=39 // pred_check_branch
          %235 = sbr.rel (%p233) target = $region44
        $region43: #{unet_up_forward.3} parent=39 // pred_region
          %236 = dma.done [#allocation4], 16
        $region44: #{unet_up_forward.3} parent=39 // pred_fallthru
          _
        // Predicated region
        $region45: #{unet_up_forward.3} parent=39 // pred_check
          %p237 = pneg %p98
        $region46: #{unet_up_forward.3} parent=39 // pred_check_branch
          %239 = sbr.rel (%p237) target = $region48
        $region47: #{unet_up_forward.3} parent=39 // pred_region
          %240 = dma.done [#allocation6], 16
        $region48: #{unet_up_forward.3} parent=39 // pred_fallthru
          _
        %241 = sfence
        %p242 = scmp.lt.s32.totalorder %s25, 1
        %s243 = scalar_select %p242, %s25, 1
        %p244 = scmp.lt.s32.totalorder %s26, 0
        %s245 = scalar_select %p244, %s26, 0
        %s246 = smul.addr %s243, 16
        %s247 = sadd.s32 %s245, %s246
        %s248 = smul.addr %s247, 8
        %s249 = scalar_lea.vmem %s0, %s248
        %p250 = pneg %p56
        %p251 = pneg %p53
        %p252 = pneg %p77
        %p253 = pneg %p74
        %p254 = pneg %p98
        %p255 = pneg %p95
        %p256 = pneg %p119
        %p257 = pneg %p116
        %p258 = pneg %p140
        %p259 = pneg %p137
        %p260 = pneg %p168
        %p261 = pneg %p165
        %s262 = sand.u32 %s155, 1
        %s263 = scalar_lea.sflag [#allocation3], %s262
        %s264 = sand.u32 %s155, 1
        %s265 = smul.addr %s264, 256
        %s266 = scalar_lea.vmem [#allocation7], %s265
        %p267 = scmp.lt.s32.totalorder %s25, 1
        %s268 = scalar_select %p267, %s25, 1
        %p269 = scmp.lt.s32.totalorder %s26, 0
        %s270 = scalar_select %p269, %s26, 0
        %s271 = smul.addr %s268, 16
        %s272 = sadd.s32 %s270, %s271
        %s273 = smul.addr %s272, 8
        %s274 = scalar_lea.vmem %s0, %s273
        %s275 = smul.u32 8, %s26
        %v276 = vld [vmem:[%s3] sm:$0xff]
        %v277 = vld [vmem:[%s3 + $0x8] sm:$0xff]
        %v278 = vld [vmem:[%s3 + $0x10] sm:$0xff]
        %v279 = vld [vmem:[%s3 + $0x18] sm:$0xff]
        %v280 = vld [vmem:[%s4] sm:$0xff]
        %v281 = vld [vmem:[%s4 + $0x8] sm:$0xff]
        %s282 = smul.u32 %s26, 8
        %s283 = sld [smem:[#allocation2 + %s282]]
        %s284 = sld [smem:[#allocation5 + %s282]]
        %v285 = vld [vmem:[%s274] sm:$0x1]
        %v286 = vld [vmem:[%s274 + $0x8] sm:$0x1]
        %v287 = vld [vmem:[%s274 + $0x10] sm:$0x1]
        %v288 = vld [vmem:[%s274 + $0x18] sm:$0x1]
        %v289 = vld [vmem:[%s274 + $0x20] sm:$0x1]
        %v290 = vld [vmem:[%s274 + $0x28] sm:$0x1]
        %v291 = vld [vmem:[%s274 + $0x30] sm:$0x1]
        %v292 = vld [vmem:[%s274 + $0x38] sm:$0x1]
        %v293 = vld [vmem:[%s274 + $0x40] sm:$0x1]
        %v294 = vld [vmem:[%s274 + $0x48] sm:$0x1]
        %v295 = vld [vmem:[%s274 + $0x50] sm:$0x1]
        %v296 = vld [vmem:[%s274 + $0x58] sm:$0x1]
        %v297 = vld [vmem:[%s274 + $0x60] sm:$0x1]
        %v298 = vld [vmem:[%s274 + $0x68] sm:$0x1]
        %v299 = vld [vmem:[%s274 + $0x70] sm:$0x1]
        %v300 = vld [vmem:[%s274 + $0x78] sm:$0x1]
        %v301 = vstv %s283
        %v302 = vmul.f32 %v285, %v301
        %v303 = vmul.f32 %v286, %v301
        %v304 = vmul.f32 %v287, %v301
        %v305 = vmul.f32 %v288, %v301
        %v306 = vmul.f32 %v289, %v301
        %v307 = vmul.f32 %v290, %v301
        %v308 = vmul.f32 %v291, %v301
        %v309 = vmul.f32 %v292, %v301
        %v310 = vmul.f32 %v293, %v301
        %v311 = vmul.f32 %v294, %v301
        %v312 = vmul.f32 %v295, %v301
        %v313 = vmul.f32 %v296, %v301
        %v314 = vmul.f32 %v297, %v301
        %v315 = vmul.f32 %v298, %v301
        %v316 = vmul.f32 %v299, %v301
        %v317 = vmul.f32 %v300, %v301
        %v318 = vstv %s284
        %v319 = vadd.f32 %v302, %v318
        %v320 = vadd.f32 %v303, %v318
        %v321 = vadd.f32 %v304, %v318
        %v322 = vadd.f32 %v305, %v318
        %v323 = vadd.f32 %v306, %v318
        %v324 = vadd.f32 %v307, %v318
        %v325 = vadd.f32 %v308, %v318
        %v326 = vadd.f32 %v309, %v318
        %v327 = vadd.f32 %v310, %v318
        %v328 = vadd.f32 %v311, %v318
        %v329 = vadd.f32 %v312, %v318
        %v330 = vadd.f32 %v313, %v318
        %v331 = vadd.f32 %v314, %v318
        %v332 = vadd.f32 %v315, %v318
        %v333 = vadd.f32 %v316, %v318
        %v334 = vadd.f32 %v317, %v318
        %v335 = vmax.f32 %v319, 0.0
        %v336 = vmax.f32 %v320, 0.0
        %v337 = vmax.f32 %v321, 0.0
        %v338 = vmax.f32 %v322, 0.0
        %v339 = vmax.f32 %v323, 0.0
        %v340 = vmax.f32 %v324, 0.0
        %v341 = vmax.f32 %v325, 0.0
        %v342 = vmax.f32 %v326, 0.0
        %v343 = vmax.f32 %v327, 0.0
        %v344 = vmax.f32 %v328, 0.0
        %v345 = vmax.f32 %v329, 0.0
        %v346 = vmax.f32 %v330, 0.0
        %v347 = vmax.f32 %v331, 0.0
        %v348 = vmax.f32 %v332, 0.0
        %v349 = vmax.f32 %v333, 0.0
        %v350 = vmax.f32 %v334, 0.0
        %v367 = vrot.slane %v336, 7
        %vm368 = vcmask 1041409
        %v369 = vsel %vm368, %v367, %v335
        %v370 = vrot.slane %v337, 6
        %vm371 = vcmask 1042434
        %v372 = vsel %vm371, %v370, %v369
        %v373 = vrot.slane %v338, 5
        %vm374 = vcmask 1043459
        %v375 = vsel %vm374, %v373, %v372
        %v376 = vrot.slane %v339, 4
        %vm377 = vcmask 1044484
        %v378 = vsel %vm377, %v376, %v375
        %v379 = vrot.slane %v340, 3
        %vm380 = vcmask 1045509
        %v381 = vsel %vm380, %v379, %v378
        %v382 = vrot.slane %v341, 2
        %vm383 = vcmask 1046534
        %v384 = vsel %vm383, %v382, %v381
        %v385 = vrot.slane %v342, 1
        %vm386 = vcmask 1047559
        %v387 = vsel %vm386, %v385, %v384
        %v388 = vrot.slane %v344, 7
        %v389 = vsel %vm368, %v388, %v343
        %v390 = vrot.slane %v345, 6
        %v391 = vsel %vm371, %v390, %v389
        %v392 = vrot.slane %v346, 5
        %v393 = vsel %vm374, %v392, %v391
        %v394 = vrot.slane %v347, 4
        %v395 = vsel %vm377, %v394, %v393
        %v396 = vrot.slane %v348, 3
        %v397 = vsel %vm380, %v396, %v395
        %v398 = vrot.slane %v349, 2
        %v399 = vsel %vm383, %v398, %v397
        %v400 = vrot.slane %v350, 1
        %v401 = vsel %vm386, %v400, %v399
        %vm404 = vcmask 130048
        %v406 = vsel %vm404, %v276, 0
        %v409 = vsel %vm404, %v277, 0
        %v412 = vsel %vm404, %v278, 0
        %v415 = vsel %vm404, %v279, 0
        %417 = vmatprep.subr.mxu0 0.0
        %418 = vmatpush1.msra.mxu0 0.0
        %419 = vmatprep.subr.mxu0 0.0
        %420 = vmatpush1.msra.mxu0 0.0
        %421 = vmatprep.subr.mxu0 0.0
        %422 = vmatpush1.msra.mxu0 0.0
        %423 = vmatprep.subr.mxu0 0.0
        %424 = vmatpush1.msra.mxu0 0.0
        %425 = vmatprep.subr.mxu0 0.0
        %426 = vmatpush1.msra.mxu0 0.0
        %427 = vmatprep.subr.mxu0 0.0
        %428 = vmatpush1.msra.mxu0 0.0
        %429 = vmatprep.subr.mxu0 0.0
        %430 = vmatpush1.msra.mxu0 0.0
        %431 = vmatprep.subr.mxu0 0.0
        %432 = vmatpush1.msra.mxu0 0.0
        %433 = vmatprep.subr.mxu0 0.0
        %434 = vmatpush1.msra.mxu0 0.0
        %435 = vmatprep.subr.mxu0 0.0
        %436 = vmatpush1.msra.mxu0 0.0
        %437 = vmatprep.subr.mxu0 0.0
        %438 = vmatpush1.msra.mxu0 0.0
        %439 = vmatprep.subr.mxu0 0.0
        %440 = vmatpush1.msra.mxu0 0.0
        %441 = vmatprep.subr.mxu0 0.0
        %442 = vmatpush1.msra.mxu0 0.0
        %443 = vmatprep.subr.mxu0 0.0
        %444 = vmatpush1.msra.mxu0 0.0
        %445 = vmatprep.subr.mxu0 0.0
        %446 = vmatpush1.msra.mxu0 %v401
        %447 = vmatprep.subr.mxu0 0.0
        %448 = vmatpush1.msra.mxu0 %v387
        %449 = vmatprep.subr.mxu0 0.0
        %450 = vmatpush2.msra.mxu0 0.0
        %451 = vmatprep.subr.mxu0 0.0
        %452 = vmatpush2.msra.mxu0 0.0
        %453 = vmatprep.subr.mxu0 0.0
        %454 = vmatpush2.msra.mxu0 0.0
        %455 = vmatprep.subr.mxu0 0.0
        %456 = vmatpush2.msra.mxu0 0.0
        %457 = vmatprep.subr.mxu0 0.0
        %458 = vmatpush2.msra.mxu0 0.0
        %459 = vmatprep.subr.mxu0 0.0
        %460 = vmatpush2.msra.mxu0 0.0
        %461 = vmatprep.subr.mxu0 0.0
        %462 = vmatpush2.msra.mxu0 0.0
        %463 = vmatprep.subr.mxu0 0.0
        %464 = vmatpush2.msra.mxu0 0.0
        %465 = vmatprep.subr.mxu0 0.0
        %466 = vmatpush2.msra.mxu0 0.0
        %467 = vmatprep.subr.mxu0 0.0
        %468 = vmatpush2.msra.mxu0 0.0
        %469 = vmatprep.subr.mxu0 0.0
        %470 = vmatpush2.msra.mxu0 0.0
        %471 = vmatprep.subr.mxu0 0.0
        %472 = vmatpush2.msra.mxu0 0.0
        %473 = vmatprep.subr.mxu0 0.0
        %474 = vmatpush2.msra.mxu0 0.0
        %475 = vmatprep.subr.mxu0 0.0
        %476 = vmatpush2.msra.mxu0 0.0
        %477 = vmatprep.subr.mxu0 0.0
        %478 = vmatpush2.msra.mxu0 0.0
        %479 = vmatprep.subr.mxu0 0.0
        %480 = vmatpush2.msra.mxu0 0.0
        %481 = vmatprep.mubr.f32.mxu0 0.0
        %482 = vmatmul.mubr.f32.gmra.mxu0 %v406
        %v483 = vpop.f32.mrf.mxu0
        %v484 = vadd.f32 0.0, %v483
        %v485 = vpop.f32.mrf.mxu0
        %486 = vmatprep.mubr.f32.mxu0 0.0
        %487 = vmatmul.mubr.f32.gmra.mxu0 %v409
        %v488 = vpop.f32.mrf.mxu0
        %v489 = vadd.f32 0.0, %v488
        %v490 = vpop.f32.mrf.mxu0
        %491 = vmatprep.mubr.f32.mxu0 0.0
        %492 = vmatmul.mubr.f32.gmra.mxu0 %v412
        %v493 = vpop.f32.mrf.mxu0
        %v494 = vadd.f32 0.0, %v493
        %v495 = vpop.f32.mrf.mxu0
        %496 = vmatprep.mubr.f32.mxu0 0.0
        %497 = vmatmul.mubr.f32.gmra.mxu0 %v415
        %v498 = vpop.f32.mrf.mxu0
        %v499 = vadd.f32 0.0, %v498
        %v500 = vpop.f32.mrf.mxu0
        %501 = vdwg.mxu0
        %v503 = vsel %vm404, %v484, 0
        %v506 = vsel %vm404, %v489, 0
        %v509 = vsel %vm404, %v494, 0
        %v512 = vsel %vm404, %v499, 0
        %514 = vmatprep.subr.mxu0 0.0
        %515 = vmatpush1.msra.mxu0 0.0
        %516 = vmatprep.subr.mxu0 0.0
        %517 = vmatpush1.msra.mxu0 0.0
        %518 = vmatprep.subr.mxu0 0.0
        %519 = vmatpush1.msra.mxu0 0.0
        %520 = vmatprep.subr.mxu0 0.0
        %521 = vmatpush1.msra.mxu0 0.0
        %522 = vmatprep.subr.mxu0 0.0
        %523 = vmatpush1.msra.mxu0 0.0
        %524 = vmatprep.subr.mxu0 0.0
        %525 = vmatpush1.msra.mxu0 0.0
        %526 = vmatprep.subr.mxu0 0.0
        %527 = vmatpush1.msra.mxu0 0.0
        %528 = vmatprep.subr.mxu0 0.0
        %529 = vmatpush1.msra.mxu0 0.0
        %530 = vmatprep.subr.mxu0 0.0
        %531 = vmatpush1.msra.mxu0 0.0
        %532 = vmatprep.subr.mxu0 0.0
        %533 = vmatpush1.msra.mxu0 0.0
        %534 = vmatprep.subr.mxu0 0.0
        %535 = vmatpush1.msra.mxu0 0.0
        %536 = vmatprep.subr.mxu0 0.0
        %537 = vmatpush1.msra.mxu0 0.0
        %538 = vmatprep.subr.mxu0 0.0
        %539 = vmatpush1.msra.mxu0 0.0
        %540 = vmatprep.subr.mxu0 0.0
        %541 = vmatpush1.msra.mxu0 0.0
        %542 = vmatprep.subr.mxu0 0.0
        %543 = vmatpush1.msra.mxu0 %v281
        %544 = vmatprep.subr.mxu0 0.0
        %545 = vmatpush1.msra.mxu0 %v280
        %546 = vmatprep.subr.mxu0 0.0
        %547 = vmatpush2.msra.mxu0 0.0
        %548 = vmatprep.subr.mxu0 0.0
        %549 = vmatpush2.msra.mxu0 0.0
        %550 = vmatprep.subr.mxu0 0.0
        %551 = vmatpush2.msra.mxu0 0.0
        %552 = vmatprep.subr.mxu0 0.0
        %553 = vmatpush2.msra.mxu0 0.0
        %554 = vmatprep.subr.mxu0 0.0
        %555 = vmatpush2.msra.mxu0 0.0
        %556 = vmatprep.subr.mxu0 0.0
        %557 = vmatpush2.msra.mxu0 0.0
        %558 = vmatprep.subr.mxu0 0.0
        %559 = vmatpush2.msra.mxu0 0.0
        %560 = vmatprep.subr.mxu0 0.0
        %561 = vmatpush2.msra.mxu0 0.0
        %562 = vmatprep.subr.mxu0 0.0
        %563 = vmatpush2.msra.mxu0 0.0
        %564 = vmatprep.subr.mxu0 0.0
        %565 = vmatpush2.msra.mxu0 0.0
        %566 = vmatprep.subr.mxu0 0.0
        %567 = vmatpush2.msra.mxu0 0.0
        %568 = vmatprep.subr.mxu0 0.0
        %569 = vmatpush2.msra.mxu0 0.0
        %570 = vmatprep.subr.mxu0 0.0
        %571 = vmatpush2.msra.mxu0 0.0
        %572 = vmatprep.subr.mxu0 0.0
        %573 = vmatpush2.msra.mxu0 0.0
        %574 = vmatprep.subr.mxu0 0.0
        %575 = vmatpush2.msra.mxu0 0.0
        %576 = vmatprep.subr.mxu0 0.0
        %577 = vmatpush2.msra.mxu0 0.0
        %578 = vmatprep.mubr.f32.mxu0 0.0
        %579 = vmatmul.mubr.f32.gmra.mxu0 %v503
        %v580 = vpop.f32.mrf.mxu0
        %v581 = vadd.f32 0.0, %v580
        %v582 = vpop.f32.mrf.mxu0
        %583 = vmatprep.mubr.f32.mxu0 0.0
        %584 = vmatmul.mubr.f32.gmra.mxu0 %v506
        %v585 = vpop.f32.mrf.mxu0
        %v586 = vadd.f32 0.0, %v585
        %v587 = vpop.f32.mrf.mxu0
        %588 = vmatprep.mubr.f32.mxu0 0.0
        %589 = vmatmul.mubr.f32.gmra.mxu0 %v509
        %v590 = vpop.f32.mrf.mxu0
        %v591 = vadd.f32 0.0, %v590
        %v592 = vpop.f32.mrf.mxu0
        %593 = vmatprep.mubr.f32.mxu0 0.0
        %594 = vmatmul.mubr.f32.gmra.mxu0 %v512
        %v595 = vpop.f32.mrf.mxu0
        %v596 = vadd.f32 0.0, %v595
        %v597 = vpop.f32.mrf.mxu0
        %598 = vdwg.mxu0
        %vm599 = vcmask 261120
        %600 = vst.msk [vmem:[%s266] sm:$0xff] %vm599, %v581
        %601 = vst.msk [vmem:[%s266 + $0x8] sm:$0xff] %vm599, %v586
        %602 = vst.msk [vmem:[%s266 + $0x10] sm:$0xff] %vm599, %v591
        %603 = vst.msk [vmem:[%s266 + $0x18] sm:$0xff] %vm599, %v596
        %s604 = sadd.s32 %s282, 1
        %s605 = sld [smem:[#allocation2 + %s604]]
        %s606 = sld [smem:[#allocation5 + %s604]]
        %v607 = vld [vmem:[%s274 + $0x1] sm:$0x1]
        %v608 = vld [vmem:[%s274 + $0x9] sm:$0x1]
        %v609 = vld [vmem:[%s274 + $0x11] sm:$0x1]
        %v610 = vld [vmem:[%s274 + $0x19] sm:$0x1]
        %v611 = vld [vmem:[%s274 + $0x21] sm:$0x1]
        %v612 = vld [vmem:[%s274 + $0x29] sm:$0x1]
        %v613 = vld [vmem:[%s274 + $0x31] sm:$0x1]
        %v614 = vld [vmem:[%s274 + $0x39] sm:$0x1]
        %v615 = vld [vmem:[%s274 + $0x41] sm:$0x1]
        %v616 = vld [vmem:[%s274 + $0x49] sm:$0x1]
        %v617 = vld [vmem:[%s274 + $0x51] sm:$0x1]
        %v618 = vld [vmem:[%s274 + $0x59] sm:$0x1]
        %v619 = vld [vmem:[%s274 + $0x61] sm:$0x1]
        %v620 = vld [vmem:[%s274 + $0x69] sm:$0x1]
        %v621 = vld [vmem:[%s274 + $0x71] sm:$0x1]
        %v622 = vld [vmem:[%s274 + $0x79] sm:$0x1]
        %v623 = vstv %s605
        %v624 = vmul.f32 %v607, %v623
        %v625 = vmul.f32 %v608, %v623
        %v626 = vmul.f32 %v609, %v623
        %v627 = vmul.f32 %v610, %v623
        %v628 = vmul.f32 %v611, %v623
        %v629 = vmul.f32 %v612, %v623
        %v630 = vmul.f32 %v613, %v623
        %v631 = vmul.f32 %v614, %v623
        %v632 = vmul.f32 %v615, %v623
        %v633 = vmul.f32 %v616, %v623
        %v634 = vmul.f32 %v617, %v623
        %v635 = vmul.f32 %v618, %v623
        %v636 = vmul.f32 %v619, %v623
        %v637 = vmul.f32 %v620, %v623
        %v638 = vmul.f32 %v621, %v623
        %v639 = vmul.f32 %v622, %v623
        %v640 = vstv %s606
        %v641 = vadd.f32 %v624, %v640
        %v642 = vadd.f32 %v625, %v640
        %v643 = vadd.f32 %v626, %v640
        %v644 = vadd.f32 %v627, %v640
        %v645 = vadd.f32 %v628, %v640
        %v646 = vadd.f32 %v629, %v640
        %v647 = vadd.f32 %v630, %v640
        %v648 = vadd.f32 %v631, %v640
        %v649 = vadd.f32 %v632, %v640
        %v650 = vadd.f32 %v633, %v640
        %v651 = vadd.f32 %v634, %v640
        %v652 = vadd.f32 %v635, %v640
        %v653 = vadd.f32 %v636, %v640
        %v654 = vadd.f32 %v637, %v640
        %v655 = vadd.f32 %v638, %v640
        %v656 = vadd.f32 %v639, %v640
        %v657 = vmax.f32 %v641, 0.0
        %v658 = vmax.f32 %v642, 0.0
        %v659 = vmax.f32 %v643, 0.0
        %v660 = vmax.f32 %v644, 0.0
        %v661 = vmax.f32 %v645, 0.0
        %v662 = vmax.f32 %v646, 0.0
        %v663 = vmax.f32 %v647, 0.0
        %v664 = vmax.f32 %v648, 0.0
        %v665 = vmax.f32 %v649, 0.0
        %v666 = vmax.f32 %v650, 0.0
        %v667 = vmax.f32 %v651, 0.0
        %v668 = vmax.f32 %v652, 0.0
        %v669 = vmax.f32 %v653, 0.0
        %v670 = vmax.f32 %v654, 0.0
        %v671 = vmax.f32 %v655, 0.0
        %v672 = vmax.f32 %v656, 0.0
        %v689 = vrot.slane %v658, 7
        %v690 = vsel %vm368, %v689, %v657
        %v691 = vrot.slane %v659, 6
        %v692 = vsel %vm371, %v691, %v690
        %v693 = vrot.slane %v660, 5
        %v694 = vsel %vm374, %v693, %v692
        %v695 = vrot.slane %v661, 4
        %v696 = vsel %vm377, %v695, %v694
        %v697 = vrot.slane %v662, 3
        %v698 = vsel %vm380, %v697, %v696
        %v699 = vrot.slane %v663, 2
        %v700 = vsel %vm383, %v699, %v698
        %v701 = vrot.slane %v664, 1
        %v702 = vsel %vm386, %v701, %v700
        %v703 = vrot.slane %v666, 7
        %v704 = vsel %vm368, %v703, %v665
        %v705 = vrot.slane %v667, 6
        %v706 = vsel %vm371, %v705, %v704
        %v707 = vrot.slane %v668, 5
        %v708 = vsel %vm374, %v707, %v706
        %v709 = vrot.slane %v669, 4
        %v710 = vsel %vm377, %v709, %v708
        %v711 = vrot.slane %v670, 3
        %v712 = vsel %vm380, %v711, %v710
        %v713 = vrot.slane %v671, 2
        %v714 = vsel %vm383, %v713, %v712
        %v715 = vrot.slane %v672, 1
        %v716 = vsel %vm386, %v715, %v714
        %719 = vmatprep.subr.mxu0 0.0
        %720 = vmatpush1.msra.mxu0 0.0
        %721 = vmatprep.subr.mxu0 0.0
        %722 = vmatpush1.msra.mxu0 0.0
        %723 = vmatprep.subr.mxu0 0.0
        %724 = vmatpush1.msra.mxu0 0.0
        %725 = vmatprep.subr.mxu0 0.0
        %726 = vmatpush1.msra.mxu0 0.0
        %727 = vmatprep.subr.mxu0 0.0
        %728 = vmatpush1.msra.mxu0 0.0
        %729 = vmatprep.subr.mxu0 0.0
        %730 = vmatpush1.msra.mxu0 0.0
        %731 = vmatprep.subr.mxu0 0.0
        %732 = vmatpush1.msra.mxu0 0.0
        %733 = vmatprep.subr.mxu0 0.0
        %734 = vmatpush1.msra.mxu0 0.0
        %735 = vmatprep.subr.mxu0 0.0
        %736 = vmatpush1.msra.mxu0 0.0
        %737 = vmatprep.subr.mxu0 0.0
        %738 = vmatpush1.msra.mxu0 0.0
        %739 = vmatprep.subr.mxu0 0.0
        %740 = vmatpush1.msra.mxu0 0.0
        %741 = vmatprep.subr.mxu0 0.0
        %742 = vmatpush1.msra.mxu0 0.0
        %743 = vmatprep.subr.mxu0 0.0
        %744 = vmatpush1.msra.mxu0 0.0
        %745 = vmatprep.subr.mxu0 0.0
        %746 = vmatpush1.msra.mxu0 0.0
        %747 = vmatprep.subr.mxu0 0.0
        %748 = vmatpush1.msra.mxu0 %v716
        %749 = vmatprep.subr.mxu0 0.0
        %750 = vmatpush1.msra.mxu0 %v702
        %751 = vmatprep.subr.mxu0 0.0
        %752 = vmatpush2.msra.mxu0 0.0
        %753 = vmatprep.subr.mxu0 0.0
        %754 = vmatpush2.msra.mxu0 0.0
        %755 = vmatprep.subr.mxu0 0.0
        %756 = vmatpush2.msra.mxu0 0.0
        %757 = vmatprep.subr.mxu0 0.0
        %758 = vmatpush2.msra.mxu0 0.0
        %759 = vmatprep.subr.mxu0 0.0
        %760 = vmatpush2.msra.mxu0 0.0
        %761 = vmatprep.subr.mxu0 0.0
        %762 = vmatpush2.msra.mxu0 0.0
        %763 = vmatprep.subr.mxu0 0.0
        %764 = vmatpush2.msra.mxu0 0.0
        %765 = vmatprep.subr.mxu0 0.0
        %766 = vmatpush2.msra.mxu0 0.0
        %767 = vmatprep.subr.mxu0 0.0
        %768 = vmatpush2.msra.mxu0 0.0
        %769 = vmatprep.subr.mxu0 0.0
        %770 = vmatpush2.msra.mxu0 0.0
        %771 = vmatprep.subr.mxu0 0.0
        %772 = vmatpush2.msra.mxu0 0.0
        %773 = vmatprep.subr.mxu0 0.0
        %774 = vmatpush2.msra.mxu0 0.0
        %775 = vmatprep.subr.mxu0 0.0
        %776 = vmatpush2.msra.mxu0 0.0
        %777 = vmatprep.subr.mxu0 0.0
        %778 = vmatpush2.msra.mxu0 0.0
        %779 = vmatprep.subr.mxu0 0.0
        %780 = vmatpush2.msra.mxu0 0.0
        %781 = vmatprep.subr.mxu0 0.0
        %782 = vmatpush2.msra.mxu0 0.0
        %783 = vmatprep.mubr.f32.mxu0 0.0
        %784 = vmatmul.mubr.f32.gmra.mxu0 %v406
        %v785 = vpop.f32.mrf.mxu0
        %v786 = vadd.f32 0.0, %v785
        %v787 = vpop.f32.mrf.mxu0
        %788 = vmatprep.mubr.f32.mxu0 0.0
        %789 = vmatmul.mubr.f32.gmra.mxu0 %v409
        %v790 = vpop.f32.mrf.mxu0
        %v791 = vadd.f32 0.0, %v790
        %v792 = vpop.f32.mrf.mxu0
        %793 = vmatprep.mubr.f32.mxu0 0.0
        %794 = vmatmul.mubr.f32.gmra.mxu0 %v412
        %v795 = vpop.f32.mrf.mxu0
        %v796 = vadd.f32 0.0, %v795
        %v797 = vpop.f32.mrf.mxu0
        %798 = vmatprep.mubr.f32.mxu0 0.0
        %799 = vmatmul.mubr.f32.gmra.mxu0 %v415
        %v800 = vpop.f32.mrf.mxu0
        %v801 = vadd.f32 0.0, %v800
        %v802 = vpop.f32.mrf.mxu0
        %803 = vdwg.mxu0
        %v805 = vsel %vm404, %v786, 0
        %v808 = vsel %vm404, %v791, 0
        %v811 = vsel %vm404, %v796, 0
        %v814 = vsel %vm404, %v801, 0
        %816 = vmatprep.subr.mxu0 0.0
        %817 = vmatpush1.msra.mxu0 0.0
        %818 = vmatprep.subr.mxu0 0.0
        %819 = vmatpush1.msra.mxu0 0.0
        %820 = vmatprep.subr.mxu0 0.0
        %821 = vmatpush1.msra.mxu0 0.0
        %822 = vmatprep.subr.mxu0 0.0
        %823 = vmatpush1.msra.mxu0 0.0
        %824 = vmatprep.subr.mxu0 0.0
        %825 = vmatpush1.msra.mxu0 0.0
        %826 = vmatprep.subr.mxu0 0.0
        %827 = vmatpush1.msra.mxu0 0.0
        %828 = vmatprep.subr.mxu0 0.0
        %829 = vmatpush1.msra.mxu0 0.0
        %830 = vmatprep.subr.mxu0 0.0
        %831 = vmatpush1.msra.mxu0 0.0
        %832 = vmatprep.subr.mxu0 0.0
        %833 = vmatpush1.msra.mxu0 0.0
        %834 = vmatprep.subr.mxu0 0.0
        %835 = vmatpush1.msra.mxu0 0.0
        %836 = vmatprep.subr.mxu0 0.0
        %837 = vmatpush1.msra.mxu0 0.0
        %838 = vmatprep.subr.mxu0 0.0
        %839 = vmatpush1.msra.mxu0 0.0
        %840 = vmatprep.subr.mxu0 0.0
        %841 = vmatpush1.msra.mxu0 0.0
        %842 = vmatprep.subr.mxu0 0.0
        %843 = vmatpush1.msra.mxu0 0.0
        %844 = vmatprep.subr.mxu0 0.0
        %845 = vmatpush1.msra.mxu0 %v281
        %846 = vmatprep.subr.mxu0 0.0
        %847 = vmatpush1.msra.mxu0 %v280
        %848 = vmatprep.subr.mxu0 0.0
        %849 = vmatpush2.msra.mxu0 0.0
        %850 = vmatprep.subr.mxu0 0.0
        %851 = vmatpush2.msra.mxu0 0.0
        %852 = vmatprep.subr.mxu0 0.0
        %853 = vmatpush2.msra.mxu0 0.0
        %854 = vmatprep.subr.mxu0 0.0
        %855 = vmatpush2.msra.mxu0 0.0
        %856 = vmatprep.subr.mxu0 0.0
        %857 = vmatpush2.msra.mxu0 0.0
        %858 = vmatprep.subr.mxu0 0.0
        %859 = vmatpush2.msra.mxu0 0.0
        %860 = vmatprep.subr.mxu0 0.0
        %861 = vmatpush2.msra.mxu0 0.0
        %862 = vmatprep.subr.mxu0 0.0
        %863 = vmatpush2.msra.mxu0 0.0
        %864 = vmatprep.subr.mxu0 0.0
        %865 = vmatpush2.msra.mxu0 0.0
        %866 = vmatprep.subr.mxu0 0.0
        %867 = vmatpush2.msra.mxu0 0.0
        %868 = vmatprep.subr.mxu0 0.0
        %869 = vmatpush2.msra.mxu0 0.0
        %870 = vmatprep.subr.mxu0 0.0
        %871 = vmatpush2.msra.mxu0 0.0
        %872 = vmatprep.subr.mxu0 0.0
        %873 = vmatpush2.msra.mxu0 0.0
        %874 = vmatprep.subr.mxu0 0.0
        %875 = vmatpush2.msra.mxu0 0.0
        %876 = vmatprep.subr.mxu0 0.0
        %877 = vmatpush2.msra.mxu0 0.0
        %878 = vmatprep.subr.mxu0 0.0
        %879 = vmatpush2.msra.mxu0 0.0
        %880 = vmatprep.mubr.f32.mxu0 0.0
        %881 = vmatmul.mubr.f32.gmra.mxu0 %v805
        %v882 = vpop.f32.mrf.mxu0
        %v883 = vadd.f32 0.0, %v882
        %v884 = vpop.f32.mrf.mxu0
        %885 = vmatprep.mubr.f32.mxu0 0.0
        %886 = vmatmul.mubr.f32.gmra.mxu0 %v808
        %v887 = vpop.f32.mrf.mxu0
        %v888 = vadd.f32 0.0, %v887
        %v889 = vpop.f32.mrf.mxu0
        %890 = vmatprep.mubr.f32.mxu0 0.0
        %891 = vmatmul.mubr.f32.gmra.mxu0 %v811
        %v892 = vpop.f32.mrf.mxu0
        %v893 = vadd.f32 0.0, %v892
        %v894 = vpop.f32.mrf.mxu0
        %895 = vmatprep.mubr.f32.mxu0 0.0
        %896 = vmatmul.mubr.f32.gmra.mxu0 %v814
        %v897 = vpop.f32.mrf.mxu0
        %v898 = vadd.f32 0.0, %v897
        %v899 = vpop.f32.mrf.mxu0
        %900 = vdwg.mxu0
        %s901 = scalar_lea.vmem %s266, 32 [#allocation7]
        %902 = vst.msk [vmem:[%s901] sm:$0xff] %vm599, %v883
        %903 = vst.msk [vmem:[%s901 + $0x8] sm:$0xff] %vm599, %v888
        %904 = vst.msk [vmem:[%s901 + $0x10] sm:$0xff] %vm599, %v893
        %905 = vst.msk [vmem:[%s901 + $0x18] sm:$0xff] %vm599, %v898
        %s906 = sadd.s32 %s282, 2
        %s907 = sld [smem:[#allocation2 + %s906]]
        %s908 = sld [smem:[#allocation5 + %s906]]
        %v909 = vld [vmem:[%s274 + $0x2] sm:$0x1]
        %v910 = vld [vmem:[%s274 + $0xa] sm:$0x1]
        %v911 = vld [vmem:[%s274 + $0x12] sm:$0x1]
        %v912 = vld [vmem:[%s274 + $0x1a] sm:$0x1]
        %v913 = vld [vmem:[%s274 + $0x22] sm:$0x1]
        %v914 = vld [vmem:[%s274 + $0x2a] sm:$0x1]
        %v915 = vld [vmem:[%s274 + $0x32] sm:$0x1]
        %v916 = vld [vmem:[%s274 + $0x3a] sm:$0x1]
        %v917 = vld [vmem:[%s274 + $0x42] sm:$0x1]
        %v918 = vld [vmem:[%s274 + $0x4a] sm:$0x1]
        %v919 = vld [vmem:[%s274 + $0x52] sm:$0x1]
        %v920 = vld [vmem:[%s274 + $0x5a] sm:$0x1]
        %v921 = vld [vmem:[%s274 + $0x62] sm:$0x1]
        %v922 = vld [vmem:[%s274 + $0x6a] sm:$0x1]
        %v923 = vld [vmem:[%s274 + $0x72] sm:$0x1]
        %v924 = vld [vmem:[%s274 + $0x7a] sm:$0x1]
        %v925 = vstv %s907
        %v926 = vmul.f32 %v909, %v925
        %v927 = vmul.f32 %v910, %v925
        %v928 = vmul.f32 %v911, %v925
        %v929 = vmul.f32 %v912, %v925
        %v930 = vmul.f32 %v913, %v925
        %v931 = vmul.f32 %v914, %v925
        %v932 = vmul.f32 %v915, %v925
        %v933 = vmul.f32 %v916, %v925
        %v934 = vmul.f32 %v917, %v925
        %v935 = vmul.f32 %v918, %v925
        %v936 = vmul.f32 %v919, %v925
        %v937 = vmul.f32 %v920, %v925
        %v938 = vmul.f32 %v921, %v925
        %v939 = vmul.f32 %v922, %v925
        %v940 = vmul.f32 %v923, %v925
        %v941 = vmul.f32 %v924, %v925
        %v942 = vstv %s908
        %v943 = vadd.f32 %v926, %v942
        %v944 = vadd.f32 %v927, %v942
        %v945 = vadd.f32 %v928, %v942
        %v946 = vadd.f32 %v929, %v942
        %v947 = vadd.f32 %v930, %v942
        %v948 = vadd.f32 %v931, %v942
        %v949 = vadd.f32 %v932, %v942
        %v950 = vadd.f32 %v933, %v942
        %v951 = vadd.f32 %v934, %v942
        %v952 = vadd.f32 %v935, %v942
        %v953 = vadd.f32 %v936, %v942
        %v954 = vadd.f32 %v937, %v942
        %v955 = vadd.f32 %v938, %v942
        %v956 = vadd.f32 %v939, %v942
        %v957 = vadd.f32 %v940, %v942
        %v958 = vadd.f32 %v941, %v942
        %v959 = vmax.f32 %v943, 0.0
        %v960 = vmax.f32 %v944, 0.0
        %v961 = vmax.f32 %v945, 0.0
        %v962 = vmax.f32 %v946, 0.0
        %v963 = vmax.f32 %v947, 0.0
        %v964 = vmax.f32 %v948, 0.0
        %v965 = vmax.f32 %v949, 0.0
        %v966 = vmax.f32 %v950, 0.0
        %v967 = vmax.f32 %v951, 0.0
        %v968 = vmax.f32 %v952, 0.0
        %v969 = vmax.f32 %v953, 0.0
        %v970 = vmax.f32 %v954, 0.0
        %v971 = vmax.f32 %v955, 0.0
        %v972 = vmax.f32 %v956, 0.0
        %v973 = vmax.f32 %v957, 0.0
        %v974 = vmax.f32 %v958, 0.0
        %v991 = vrot.slane %v960, 7
        %v992 = vsel %vm368, %v991, %v959
        %v993 = vrot.slane %v961, 6
        %v994 = vsel %vm371, %v993, %v992
        %v995 = vrot.slane %v962, 5
        %v996 = vsel %vm374, %v995, %v994
        %v997 = vrot.slane %v963, 4
        %v998 = vsel %vm377, %v997, %v996
        %v999 = vrot.slane %v964, 3
        %v1000 = vsel %vm380, %v999, %v998
        %v1001 = vrot.slane %v965, 2
        %v1002 = vsel %vm383, %v1001, %v1000
        %v1003 = vrot.slane %v966, 1
        %v1004 = vsel %vm386, %v1003, %v1002
        %v1005 = vrot.slane %v968, 7
        %v1006 = vsel %vm368, %v1005, %v967
        %v1007 = vrot.slane %v969, 6
        %v1008 = vsel %vm371, %v1007, %v1006
        %v1009 = vrot.slane %v970, 5
        %v1010 = vsel %vm374, %v1009, %v1008
        %v1011 = vrot.slane %v971, 4
        %v1012 = vsel %vm377, %v1011, %v1010
        %v1013 = vrot.slane %v972, 3
        %v1014 = vsel %vm380, %v1013, %v1012
        %v1015 = vrot.slane %v973, 2
        %v1016 = vsel %vm383, %v1015, %v1014
        %v1017 = vrot.slane %v974, 1
        %v1018 = vsel %vm386, %v1017, %v1016
        %1021 = vmatprep.subr.mxu0 0.0
        %1022 = vmatpush1.msra.mxu0 0.0
        %1023 = vmatprep.subr.mxu0 0.0
        %1024 = vmatpush1.msra.mxu0 0.0
        %1025 = vmatprep.subr.mxu0 0.0
        %1026 = vmatpush1.msra.mxu0 0.0
        %1027 = vmatprep.subr.mxu0 0.0
        %1028 = vmatpush1.msra.mxu0 0.0
        %1029 = vmatprep.subr.mxu0 0.0
        %1030 = vmatpush1.msra.mxu0 0.0
        %1031 = vmatprep.subr.mxu0 0.0
        %1032 = vmatpush1.msra.mxu0 0.0
        %1033 = vmatprep.subr.mxu0 0.0
        %1034 = vmatpush1.msra.mxu0 0.0
        %1035 = vmatprep.subr.mxu0 0.0
        %1036 = vmatpush1.msra.mxu0 0.0
        %1037 = vmatprep.subr.mxu0 0.0
        %1038 = vmatpush1.msra.mxu0 0.0
        %1039 = vmatprep.subr.mxu0 0.0
        %1040 = vmatpush1.msra.mxu0 0.0
        %1041 = vmatprep.subr.mxu0 0.0
        %1042 = vmatpush1.msra.mxu0 0.0
        %1043 = vmatprep.subr.mxu0 0.0
        %1044 = vmatpush1.msra.mxu0 0.0
        %1045 = vmatprep.subr.mxu0 0.0
        %1046 = vmatpush1.msra.mxu0 0.0
        %1047 = vmatprep.subr.mxu0 0.0
        %1048 = vmatpush1.msra.mxu0 0.0
        %1049 = vmatprep.subr.mxu0 0.0
        %1050 = vmatpush1.msra.mxu0 %v1018
        %1051 = vmatprep.subr.mxu0 0.0
        %1052 = vmatpush1.msra.mxu0 %v1004
        %1053 = vmatprep.subr.mxu0 0.0
        %1054 = vmatpush2.msra.mxu0 0.0
        %1055 = vmatprep.subr.mxu0 0.0
        %1056 = vmatpush2.msra.mxu0 0.0
        %1057 = vmatprep.subr.mxu0 0.0
        %1058 = vmatpush2.msra.mxu0 0.0
        %1059 = vmatprep.subr.mxu0 0.0
        %1060 = vmatpush2.msra.mxu0 0.0
        %1061 = vmatprep.subr.mxu0 0.0
        %1062 = vmatpush2.msra.mxu0 0.0
        %1063 = vmatprep.subr.mxu0 0.0
        %1064 = vmatpush2.msra.mxu0 0.0
        %1065 = vmatprep.subr.mxu0 0.0
        %1066 = vmatpush2.msra.mxu0 0.0
        %1067 = vmatprep.subr.mxu0 0.0
        %1068 = vmatpush2.msra.mxu0 0.0
        %1069 = vmatprep.subr.mxu0 0.0
        %1070 = vmatpush2.msra.mxu0 0.0
        %1071 = vmatprep.subr.mxu0 0.0
        %1072 = vmatpush2.msra.mxu0 0.0
        %1073 = vmatprep.subr.mxu0 0.0
        %1074 = vmatpush2.msra.mxu0 0.0
        %1075 = vmatprep.subr.mxu0 0.0
        %1076 = vmatpush2.msra.mxu0 0.0
        %1077 = vmatprep.subr.mxu0 0.0
        %1078 = vmatpush2.msra.mxu0 0.0
        %1079 = vmatprep.subr.mxu0 0.0
        %1080 = vmatpush2.msra.mxu0 0.0
        %1081 = vmatprep.subr.mxu0 0.0
        %1082 = vmatpush2.msra.mxu0 0.0
        %1083 = vmatprep.subr.mxu0 0.0
        %1084 = vmatpush2.msra.mxu0 0.0
        %1085 = vmatprep.mubr.f32.mxu0 0.0
        %1086 = vmatmul.mubr.f32.gmra.mxu0 %v406
        %v1087 = vpop.f32.mrf.mxu0
        %v1088 = vadd.f32 0.0, %v1087
        %v1089 = vpop.f32.mrf.mxu0
        %1090 = vmatprep.mubr.f32.mxu0 0.0
        %1091 = vmatmul.mubr.f32.gmra.mxu0 %v409
        %v1092 = vpop.f32.mrf.mxu0
        %v1093 = vadd.f32 0.0, %v1092
        %v1094 = vpop.f32.mrf.mxu0
        %1095 = vmatprep.mubr.f32.mxu0 0.0
        %1096 = vmatmul.mubr.f32.gmra.mxu0 %v412
        %v1097 = vpop.f32.mrf.mxu0
        %v1098 = vadd.f32 0.0, %v1097
        %v1099 = vpop.f32.mrf.mxu0
        %1100 = vmatprep.mubr.f32.mxu0 0.0
        %1101 = vmatmul.mubr.f32.gmra.mxu0 %v415
        %v1102 = vpop.f32.mrf.mxu0
        %v1103 = vadd.f32 0.0, %v1102
        %v1104 = vpop.f32.mrf.mxu0
        %1105 = vdwg.mxu0
        %v1107 = vsel %vm404, %v1088, 0
        %v1110 = vsel %vm404, %v1093, 0
        %v1113 = vsel %vm404, %v1098, 0
        %v1116 = vsel %vm404, %v1103, 0
        %1118 = vmatprep.subr.mxu0 0.0
        %1119 = vmatpush1.msra.mxu0 0.0
        %1120 = vmatprep.subr.mxu0 0.0
        %1121 = vmatpush1.msra.mxu0 0.0
        %1122 = vmatprep.subr.mxu0 0.0
        %1123 = vmatpush1.msra.mxu0 0.0
        %1124 = vmatprep.subr.mxu0 0.0
        %1125 = vmatpush1.msra.mxu0 0.0
        %1126 = vmatprep.subr.mxu0 0.0
        %1127 = vmatpush1.msra.mxu0 0.0
        %1128 = vmatprep.subr.mxu0 0.0
        %1129 = vmatpush1.msra.mxu0 0.0
        %1130 = vmatprep.subr.mxu0 0.0
        %1131 = vmatpush1.msra.mxu0 0.0
        %1132 = vmatprep.subr.mxu0 0.0
        %1133 = vmatpush1.msra.mxu0 0.0
        %1134 = vmatprep.subr.mxu0 0.0
        %1135 = vmatpush1.msra.mxu0 0.0
        %1136 = vmatprep.subr.mxu0 0.0
        %1137 = vmatpush1.msra.mxu0 0.0
        %1138 = vmatprep.subr.mxu0 0.0
        %1139 = vmatpush1.msra.mxu0 0.0
        %1140 = vmatprep.subr.mxu0 0.0
        %1141 = vmatpush1.msra.mxu0 0.0
        %1142 = vmatprep.subr.mxu0 0.0
        %1143 = vmatpush1.msra.mxu0 0.0
        %1144 = vmatprep.subr.mxu0 0.0
        %1145 = vmatpush1.msra.mxu0 0.0
        %1146 = vmatprep.subr.mxu0 0.0
        %1147 = vmatpush1.msra.mxu0 %v281
        %1148 = vmatprep.subr.mxu0 0.0
        %1149 = vmatpush1.msra.mxu0 %v280
        %1150 = vmatprep.subr.mxu0 0.0
        %1151 = vmatpush2.msra.mxu0 0.0
        %1152 = vmatprep.subr.mxu0 0.0
        %1153 = vmatpush2.msra.mxu0 0.0
        %1154 = vmatprep.subr.mxu0 0.0
        %1155 = vmatpush2.msra.mxu0 0.0
        %1156 = vmatprep.subr.mxu0 0.0
        %1157 = vmatpush2.msra.mxu0 0.0
        %1158 = vmatprep.subr.mxu0 0.0
        %1159 = vmatpush2.msra.mxu0 0.0
        %1160 = vmatprep.subr.mxu0 0.0
        %1161 = vmatpush2.msra.mxu0 0.0
        %1162 = vmatprep.subr.mxu0 0.0
        %1163 = vmatpush2.msra.mxu0 0.0
        %1164 = vmatprep.subr.mxu0 0.0
        %1165 = vmatpush2.msra.mxu0 0.0
        %1166 = vmatprep.subr.mxu0 0.0
        %1167 = vmatpush2.msra.mxu0 0.0
        %1168 = vmatprep.subr.mxu0 0.0
        %1169 = vmatpush2.msra.mxu0 0.0
        %1170 = vmatprep.subr.mxu0 0.0
        %1171 = vmatpush2.msra.mxu0 0.0
        %1172 = vmatprep.subr.mxu0 0.0
        %1173 = vmatpush2.msra.mxu0 0.0
        %1174 = vmatprep.subr.mxu0 0.0
        %1175 = vmatpush2.msra.mxu0 0.0
        %1176 = vmatprep.subr.mxu0 0.0
        %1177 = vmatpush2.msra.mxu0 0.0
        %1178 = vmatprep.subr.mxu0 0.0
        %1179 = vmatpush2.msra.mxu0 0.0
        %1180 = vmatprep.subr.mxu0 0.0
        %1181 = vmatpush2.msra.mxu0 0.0
        %1182 = vmatprep.mubr.f32.mxu0 0.0
        %1183 = vmatmul.mubr.f32.gmra.mxu0 %v1107
        %v1184 = vpop.f32.mrf.mxu0
        %v1185 = vadd.f32 0.0, %v1184
        %v1186 = vpop.f32.mrf.mxu0
        %1187 = vmatprep.mubr.f32.mxu0 0.0
        %1188 = vmatmul.mubr.f32.gmra.mxu0 %v1110
        %v1189 = vpop.f32.mrf.mxu0
        %v1190 = vadd.f32 0.0, %v1189
        %v1191 = vpop.f32.mrf.mxu0
        %1192 = vmatprep.mubr.f32.mxu0 0.0
        %1193 = vmatmul.mubr.f32.gmra.mxu0 %v1113
        %v1194 = vpop.f32.mrf.mxu0
        %v1195 = vadd.f32 0.0, %v1194
        %v1196 = vpop.f32.mrf.mxu0
        %1197 = vmatprep.mubr.f32.mxu0 0.0
        %1198 = vmatmul.mubr.f32.gmra.mxu0 %v1116
        %v1199 = vpop.f32.mrf.mxu0
        %v1200 = vadd.f32 0.0, %v1199
        %v1201 = vpop.f32.mrf.mxu0
        %1202 = vdwg.mxu0
        %s1203 = scalar_lea.vmem %s266, 64 [#allocation7]
        %1204 = vst.msk [vmem:[%s1203] sm:$0xff] %vm599, %v1185
        %1205 = vst.msk [vmem:[%s1203 + $0x8] sm:$0xff] %vm599, %v1190
        %1206 = vst.msk [vmem:[%s1203 + $0x10] sm:$0xff] %vm599, %v1195
        %1207 = vst.msk [vmem:[%s1203 + $0x18] sm:$0xff] %vm599, %v1200
        %s1208 = sadd.s32 %s282, 3
        %s1209 = sld [smem:[#allocation2 + %s1208]]
        %s1210 = sld [smem:[#allocation5 + %s1208]]
        %v1211 = vld [vmem:[%s274 + $0x3] sm:$0x1]
        %v1212 = vld [vmem:[%s274 + $0xb] sm:$0x1]
        %v1213 = vld [vmem:[%s274 + $0x13] sm:$0x1]
        %v1214 = vld [vmem:[%s274 + $0x1b] sm:$0x1]
        %v1215 = vld [vmem:[%s274 + $0x23] sm:$0x1]
        %v1216 = vld [vmem:[%s274 + $0x2b] sm:$0x1]
        %v1217 = vld [vmem:[%s274 + $0x33] sm:$0x1]
        %v1218 = vld [vmem:[%s274 + $0x3b] sm:$0x1]
        %v1219 = vld [vmem:[%s274 + $0x43] sm:$0x1]
        %v1220 = vld [vmem:[%s274 + $0x4b] sm:$0x1]
        %v1221 = vld [vmem:[%s274 + $0x53] sm:$0x1]
        %v1222 = vld [vmem:[%s274 + $0x5b] sm:$0x1]
        %v1223 = vld [vmem:[%s274 + $0x63] sm:$0x1]
        %v1224 = vld [vmem:[%s274 + $0x6b] sm:$0x1]
        %v1225 = vld [vmem:[%s274 + $0x73] sm:$0x1]
        %v1226 = vld [vmem:[%s274 + $0x7b] sm:$0x1]
        %v1227 = vstv %s1209
        %v1228 = vmul.f32 %v1211, %v1227
        %v1229 = vmul.f32 %v1212, %v1227
        %v1230 = vmul.f32 %v1213, %v1227
        %v1231 = vmul.f32 %v1214, %v1227
        %v1232 = vmul.f32 %v1215, %v1227
        %v1233 = vmul.f32 %v1216, %v1227
        %v1234 = vmul.f32 %v1217, %v1227
        %v1235 = vmul.f32 %v1218, %v1227
        %v1236 = vmul.f32 %v1219, %v1227
        %v1237 = vmul.f32 %v1220, %v1227
        %v1238 = vmul.f32 %v1221, %v1227
        %v1239 = vmul.f32 %v1222, %v1227
        %v1240 = vmul.f32 %v1223, %v1227
        %v1241 = vmul.f32 %v1224, %v1227
        %v1242 = vmul.f32 %v1225, %v1227
        %v1243 = vmul.f32 %v1226, %v1227
        %v1244 = vstv %s1210
        %v1245 = vadd.f32 %v1228, %v1244
        %v1246 = vadd.f32 %v1229, %v1244
        %v1247 = vadd.f32 %v1230, %v1244
        %v1248 = vadd.f32 %v1231, %v1244
        %v1249 = vadd.f32 %v1232, %v1244
        %v1250 = vadd.f32 %v1233, %v1244
        %v1251 = vadd.f32 %v1234, %v1244
        %v1252 = vadd.f32 %v1235, %v1244
        %v1253 = vadd.f32 %v1236, %v1244
        %v1254 = vadd.f32 %v1237, %v1244
        %v1255 = vadd.f32 %v1238, %v1244
        %v1256 = vadd.f32 %v1239, %v1244
        %v1257 = vadd.f32 %v1240, %v1244
        %v1258 = vadd.f32 %v1241, %v1244
        %v1259 = vadd.f32 %v1242, %v1244
        %v1260 = vadd.f32 %v1243, %v1244
        %v1261 = vmax.f32 %v1245, 0.0
        %v1262 = vmax.f32 %v1246, 0.0
        %v1263 = vmax.f32 %v1247, 0.0
        %v1264 = vmax.f32 %v1248, 0.0
        %v1265 = vmax.f32 %v1249, 0.0
        %v1266 = vmax.f32 %v1250, 0.0
        %v1267 = vmax.f32 %v1251, 0.0
        %v1268 = vmax.f32 %v1252, 0.0
        %v1269 = vmax.f32 %v1253, 0.0
        %v1270 = vmax.f32 %v1254, 0.0
        %v1271 = vmax.f32 %v1255, 0.0
        %v1272 = vmax.f32 %v1256, 0.0
        %v1273 = vmax.f32 %v1257, 0.0
        %v1274 = vmax.f32 %v1258, 0.0
        %v1275 = vmax.f32 %v1259, 0.0
        %v1276 = vmax.f32 %v1260, 0.0
        %v1293 = vrot.slane %v1262, 7
        %v1294 = vsel %vm368, %v1293, %v1261
        %v1295 = vrot.slane %v1263, 6
        %v1296 = vsel %vm371, %v1295, %v1294
        %v1297 = vrot.slane %v1264, 5
        %v1298 = vsel %vm374, %v1297, %v1296
        %v1299 = vrot.slane %v1265, 4
        %v1300 = vsel %vm377, %v1299, %v1298
        %v1301 = vrot.slane %v1266, 3
        %v1302 = vsel %vm380, %v1301, %v1300
        %v1303 = vrot.slane %v1267, 2
        %v1304 = vsel %vm383, %v1303, %v1302
        %v1305 = vrot.slane %v1268, 1
        %v1306 = vsel %vm386, %v1305, %v1304
        %v1307 = vrot.slane %v1270, 7
        %v1308 = vsel %vm368, %v1307, %v1269
        %v1309 = vrot.slane %v1271, 6
        %v1310 = vsel %vm371, %v1309, %v1308
        %v1311 = vrot.slane %v1272, 5
        %v1312 = vsel %vm374, %v1311, %v1310
        %v1313 = vrot.slane %v1273, 4
        %v1314 = vsel %vm377, %v1313, %v1312
        %v1315 = vrot.slane %v1274, 3
        %v1316 = vsel %vm380, %v1315, %v1314
        %v1317 = vrot.slane %v1275, 2
        %v1318 = vsel %vm383, %v1317, %v1316
        %v1319 = vrot.slane %v1276, 1
        %v1320 = vsel %vm386, %v1319, %v1318
        %1323 = vmatprep.subr.mxu0 0.0
        %1324 = vmatpush1.msra.mxu0 0.0
        %1325 = vmatprep.subr.mxu0 0.0
        %1326 = vmatpush1.msra.mxu0 0.0
        %1327 = vmatprep.subr.mxu0 0.0
        %1328 = vmatpush1.msra.mxu0 0.0
        %1329 = vmatprep.subr.mxu0 0.0
        %1330 = vmatpush1.msra.mxu0 0.0
        %1331 = vmatprep.subr.mxu0 0.0
        %1332 = vmatpush1.msra.mxu0 0.0
        %1333 = vmatprep.subr.mxu0 0.0
        %1334 = vmatpush1.msra.mxu0 0.0
        %1335 = vmatprep.subr.mxu0 0.0
        %1336 = vmatpush1.msra.mxu0 0.0
        %1337 = vmatprep.subr.mxu0 0.0
        %1338 = vmatpush1.msra.mxu0 0.0
        %1339 = vmatprep.subr.mxu0 0.0
        %1340 = vmatpush1.msra.mxu0 0.0
        %1341 = vmatprep.subr.mxu0 0.0
        %1342 = vmatpush1.msra.mxu0 0.0
        %1343 = vmatprep.subr.mxu0 0.0
        %1344 = vmatpush1.msra.mxu0 0.0
        %1345 = vmatprep.subr.mxu0 0.0
        %1346 = vmatpush1.msra.mxu0 0.0
        %1347 = vmatprep.subr.mxu0 0.0
        %1348 = vmatpush1.msra.mxu0 0.0
        %1349 = vmatprep.subr.mxu0 0.0
        %1350 = vmatpush1.msra.mxu0 0.0
        %1351 = vmatprep.subr.mxu0 0.0
        %1352 = vmatpush1.msra.mxu0 %v1320
        %1353 = vmatprep.subr.mxu0 0.0
        %1354 = vmatpush1.msra.mxu0 %v1306
        %1355 = vmatprep.subr.mxu0 0.0
        %1356 = vmatpush2.msra.mxu0 0.0
        %1357 = vmatprep.subr.mxu0 0.0
        %1358 = vmatpush2.msra.mxu0 0.0
        %1359 = vmatprep.subr.mxu0 0.0
        %1360 = vmatpush2.msra.mxu0 0.0
        %1361 = vmatprep.subr.mxu0 0.0
        %1362 = vmatpush2.msra.mxu0 0.0
        %1363 = vmatprep.subr.mxu0 0.0
        %1364 = vmatpush2.msra.mxu0 0.0
        %1365 = vmatprep.subr.mxu0 0.0
        %1366 = vmatpush2.msra.mxu0 0.0
        %1367 = vmatprep.subr.mxu0 0.0
        %1368 = vmatpush2.msra.mxu0 0.0
        %1369 = vmatprep.subr.mxu0 0.0
        %1370 = vmatpush2.msra.mxu0 0.0
        %1371 = vmatprep.subr.mxu0 0.0
        %1372 = vmatpush2.msra.mxu0 0.0
        %1373 = vmatprep.subr.mxu0 0.0
        %1374 = vmatpush2.msra.mxu0 0.0
        %1375 = vmatprep.subr.mxu0 0.0
        %1376 = vmatpush2.msra.mxu0 0.0
        %1377 = vmatprep.subr.mxu0 0.0
        %1378 = vmatpush2.msra.mxu0 0.0
        %1379 = vmatprep.subr.mxu0 0.0
        %1380 = vmatpush2.msra.mxu0 0.0
        %1381 = vmatprep.subr.mxu0 0.0
        %1382 = vmatpush2.msra.mxu0 0.0
        %1383 = vmatprep.subr.mxu0 0.0
        %1384 = vmatpush2.msra.mxu0 0.0
        %1385 = vmatprep.subr.mxu0 0.0
        %1386 = vmatpush2.msra.mxu0 0.0
        %1387 = vmatprep.mubr.f32.mxu0 0.0
        %1388 = vmatmul.mubr.f32.gmra.mxu0 %v406
        %v1389 = vpop.f32.mrf.mxu0
        %v1390 = vadd.f32 0.0, %v1389
        %v1391 = vpop.f32.mrf.mxu0
        %1392 = vmatprep.mubr.f32.mxu0 0.0
        %1393 = vmatmul.mubr.f32.gmra.mxu0 %v409
        %v1394 = vpop.f32.mrf.mxu0
        %v1395 = vadd.f32 0.0, %v1394
        %v1396 = vpop.f32.mrf.mxu0
        %1397 = vmatprep.mubr.f32.mxu0 0.0
        %1398 = vmatmul.mubr.f32.gmra.mxu0 %v412
        %v1399 = vpop.f32.mrf.mxu0
        %v1400 = vadd.f32 0.0, %v1399
        %v1401 = vpop.f32.mrf.mxu0
        %1402 = vmatprep.mubr.f32.mxu0 0.0
        %1403 = vmatmul.mubr.f32.gmra.mxu0 %v415
        %v1404 = vpop.f32.mrf.mxu0
        %v1405 = vadd.f32 0.0, %v1404
        %v1406 = vpop.f32.mrf.mxu0
        %1407 = vdwg.mxu0
        %v1409 = vsel %vm404, %v1390, 0
        %v1412 = vsel %vm404, %v1395, 0
        %v1415 = vsel %vm404, %v1400, 0
        %v1418 = vsel %vm404, %v1405, 0
        %1420 = vmatprep.subr.mxu0 0.0
        %1421 = vmatpush1.msra.mxu0 0.0
        %1422 = vmatprep.subr.mxu0 0.0
        %1423 = vmatpush1.msra.mxu0 0.0
        %1424 = vmatprep.subr.mxu0 0.0
        %1425 = vmatpush1.msra.mxu0 0.0
        %1426 = vmatprep.subr.mxu0 0.0
        %1427 = vmatpush1.msra.mxu0 0.0
        %1428 = vmatprep.subr.mxu0 0.0
        %1429 = vmatpush1.msra.mxu0 0.0
        %1430 = vmatprep.subr.mxu0 0.0
        %1431 = vmatpush1.msra.mxu0 0.0
        %1432 = vmatprep.subr.mxu0 0.0
        %1433 = vmatpush1.msra.mxu0 0.0
        %1434 = vmatprep.subr.mxu0 0.0
        %1435 = vmatpush1.msra.mxu0 0.0
        %1436 = vmatprep.subr.mxu0 0.0
        %1437 = vmatpush1.msra.mxu0 0.0
        %1438 = vmatprep.subr.mxu0 0.0
        %1439 = vmatpush1.msra.mxu0 0.0
        %1440 = vmatprep.subr.mxu0 0.0
        %1441 = vmatpush1.msra.mxu0 0.0
        %1442 = vmatprep.subr.mxu0 0.0
        %1443 = vmatpush1.msra.mxu0 0.0
        %1444 = vmatprep.subr.mxu0 0.0
        %1445 = vmatpush1.msra.mxu0 0.0
        %1446 = vmatprep.subr.mxu0 0.0
        %1447 = vmatpush1.msra.mxu0 0.0
        %1448 = vmatprep.subr.mxu0 0.0
        %1449 = vmatpush1.msra.mxu0 %v281
        %1450 = vmatprep.subr.mxu0 0.0
        %1451 = vmatpush1.msra.mxu0 %v280
        %1452 = vmatprep.subr.mxu0 0.0
        %1453 = vmatpush2.msra.mxu0 0.0
        %1454 = vmatprep.subr.mxu0 0.0
        %1455 = vmatpush2.msra.mxu0 0.0
        %1456 = vmatprep.subr.mxu0 0.0
        %1457 = vmatpush2.msra.mxu0 0.0
        %1458 = vmatprep.subr.mxu0 0.0
        %1459 = vmatpush2.msra.mxu0 0.0
        %1460 = vmatprep.subr.mxu0 0.0
        %1461 = vmatpush2.msra.mxu0 0.0
        %1462 = vmatprep.subr.mxu0 0.0
        %1463 = vmatpush2.msra.mxu0 0.0
        %1464 = vmatprep.subr.mxu0 0.0
        %1465 = vmatpush2.msra.mxu0 0.0
        %1466 = vmatprep.subr.mxu0 0.0
        %1467 = vmatpush2.msra.mxu0 0.0
        %1468 = vmatprep.subr.mxu0 0.0
        %1469 = vmatpush2.msra.mxu0 0.0
        %1470 = vmatprep.subr.mxu0 0.0
        %1471 = vmatpush2.msra.mxu0 0.0
        %1472 = vmatprep.subr.mxu0 0.0
        %1473 = vmatpush2.msra.mxu0 0.0
        %1474 = vmatprep.subr.mxu0 0.0
        %1475 = vmatpush2.msra.mxu0 0.0
        %1476 = vmatprep.subr.mxu0 0.0
        %1477 = vmatpush2.msra.mxu0 0.0
        %1478 = vmatprep.subr.mxu0 0.0
        %1479 = vmatpush2.msra.mxu0 0.0
        %1480 = vmatprep.subr.mxu0 0.0
        %1481 = vmatpush2.msra.mxu0 0.0
        %1482 = vmatprep.subr.mxu0 0.0
        %1483 = vmatpush2.msra.mxu0 0.0
        %1484 = vmatprep.mubr.f32.mxu0 0.0
        %1485 = vmatmul.mubr.f32.gmra.mxu0 %v1409
        %v1486 = vpop.f32.mrf.mxu0
        %v1487 = vadd.f32 0.0, %v1486
        %v1488 = vpop.f32.mrf.mxu0
        %1489 = vmatprep.mubr.f32.mxu0 0.0
        %1490 = vmatmul.mubr.f32.gmra.mxu0 %v1412
        %v1491 = vpop.f32.mrf.mxu0
        %v1492 = vadd.f32 0.0, %v1491
        %v1493 = vpop.f32.mrf.mxu0
        %1494 = vmatprep.mubr.f32.mxu0 0.0
        %1495 = vmatmul.mubr.f32.gmra.mxu0 %v1415
        %v1496 = vpop.f32.mrf.mxu0
        %v1497 = vadd.f32 0.0, %v1496
        %v1498 = vpop.f32.mrf.mxu0
        %1499 = vmatprep.mubr.f32.mxu0 0.0
        %1500 = vmatmul.mubr.f32.gmra.mxu0 %v1418
        %v1501 = vpop.f32.mrf.mxu0
        %v1502 = vadd.f32 0.0, %v1501
        %v1503 = vpop.f32.mrf.mxu0
        %1504 = vdwg.mxu0
        %s1505 = scalar_lea.vmem %s266, 96 [#allocation7]
        %1506 = vst.msk [vmem:[%s1505] sm:$0xff] %vm599, %v1487
        %1507 = vst.msk [vmem:[%s1505 + $0x8] sm:$0xff] %vm599, %v1492
        %1508 = vst.msk [vmem:[%s1505 + $0x10] sm:$0xff] %vm599, %v1497
        %1509 = vst.msk [vmem:[%s1505 + $0x18] sm:$0xff] %vm599, %v1502
        %s1510 = sadd.s32 %s282, 4
        %s1511 = sld [smem:[#allocation2 + %s1510]]
        %s1512 = sld [smem:[#allocation5 + %s1510]]
        %v1513 = vld [vmem:[%s274 + $0x4] sm:$0x1]
        %v1514 = vld [vmem:[%s274 + $0xc] sm:$0x1]
        %v1515 = vld [vmem:[%s274 + $0x14] sm:$0x1]
        %v1516 = vld [vmem:[%s274 + $0x1c] sm:$0x1]
        %v1517 = vld [vmem:[%s274 + $0x24] sm:$0x1]
        %v1518 = vld [vmem:[%s274 + $0x2c] sm:$0x1]
        %v1519 = vld [vmem:[%s274 + $0x34] sm:$0x1]
        %v1520 = vld [vmem:[%s274 + $0x3c] sm:$0x1]
        %v1521 = vld [vmem:[%s274 + $0x44] sm:$0x1]
        %v1522 = vld [vmem:[%s274 + $0x4c] sm:$0x1]
        %v1523 = vld [vmem:[%s274 + $0x54] sm:$0x1]
        %v1524 = vld [vmem:[%s274 + $0x5c] sm:$0x1]
        %v1525 = vld [vmem:[%s274 + $0x64] sm:$0x1]
        %v1526 = vld [vmem:[%s274 + $0x6c] sm:$0x1]
        %v1527 = vld [vmem:[%s274 + $0x74] sm:$0x1]
        %v1528 = vld [vmem:[%s274 + $0x7c] sm:$0x1]
        %v1529 = vstv %s1511
        %v1530 = vmul.f32 %v1513, %v1529
        %v1531 = vmul.f32 %v1514, %v1529
        %v1532 = vmul.f32 %v1515, %v1529
        %v1533 = vmul.f32 %v1516, %v1529
        %v1534 = vmul.f32 %v1517, %v1529
        %v1535 = vmul.f32 %v1518, %v1529
        %v1536 = vmul.f32 %v1519, %v1529
        %v1537 = vmul.f32 %v1520, %v1529
        %v1538 = vmul.f32 %v1521, %v1529
        %v1539 = vmul.f32 %v1522, %v1529
        %v1540 = vmul.f32 %v1523, %v1529
        %v1541 = vmul.f32 %v1524, %v1529
        %v1542 = vmul.f32 %v1525, %v1529
        %v1543 = vmul.f32 %v1526, %v1529
        %v1544 = vmul.f32 %v1527, %v1529
        %v1545 = vmul.f32 %v1528, %v1529
        %v1546 = vstv %s1512
        %v1547 = vadd.f32 %v1530, %v1546
        %v1548 = vadd.f32 %v1531, %v1546
        %v1549 = vadd.f32 %v1532, %v1546
        %v1550 = vadd.f32 %v1533, %v1546
        %v1551 = vadd.f32 %v1534, %v1546
        %v1552 = vadd.f32 %v1535, %v1546
        %v1553 = vadd.f32 %v1536, %v1546
        %v1554 = vadd.f32 %v1537, %v1546
        %v1555 = vadd.f32 %v1538, %v1546
        %v1556 = vadd.f32 %v1539, %v1546
        %v1557 = vadd.f32 %v1540, %v1546
        %v1558 = vadd.f32 %v1541, %v1546
        %v1559 = vadd.f32 %v1542, %v1546
        %v1560 = vadd.f32 %v1543, %v1546
        %v1561 = vadd.f32 %v1544, %v1546
        %v1562 = vadd.f32 %v1545, %v1546
        %v1563 = vmax.f32 %v1547, 0.0
        %v1564 = vmax.f32 %v1548, 0.0
        %v1565 = vmax.f32 %v1549, 0.0
        %v1566 = vmax.f32 %v1550, 0.0
        %v1567 = vmax.f32 %v1551, 0.0
        %v1568 = vmax.f32 %v1552, 0.0
        %v1569 = vmax.f32 %v1553, 0.0
        %v1570 = vmax.f32 %v1554, 0.0
        %v1571 = vmax.f32 %v1555, 0.0
        %v1572 = vmax.f32 %v1556, 0.0
        %v1573 = vmax.f32 %v1557, 0.0
        %v1574 = vmax.f32 %v1558, 0.0
        %v1575 = vmax.f32 %v1559, 0.0
        %v1576 = vmax.f32 %v1560, 0.0
        %v1577 = vmax.f32 %v1561, 0.0
        %v1578 = vmax.f32 %v1562, 0.0
        %v1595 = vrot.slane %v1564, 7
        %v1596 = vsel %vm368, %v1595, %v1563
        %v1597 = vrot.slane %v1565, 6
        %v1598 = vsel %vm371, %v1597, %v1596
        %v1599 = vrot.slane %v1566, 5
        %v1600 = vsel %vm374, %v1599, %v1598
        %v1601 = vrot.slane %v1567, 4
        %v1602 = vsel %vm377, %v1601, %v1600
        %v1603 = vrot.slane %v1568, 3
        %v1604 = vsel %vm380, %v1603, %v1602
        %v1605 = vrot.slane %v1569, 2
        %v1606 = vsel %vm383, %v1605, %v1604
        %v1607 = vrot.slane %v1570, 1
        %v1608 = vsel %vm386, %v1607, %v1606
        %v1609 = vrot.slane %v1572, 7
        %v1610 = vsel %vm368, %v1609, %v1571
        %v1611 = vrot.slane %v1573, 6
        %v1612 = vsel %vm371, %v1611, %v1610
        %v1613 = vrot.slane %v1574, 5
        %v1614 = vsel %vm374, %v1613, %v1612
        %v1615 = vrot.slane %v1575, 4
        %v1616 = vsel %vm377, %v1615, %v1614
        %v1617 = vrot.slane %v1576, 3
        %v1618 = vsel %vm380, %v1617, %v1616
        %v1619 = vrot.slane %v1577, 2
        %v1620 = vsel %vm383, %v1619, %v1618
        %v1621 = vrot.slane %v1578, 1
        %v1622 = vsel %vm386, %v1621, %v1620
        %1625 = vmatprep.subr.mxu0 0.0
        %1626 = vmatpush1.msra.mxu0 0.0
        %1627 = vmatprep.subr.mxu0 0.0
        %1628 = vmatpush1.msra.mxu0 0.0
        %1629 = vmatprep.subr.mxu0 0.0
        %1630 = vmatpush1.msra.mxu0 0.0
        %1631 = vmatprep.subr.mxu0 0.0
        %1632 = vmatpush1.msra.mxu0 0.0
        %1633 = vmatprep.subr.mxu0 0.0
        %1634 = vmatpush1.msra.mxu0 0.0
        %1635 = vmatprep.subr.mxu0 0.0
        %1636 = vmatpush1.msra.mxu0 0.0
        %1637 = vmatprep.subr.mxu0 0.0
        %1638 = vmatpush1.msra.mxu0 0.0
        %1639 = vmatprep.subr.mxu0 0.0
        %1640 = vmatpush1.msra.mxu0 0.0
        %1641 = vmatprep.subr.mxu0 0.0
        %1642 = vmatpush1.msra.mxu0 0.0
        %1643 = vmatprep.subr.mxu0 0.0
        %1644 = vmatpush1.msra.mxu0 0.0
        %1645 = vmatprep.subr.mxu0 0.0
        %1646 = vmatpush1.msra.mxu0 0.0
        %1647 = vmatprep.subr.mxu0 0.0
        %1648 = vmatpush1.msra.mxu0 0.0
        %1649 = vmatprep.subr.mxu0 0.0
        %1650 = vmatpush1.msra.mxu0 0.0
        %1651 = vmatprep.subr.mxu0 0.0
        %1652 = vmatpush1.msra.mxu0 0.0
        %1653 = vmatprep.subr.mxu0 0.0
        %1654 = vmatpush1.msra.mxu0 %v1622
        %1655 = vmatprep.subr.mxu0 0.0
        %1656 = vmatpush1.msra.mxu0 %v1608
        %1657 = vmatprep.subr.mxu0 0.0
        %1658 = vmatpush2.msra.mxu0 0.0
        %1659 = vmatprep.subr.mxu0 0.0
        %1660 = vmatpush2.msra.mxu0 0.0
        %1661 = vmatprep.subr.mxu0 0.0
        %1662 = vmatpush2.msra.mxu0 0.0
        %1663 = vmatprep.subr.mxu0 0.0
        %1664 = vmatpush2.msra.mxu0 0.0
        %1665 = vmatprep.subr.mxu0 0.0
        %1666 = vmatpush2.msra.mxu0 0.0
        %1667 = vmatprep.subr.mxu0 0.0
        %1668 = vmatpush2.msra.mxu0 0.0
        %1669 = vmatprep.subr.mxu0 0.0
        %1670 = vmatpush2.msra.mxu0 0.0
        %1671 = vmatprep.subr.mxu0 0.0
        %1672 = vmatpush2.msra.mxu0 0.0
        %1673 = vmatprep.subr.mxu0 0.0
        %1674 = vmatpush2.msra.mxu0 0.0
        %1675 = vmatprep.subr.mxu0 0.0
        %1676 = vmatpush2.msra.mxu0 0.0
        %1677 = vmatprep.subr.mxu0 0.0
        %1678 = vmatpush2.msra.mxu0 0.0
        %1679 = vmatprep.subr.mxu0 0.0
        %1680 = vmatpush2.msra.mxu0 0.0
        %1681 = vmatprep.subr.mxu0 0.0
        %1682 = vmatpush2.msra.mxu0 0.0
        %1683 = vmatprep.subr.mxu0 0.0
        %1684 = vmatpush2.msra.mxu0 0.0
        %1685 = vmatprep.subr.mxu0 0.0
        %1686 = vmatpush2.msra.mxu0 0.0
        %1687 = vmatprep.subr.mxu0 0.0
        %1688 = vmatpush2.msra.mxu0 0.0
        %1689 = vmatprep.mubr.f32.mxu0 0.0
        %1690 = vmatmul.mubr.f32.gmra.mxu0 %v406
        %v1691 = vpop.f32.mrf.mxu0
        %v1692 = vadd.f32 0.0, %v1691
        %v1693 = vpop.f32.mrf.mxu0
        %1694 = vmatprep.mubr.f32.mxu0 0.0
        %1695 = vmatmul.mubr.f32.gmra.mxu0 %v409
        %v1696 = vpop.f32.mrf.mxu0
        %v1697 = vadd.f32 0.0, %v1696
        %v1698 = vpop.f32.mrf.mxu0
        %1699 = vmatprep.mubr.f32.mxu0 0.0
        %1700 = vmatmul.mubr.f32.gmra.mxu0 %v412
        %v1701 = vpop.f32.mrf.mxu0
        %v1702 = vadd.f32 0.0, %v1701
        %v1703 = vpop.f32.mrf.mxu0
        %1704 = vmatprep.mubr.f32.mxu0 0.0
        %1705 = vmatmul.mubr.f32.gmra.mxu0 %v415
        %v1706 = vpop.f32.mrf.mxu0
        %v1707 = vadd.f32 0.0, %v1706
        %v1708 = vpop.f32.mrf.mxu0
        %1709 = vdwg.mxu0
        %v1711 = vsel %vm404, %v1692, 0
        %v1714 = vsel %vm404, %v1697, 0
        %v1717 = vsel %vm404, %v1702, 0
        %v1720 = vsel %vm404, %v1707, 0
        %1722 = vmatprep.subr.mxu0 0.0
        %1723 = vmatpush1.msra.mxu0 0.0
        %1724 = vmatprep.subr.mxu0 0.0
        %1725 = vmatpush1.msra.mxu0 0.0
        %1726 = vmatprep.subr.mxu0 0.0
        %1727 = vmatpush1.msra.mxu0 0.0
        %1728 = vmatprep.subr.mxu0 0.0
        %1729 = vmatpush1.msra.mxu0 0.0
        %1730 = vmatprep.subr.mxu0 0.0
        %1731 = vmatpush1.msra.mxu0 0.0
        %1732 = vmatprep.subr.mxu0 0.0
        %1733 = vmatpush1.msra.mxu0 0.0
        %1734 = vmatprep.subr.mxu0 0.0
        %1735 = vmatpush1.msra.mxu0 0.0
        %1736 = vmatprep.subr.mxu0 0.0
        %1737 = vmatpush1.msra.mxu0 0.0
        %1738 = vmatprep.subr.mxu0 0.0
        %1739 = vmatpush1.msra.mxu0 0.0
        %1740 = vmatprep.subr.mxu0 0.0
        %1741 = vmatpush1.msra.mxu0 0.0
        %1742 = vmatprep.subr.mxu0 0.0
        %1743 = vmatpush1.msra.mxu0 0.0
        %1744 = vmatprep.subr.mxu0 0.0
        %1745 = vmatpush1.msra.mxu0 0.0
        %1746 = vmatprep.subr.mxu0 0.0
        %1747 = vmatpush1.msra.mxu0 0.0
        %1748 = vmatprep.subr.mxu0 0.0
        %1749 = vmatpush1.msra.mxu0 0.0
        %1750 = vmatprep.subr.mxu0 0.0
        %1751 = vmatpush1.msra.mxu0 %v281
        %1752 = vmatprep.subr.mxu0 0.0
        %1753 = vmatpush1.msra.mxu0 %v280
        %1754 = vmatprep.subr.mxu0 0.0
        %1755 = vmatpush2.msra.mxu0 0.0
        %1756 = vmatprep.subr.mxu0 0.0
        %1757 = vmatpush2.msra.mxu0 0.0
        %1758 = vmatprep.subr.mxu0 0.0
        %1759 = vmatpush2.msra.mxu0 0.0
        %1760 = vmatprep.subr.mxu0 0.0
        %1761 = vmatpush2.msra.mxu0 0.0
        %1762 = vmatprep.subr.mxu0 0.0
        %1763 = vmatpush2.msra.mxu0 0.0
        %1764 = vmatprep.subr.mxu0 0.0
        %1765 = vmatpush2.msra.mxu0 0.0
        %1766 = vmatprep.subr.mxu0 0.0
        %1767 = vmatpush2.msra.mxu0 0.0
        %1768 = vmatprep.subr.mxu0 0.0
        %1769 = vmatpush2.msra.mxu0 0.0
        %1770 = vmatprep.subr.mxu0 0.0
        %1771 = vmatpush2.msra.mxu0 0.0
        %1772 = vmatprep.subr.mxu0 0.0
        %1773 = vmatpush2.msra.mxu0 0.0
        %1774 = vmatprep.subr.mxu0 0.0
        %1775 = vmatpush2.msra.mxu0 0.0
        %1776 = vmatprep.subr.mxu0 0.0
        %1777 = vmatpush2.msra.mxu0 0.0
        %1778 = vmatprep.subr.mxu0 0.0
        %1779 = vmatpush2.msra.mxu0 0.0
        %1780 = vmatprep.subr.mxu0 0.0
        %1781 = vmatpush2.msra.mxu0 0.0
        %1782 = vmatprep.subr.mxu0 0.0
        %1783 = vmatpush2.msra.mxu0 0.0
        %1784 = vmatprep.subr.mxu0 0.0
        %1785 = vmatpush2.msra.mxu0 0.0
        %1786 = vmatprep.mubr.f32.mxu0 0.0
        %1787 = vmatmul.mubr.f32.gmra.mxu0 %v1711
        %v1788 = vpop.f32.mrf.mxu0
        %v1789 = vadd.f32 0.0, %v1788
        %v1790 = vpop.f32.mrf.mxu0
        %1791 = vmatprep.mubr.f32.mxu0 0.0
        %1792 = vmatmul.mubr.f32.gmra.mxu0 %v1714
        %v1793 = vpop.f32.mrf.mxu0
        %v1794 = vadd.f32 0.0, %v1793
        %v1795 = vpop.f32.mrf.mxu0
        %1796 = vmatprep.mubr.f32.mxu0 0.0
        %1797 = vmatmul.mubr.f32.gmra.mxu0 %v1717
        %v1798 = vpop.f32.mrf.mxu0
        %v1799 = vadd.f32 0.0, %v1798
        %v1800 = vpop.f32.mrf.mxu0
        %1801 = vmatprep.mubr.f32.mxu0 0.0
        %1802 = vmatmul.mubr.f32.gmra.mxu0 %v1720
        %v1803 = vpop.f32.mrf.mxu0
        %v1804 = vadd.f32 0.0, %v1803
        %v1805 = vpop.f32.mrf.mxu0
        %1806 = vdwg.mxu0
        %s1807 = scalar_lea.vmem %s266, 128 [#allocation7]
        %1808 = vst.msk [vmem:[%s1807] sm:$0xff] %vm599, %v1789
        %1809 = vst.msk [vmem:[%s1807 + $0x8] sm:$0xff] %vm599, %v1794
        %1810 = vst.msk [vmem:[%s1807 + $0x10] sm:$0xff] %vm599, %v1799
        %1811 = vst.msk [vmem:[%s1807 + $0x18] sm:$0xff] %vm599, %v1804
        %s1812 = sadd.s32 %s282, 5
        %s1813 = sld [smem:[#allocation2 + %s1812]]
        %s1814 = sld [smem:[#allocation5 + %s1812]]
        %v1815 = vld [vmem:[%s274 + $0x5] sm:$0x1]
        %v1816 = vld [vmem:[%s274 + $0xd] sm:$0x1]
        %v1817 = vld [vmem:[%s274 + $0x15] sm:$0x1]
        %v1818 = vld [vmem:[%s274 + $0x1d] sm:$0x1]
        %v1819 = vld [vmem:[%s274 + $0x25] sm:$0x1]
        %v1820 = vld [vmem:[%s274 + $0x2d] sm:$0x1]
        %v1821 = vld [vmem:[%s274 + $0x35] sm:$0x1]
        %v1822 = vld [vmem:[%s274 + $0x3d] sm:$0x1]
        %v1823 = vld [vmem:[%s274 + $0x45] sm:$0x1]
        %v1824 = vld [vmem:[%s274 + $0x4d] sm:$0x1]
        %v1825 = vld [vmem:[%s274 + $0x55] sm:$0x1]
        %v1826 = vld [vmem:[%s274 + $0x5d] sm:$0x1]
        %v1827 = vld [vmem:[%s274 + $0x65] sm:$0x1]
        %v1828 = vld [vmem:[%s274 + $0x6d] sm:$0x1]
        %v1829 = vld [vmem:[%s274 + $0x75] sm:$0x1]
        %v1830 = vld [vmem:[%s274 + $0x7d] sm:$0x1]
        %v1831 = vstv %s1813
        %v1832 = vmul.f32 %v1815, %v1831
        %v1833 = vmul.f32 %v1816, %v1831
        %v1834 = vmul.f32 %v1817, %v1831
        %v1835 = vmul.f32 %v1818, %v1831
        %v1836 = vmul.f32 %v1819, %v1831
        %v1837 = vmul.f32 %v1820, %v1831
        %v1838 = vmul.f32 %v1821, %v1831
        %v1839 = vmul.f32 %v1822, %v1831
        %v1840 = vmul.f32 %v1823, %v1831
        %v1841 = vmul.f32 %v1824, %v1831
        %v1842 = vmul.f32 %v1825, %v1831
        %v1843 = vmul.f32 %v1826, %v1831
        %v1844 = vmul.f32 %v1827, %v1831
        %v1845 = vmul.f32 %v1828, %v1831
        %v1846 = vmul.f32 %v1829, %v1831
        %v1847 = vmul.f32 %v1830, %v1831
        %v1848 = vstv %s1814
        %v1849 = vadd.f32 %v1832, %v1848
        %v1850 = vadd.f32 %v1833, %v1848
        %v1851 = vadd.f32 %v1834, %v1848
        %v1852 = vadd.f32 %v1835, %v1848
        %v1853 = vadd.f32 %v1836, %v1848
        %v1854 = vadd.f32 %v1837, %v1848
        %v1855 = vadd.f32 %v1838, %v1848
        %v1856 = vadd.f32 %v1839, %v1848
        %v1857 = vadd.f32 %v1840, %v1848
        %v1858 = vadd.f32 %v1841, %v1848
        %v1859 = vadd.f32 %v1842, %v1848
        %v1860 = vadd.f32 %v1843, %v1848
        %v1861 = vadd.f32 %v1844, %v1848
        %v1862 = vadd.f32 %v1845, %v1848
        %v1863 = vadd.f32 %v1846, %v1848
        %v1864 = vadd.f32 %v1847, %v1848
        %v1865 = vmax.f32 %v1849, 0.0
        %v1866 = vmax.f32 %v1850, 0.0
        %v1867 = vmax.f32 %v1851, 0.0
        %v1868 = vmax.f32 %v1852, 0.0
        %v1869 = vmax.f32 %v1853, 0.0
        %v1870 = vmax.f32 %v1854, 0.0
        %v1871 = vmax.f32 %v1855, 0.0
        %v1872 = vmax.f32 %v1856, 0.0
        %v1873 = vmax.f32 %v1857, 0.0
        %v1874 = vmax.f32 %v1858, 0.0
        %v1875 = vmax.f32 %v1859, 0.0
        %v1876 = vmax.f32 %v1860, 0.0
        %v1877 = vmax.f32 %v1861, 0.0
        %v1878 = vmax.f32 %v1862, 0.0
        %v1879 = vmax.f32 %v1863, 0.0
        %v1880 = vmax.f32 %v1864, 0.0
        %v1897 = vrot.slane %v1866, 7
        %v1898 = vsel %vm368, %v1897, %v1865
        %v1899 = vrot.slane %v1867, 6
        %v1900 = vsel %vm371, %v1899, %v1898
        %v1901 = vrot.slane %v1868, 5
        %v1902 = vsel %vm374, %v1901, %v1900
        %v1903 = vrot.slane %v1869, 4
        %v1904 = vsel %vm377, %v1903, %v1902
        %v1905 = vrot.slane %v1870, 3
        %v1906 = vsel %vm380, %v1905, %v1904
        %v1907 = vrot.slane %v1871, 2
        %v1908 = vsel %vm383, %v1907, %v1906
        %v1909 = vrot.slane %v1872, 1
        %v1910 = vsel %vm386, %v1909, %v1908
        %v1911 = vrot.slane %v1874, 7
        %v1912 = vsel %vm368, %v1911, %v1873
        %v1913 = vrot.slane %v1875, 6
        %v1914 = vsel %vm371, %v1913, %v1912
        %v1915 = vrot.slane %v1876, 5
        %v1916 = vsel %vm374, %v1915, %v1914
        %v1917 = vrot.slane %v1877, 4
        %v1918 = vsel %vm377, %v1917, %v1916
        %v1919 = vrot.slane %v1878, 3
        %v1920 = vsel %vm380, %v1919, %v1918
        %v1921 = vrot.slane %v1879, 2
        %v1922 = vsel %vm383, %v1921, %v1920
        %v1923 = vrot.slane %v1880, 1
        %v1924 = vsel %vm386, %v1923, %v1922
        %1927 = vmatprep.subr.mxu0 0.0
        %1928 = vmatpush1.msra.mxu0 0.0
        %1929 = vmatprep.subr.mxu0 0.0
        %1930 = vmatpush1.msra.mxu0 0.0
        %1931 = vmatprep.subr.mxu0 0.0
        %1932 = vmatpush1.msra.mxu0 0.0
        %1933 = vmatprep.subr.mxu0 0.0
        %1934 = vmatpush1.msra.mxu0 0.0
        %1935 = vmatprep.subr.mxu0 0.0
        %1936 = vmatpush1.msra.mxu0 0.0
        %1937 = vmatprep.subr.mxu0 0.0
        %1938 = vmatpush1.msra.mxu0 0.0
        %1939 = vmatprep.subr.mxu0 0.0
        %1940 = vmatpush1.msra.mxu0 0.0
        %1941 = vmatprep.subr.mxu0 0.0
        %1942 = vmatpush1.msra.mxu0 0.0
        %1943 = vmatprep.subr.mxu0 0.0
        %1944 = vmatpush1.msra.mxu0 0.0
        %1945 = vmatprep.subr.mxu0 0.0
        %1946 = vmatpush1.msra.mxu0 0.0
        %1947 = vmatprep.subr.mxu0 0.0
        %1948 = vmatpush1.msra.mxu0 0.0
        %1949 = vmatprep.subr.mxu0 0.0
        %1950 = vmatpush1.msra.mxu0 0.0
        %1951 = vmatprep.subr.mxu0 0.0
        %1952 = vmatpush1.msra.mxu0 0.0
        %1953 = vmatprep.subr.mxu0 0.0
        %1954 = vmatpush1.msra.mxu0 0.0
        %1955 = vmatprep.subr.mxu0 0.0
        %1956 = vmatpush1.msra.mxu0 %v1924
        %1957 = vmatprep.subr.mxu0 0.0
        %1958 = vmatpush1.msra.mxu0 %v1910
        %1959 = vmatprep.subr.mxu0 0.0
        %1960 = vmatpush2.msra.mxu0 0.0
        %1961 = vmatprep.subr.mxu0 0.0
        %1962 = vmatpush2.msra.mxu0 0.0
        %1963 = vmatprep.subr.mxu0 0.0
        %1964 = vmatpush2.msra.mxu0 0.0
        %1965 = vmatprep.subr.mxu0 0.0
        %1966 = vmatpush2.msra.mxu0 0.0
        %1967 = vmatprep.subr.mxu0 0.0
        %1968 = vmatpush2.msra.mxu0 0.0
        %1969 = vmatprep.subr.mxu0 0.0
        %1970 = vmatpush2.msra.mxu0 0.0
        %1971 = vmatprep.subr.mxu0 0.0
        %1972 = vmatpush2.msra.mxu0 0.0
        %1973 = vmatprep.subr.mxu0 0.0
        %1974 = vmatpush2.msra.mxu0 0.0
        %1975 = vmatprep.subr.mxu0 0.0
        %1976 = vmatpush2.msra.mxu0 0.0
        %1977 = vmatprep.subr.mxu0 0.0
        %1978 = vmatpush2.msra.mxu0 0.0
        %1979 = vmatprep.subr.mxu0 0.0
        %1980 = vmatpush2.msra.mxu0 0.0
        %1981 = vmatprep.subr.mxu0 0.0
        %1982 = vmatpush2.msra.mxu0 0.0
        %1983 = vmatprep.subr.mxu0 0.0
        %1984 = vmatpush2.msra.mxu0 0.0
        %1985 = vmatprep.subr.mxu0 0.0
        %1986 = vmatpush2.msra.mxu0 0.0
        %1987 = vmatprep.subr.mxu0 0.0
        %1988 = vmatpush2.msra.mxu0 0.0
        %1989 = vmatprep.subr.mxu0 0.0
        %1990 = vmatpush2.msra.mxu0 0.0
        %1991 = vmatprep.mubr.f32.mxu0 0.0
        %1992 = vmatmul.mubr.f32.gmra.mxu0 %v406
        %v1993 = vpop.f32.mrf.mxu0
        %v1994 = vadd.f32 0.0, %v1993
        %v1995 = vpop.f32.mrf.mxu0
        %1996 = vmatprep.mubr.f32.mxu0 0.0
        %1997 = vmatmul.mubr.f32.gmra.mxu0 %v409
        %v1998 = vpop.f32.mrf.mxu0
        %v1999 = vadd.f32 0.0, %v1998
        %v2000 = vpop.f32.mrf.mxu0
        %2001 = vmatprep.mubr.f32.mxu0 0.0
        %2002 = vmatmul.mubr.f32.gmra.mxu0 %v412
        %v2003 = vpop.f32.mrf.mxu0
        %v2004 = vadd.f32 0.0, %v2003
        %v2005 = vpop.f32.mrf.mxu0
        %2006 = vmatprep.mubr.f32.mxu0 0.0
        %2007 = vmatmul.mubr.f32.gmra.mxu0 %v415
        %v2008 = vpop.f32.mrf.mxu0
        %v2009 = vadd.f32 0.0, %v2008
        %v2010 = vpop.f32.mrf.mxu0
        %2011 = vdwg.mxu0
        %v2013 = vsel %vm404, %v1994, 0
        %v2016 = vsel %vm404, %v1999, 0
        %v2019 = vsel %vm404, %v2004, 0
        %v2022 = vsel %vm404, %v2009, 0
        %2024 = vmatprep.subr.mxu0 0.0
        %2025 = vmatpush1.msra.mxu0 0.0
        %2026 = vmatprep.subr.mxu0 0.0
        %2027 = vmatpush1.msra.mxu0 0.0
        %2028 = vmatprep.subr.mxu0 0.0
        %2029 = vmatpush1.msra.mxu0 0.0
        %2030 = vmatprep.subr.mxu0 0.0
        %2031 = vmatpush1.msra.mxu0 0.0
        %2032 = vmatprep.subr.mxu0 0.0
        %2033 = vmatpush1.msra.mxu0 0.0
        %2034 = vmatprep.subr.mxu0 0.0
        %2035 = vmatpush1.msra.mxu0 0.0
        %2036 = vmatprep.subr.mxu0 0.0
        %2037 = vmatpush1.msra.mxu0 0.0
        %2038 = vmatprep.subr.mxu0 0.0
        %2039 = vmatpush1.msra.mxu0 0.0
        %2040 = vmatprep.subr.mxu0 0.0
        %2041 = vmatpush1.msra.mxu0 0.0
        %2042 = vmatprep.subr.mxu0 0.0
        %2043 = vmatpush1.msra.mxu0 0.0
        %2044 = vmatprep.subr.mxu0 0.0
        %2045 = vmatpush1.msra.mxu0 0.0
        %2046 = vmatprep.subr.mxu0 0.0
        %2047 = vmatpush1.msra.mxu0 0.0
        %2048 = vmatprep.subr.mxu0 0.0
        %2049 = vmatpush1.msra.mxu0 0.0
        %2050 = vmatprep.subr.mxu0 0.0
        %2051 = vmatpush1.msra.mxu0 0.0
        %2052 = vmatprep.subr.mxu0 0.0
        %2053 = vmatpush1.msra.mxu0 %v281
        %2054 = vmatprep.subr.mxu0 0.0
        %2055 = vmatpush1.msra.mxu0 %v280
        %2056 = vmatprep.subr.mxu0 0.0
        %2057 = vmatpush2.msra.mxu0 0.0
        %2058 = vmatprep.subr.mxu0 0.0
        %2059 = vmatpush2.msra.mxu0 0.0
        %2060 = vmatprep.subr.mxu0 0.0
        %2061 = vmatpush2.msra.mxu0 0.0
        %2062 = vmatprep.subr.mxu0 0.0
        %2063 = vmatpush2.msra.mxu0 0.0
        %2064 = vmatprep.subr.mxu0 0.0
        %2065 = vmatpush2.msra.mxu0 0.0
        %2066 = vmatprep.subr.mxu0 0.0
        %2067 = vmatpush2.msra.mxu0 0.0
        %2068 = vmatprep.subr.mxu0 0.0
        %2069 = vmatpush2.msra.mxu0 0.0
        %2070 = vmatprep.subr.mxu0 0.0
        %2071 = vmatpush2.msra.mxu0 0.0
        %2072 = vmatprep.subr.mxu0 0.0
        %2073 = vmatpush2.msra.mxu0 0.0
        %2074 = vmatprep.subr.mxu0 0.0
        %2075 = vmatpush2.msra.mxu0 0.0
        %2076 = vmatprep.subr.mxu0 0.0
        %2077 = vmatpush2.msra.mxu0 0.0
        %2078 = vmatprep.subr.mxu0 0.0
        %2079 = vmatpush2.msra.mxu0 0.0
        %2080 = vmatprep.subr.mxu0 0.0
        %2081 = vmatpush2.msra.mxu0 0.0
        %2082 = vmatprep.subr.mxu0 0.0
        %2083 = vmatpush2.msra.mxu0 0.0
        %2084 = vmatprep.subr.mxu0 0.0
        %2085 = vmatpush2.msra.mxu0 0.0
        %2086 = vmatprep.subr.mxu0 0.0
        %2087 = vmatpush2.msra.mxu0 0.0
        %2088 = vmatprep.mubr.f32.mxu0 0.0
        %2089 = vmatmul.mubr.f32.gmra.mxu0 %v2013
        %v2090 = vpop.f32.mrf.mxu0
        %v2091 = vadd.f32 0.0, %v2090
        %v2092 = vpop.f32.mrf.mxu0
        %2093 = vmatprep.mubr.f32.mxu0 0.0
        %2094 = vmatmul.mubr.f32.gmra.mxu0 %v2016
        %v2095 = vpop.f32.mrf.mxu0
        %v2096 = vadd.f32 0.0, %v2095
        %v2097 = vpop.f32.mrf.mxu0
        %2098 = vmatprep.mubr.f32.mxu0 0.0
        %2099 = vmatmul.mubr.f32.gmra.mxu0 %v2019
        %v2100 = vpop.f32.mrf.mxu0
        %v2101 = vadd.f32 0.0, %v2100
        %v2102 = vpop.f32.mrf.mxu0
        %2103 = vmatprep.mubr.f32.mxu0 0.0
        %2104 = vmatmul.mubr.f32.gmra.mxu0 %v2022
        %v2105 = vpop.f32.mrf.mxu0
        %v2106 = vadd.f32 0.0, %v2105
        %v2107 = vpop.f32.mrf.mxu0
        %2108 = vdwg.mxu0
        %s2109 = scalar_lea.vmem %s266, 160 [#allocation7]
        %2110 = vst.msk [vmem:[%s2109] sm:$0xff] %vm599, %v2091
        %2111 = vst.msk [vmem:[%s2109 + $0x8] sm:$0xff] %vm599, %v2096
        %2112 = vst.msk [vmem:[%s2109 + $0x10] sm:$0xff] %vm599, %v2101
        %2113 = vst.msk [vmem:[%s2109 + $0x18] sm:$0xff] %vm599, %v2106
        %s2114 = sadd.s32 %s282, 6
        %s2115 = sld [smem:[#allocation2 + %s2114]]
        %s2116 = sld [smem:[#allocation5 + %s2114]]
        %v2117 = vld [vmem:[%s274 + $0x6] sm:$0x1]
        %v2118 = vld [vmem:[%s274 + $0xe] sm:$0x1]
        %v2119 = vld [vmem:[%s274 + $0x16] sm:$0x1]
        %v2120 = vld [vmem:[%s274 + $0x1e] sm:$0x1]
        %v2121 = vld [vmem:[%s274 + $0x26] sm:$0x1]
        %v2122 = vld [vmem:[%s274 + $0x2e] sm:$0x1]
        %v2123 = vld [vmem:[%s274 + $0x36] sm:$0x1]
        %v2124 = vld [vmem:[%s274 + $0x3e] sm:$0x1]
        %v2125 = vld [vmem:[%s274 + $0x46] sm:$0x1]
        %v2126 = vld [vmem:[%s274 + $0x4e] sm:$0x1]
        %v2127 = vld [vmem:[%s274 + $0x56] sm:$0x1]
        %v2128 = vld [vmem:[%s274 + $0x5e] sm:$0x1]
        %v2129 = vld [vmem:[%s274 + $0x66] sm:$0x1]
        %v2130 = vld [vmem:[%s274 + $0x6e] sm:$0x1]
        %v2131 = vld [vmem:[%s274 + $0x76] sm:$0x1]
        %v2132 = vld [vmem:[%s274 + $0x7e] sm:$0x1]
        %v2133 = vstv %s2115
        %v2134 = vmul.f32 %v2117, %v2133
        %v2135 = vmul.f32 %v2118, %v2133
        %v2136 = vmul.f32 %v2119, %v2133
        %v2137 = vmul.f32 %v2120, %v2133
        %v2138 = vmul.f32 %v2121, %v2133
        %v2139 = vmul.f32 %v2122, %v2133
        %v2140 = vmul.f32 %v2123, %v2133
        %v2141 = vmul.f32 %v2124, %v2133
        %v2142 = vmul.f32 %v2125, %v2133
        %v2143 = vmul.f32 %v2126, %v2133
        %v2144 = vmul.f32 %v2127, %v2133
        %v2145 = vmul.f32 %v2128, %v2133
        %v2146 = vmul.f32 %v2129, %v2133
        %v2147 = vmul.f32 %v2130, %v2133
        %v2148 = vmul.f32 %v2131, %v2133
        %v2149 = vmul.f32 %v2132, %v2133
        %v2150 = vstv %s2116
        %v2151 = vadd.f32 %v2134, %v2150
        %v2152 = vadd.f32 %v2135, %v2150
        %v2153 = vadd.f32 %v2136, %v2150
        %v2154 = vadd.f32 %v2137, %v2150
        %v2155 = vadd.f32 %v2138, %v2150
        %v2156 = vadd.f32 %v2139, %v2150
        %v2157 = vadd.f32 %v2140, %v2150
        %v2158 = vadd.f32 %v2141, %v2150
        %v2159 = vadd.f32 %v2142, %v2150
        %v2160 = vadd.f32 %v2143, %v2150
        %v2161 = vadd.f32 %v2144, %v2150
        %v2162 = vadd.f32 %v2145, %v2150
        %v2163 = vadd.f32 %v2146, %v2150
        %v2164 = vadd.f32 %v2147, %v2150
        %v2165 = vadd.f32 %v2148, %v2150
        %v2166 = vadd.f32 %v2149, %v2150
        %v2167 = vmax.f32 %v2151, 0.0
        %v2168 = vmax.f32 %v2152, 0.0
        %v2169 = vmax.f32 %v2153, 0.0
        %v2170 = vmax.f32 %v2154, 0.0
        %v2171 = vmax.f32 %v2155, 0.0
        %v2172 = vmax.f32 %v2156, 0.0
        %v2173 = vmax.f32 %v2157, 0.0
        %v2174 = vmax.f32 %v2158, 0.0
        %v2175 = vmax.f32 %v2159, 0.0
        %v2176 = vmax.f32 %v2160, 0.0
        %v2177 = vmax.f32 %v2161, 0.0
        %v2178 = vmax.f32 %v2162, 0.0
        %v2179 = vmax.f32 %v2163, 0.0
        %v2180 = vmax.f32 %v2164, 0.0
        %v2181 = vmax.f32 %v2165, 0.0
        %v2182 = vmax.f32 %v2166, 0.0
        %v2199 = vrot.slane %v2168, 7
        %v2200 = vsel %vm368, %v2199, %v2167
        %v2201 = vrot.slane %v2169, 6
        %v2202 = vsel %vm371, %v2201, %v2200
        %v2203 = vrot.slane %v2170, 5
        %v2204 = vsel %vm374, %v2203, %v2202
        %v2205 = vrot.slane %v2171, 4
        %v2206 = vsel %vm377, %v2205, %v2204
        %v2207 = vrot.slane %v2172, 3
        %v2208 = vsel %vm380, %v2207, %v2206
        %v2209 = vrot.slane %v2173, 2
        %v2210 = vsel %vm383, %v2209, %v2208
        %v2211 = vrot.slane %v2174, 1
        %v2212 = vsel %vm386, %v2211, %v2210
        %v2213 = vrot.slane %v2176, 7
        %v2214 = vsel %vm368, %v2213, %v2175
        %v2215 = vrot.slane %v2177, 6
        %v2216 = vsel %vm371, %v2215, %v2214
        %v2217 = vrot.slane %v2178, 5
        %v2218 = vsel %vm374, %v2217, %v2216
        %v2219 = vrot.slane %v2179, 4
        %v2220 = vsel %vm377, %v2219, %v2218
        %v2221 = vrot.slane %v2180, 3
        %v2222 = vsel %vm380, %v2221, %v2220
        %v2223 = vrot.slane %v2181, 2
        %v2224 = vsel %vm383, %v2223, %v2222
        %v2225 = vrot.slane %v2182, 1
        %v2226 = vsel %vm386, %v2225, %v2224
        %2229 = vmatprep.subr.mxu0 0.0
        %2230 = vmatpush1.msra.mxu0 0.0
        %2231 = vmatprep.subr.mxu0 0.0
        %2232 = vmatpush1.msra.mxu0 0.0
        %2233 = vmatprep.subr.mxu0 0.0
        %2234 = vmatpush1.msra.mxu0 0.0
        %2235 = vmatprep.subr.mxu0 0.0
        %2236 = vmatpush1.msra.mxu0 0.0
        %2237 = vmatprep.subr.mxu0 0.0
        %2238 = vmatpush1.msra.mxu0 0.0
        %2239 = vmatprep.subr.mxu0 0.0
        %2240 = vmatpush1.msra.mxu0 0.0
        %2241 = vmatprep.subr.mxu0 0.0
        %2242 = vmatpush1.msra.mxu0 0.0
        %2243 = vmatprep.subr.mxu0 0.0
        %2244 = vmatpush1.msra.mxu0 0.0
        %2245 = vmatprep.subr.mxu0 0.0
        %2246 = vmatpush1.msra.mxu0 0.0
        %2247 = vmatprep.subr.mxu0 0.0
        %2248 = vmatpush1.msra.mxu0 0.0
        %2249 = vmatprep.subr.mxu0 0.0
        %2250 = vmatpush1.msra.mxu0 0.0
        %2251 = vmatprep.subr.mxu0 0.0
        %2252 = vmatpush1.msra.mxu0 0.0
        %2253 = vmatprep.subr.mxu0 0.0
        %2254 = vmatpush1.msra.mxu0 0.0
        %2255 = vmatprep.subr.mxu0 0.0
        %2256 = vmatpush1.msra.mxu0 0.0
        %2257 = vmatprep.subr.mxu0 0.0
        %2258 = vmatpush1.msra.mxu0 %v2226
        %2259 = vmatprep.subr.mxu0 0.0
        %2260 = vmatpush1.msra.mxu0 %v2212
        %2261 = vmatprep.subr.mxu0 0.0
        %2262 = vmatpush2.msra.mxu0 0.0
        %2263 = vmatprep.subr.mxu0 0.0
        %2264 = vmatpush2.msra.mxu0 0.0
        %2265 = vmatprep.subr.mxu0 0.0
        %2266 = vmatpush2.msra.mxu0 0.0
        %2267 = vmatprep.subr.mxu0 0.0
        %2268 = vmatpush2.msra.mxu0 0.0
        %2269 = vmatprep.subr.mxu0 0.0
        %2270 = vmatpush2.msra.mxu0 0.0
        %2271 = vmatprep.subr.mxu0 0.0
        %2272 = vmatpush2.msra.mxu0 0.0
        %2273 = vmatprep.subr.mxu0 0.0
        %2274 = vmatpush2.msra.mxu0 0.0
        %2275 = vmatprep.subr.mxu0 0.0
        %2276 = vmatpush2.msra.mxu0 0.0
        %2277 = vmatprep.subr.mxu0 0.0
        %2278 = vmatpush2.msra.mxu0 0.0
        %2279 = vmatprep.subr.mxu0 0.0
        %2280 = vmatpush2.msra.mxu0 0.0
        %2281 = vmatprep.subr.mxu0 0.0
        %2282 = vmatpush2.msra.mxu0 0.0
        %2283 = vmatprep.subr.mxu0 0.0
        %2284 = vmatpush2.msra.mxu0 0.0
        %2285 = vmatprep.subr.mxu0 0.0
        %2286 = vmatpush2.msra.mxu0 0.0
        %2287 = vmatprep.subr.mxu0 0.0
        %2288 = vmatpush2.msra.mxu0 0.0
        %2289 = vmatprep.subr.mxu0 0.0
        %2290 = vmatpush2.msra.mxu0 0.0
        %2291 = vmatprep.subr.mxu0 0.0
        %2292 = vmatpush2.msra.mxu0 0.0
        %2293 = vmatprep.mubr.f32.mxu0 0.0
        %2294 = vmatmul.mubr.f32.gmra.mxu0 %v406
        %v2295 = vpop.f32.mrf.mxu0
        %v2296 = vadd.f32 0.0, %v2295
        %v2297 = vpop.f32.mrf.mxu0
        %2298 = vmatprep.mubr.f32.mxu0 0.0
        %2299 = vmatmul.mubr.f32.gmra.mxu0 %v409
        %v2300 = vpop.f32.mrf.mxu0
        %v2301 = vadd.f32 0.0, %v2300
        %v2302 = vpop.f32.mrf.mxu0
        %2303 = vmatprep.mubr.f32.mxu0 0.0
        %2304 = vmatmul.mubr.f32.gmra.mxu0 %v412
        %v2305 = vpop.f32.mrf.mxu0
        %v2306 = vadd.f32 0.0, %v2305
        %v2307 = vpop.f32.mrf.mxu0
        %2308 = vmatprep.mubr.f32.mxu0 0.0
        %2309 = vmatmul.mubr.f32.gmra.mxu0 %v415
        %v2310 = vpop.f32.mrf.mxu0
        %v2311 = vadd.f32 0.0, %v2310
        %v2312 = vpop.f32.mrf.mxu0
        %2313 = vdwg.mxu0
        %v2315 = vsel %vm404, %v2296, 0
        %v2318 = vsel %vm404, %v2301, 0
        %v2321 = vsel %vm404, %v2306, 0
        %v2324 = vsel %vm404, %v2311, 0
        %2326 = vmatprep.subr.mxu0 0.0
        %2327 = vmatpush1.msra.mxu0 0.0
        %2328 = vmatprep.subr.mxu0 0.0
        %2329 = vmatpush1.msra.mxu0 0.0
        %2330 = vmatprep.subr.mxu0 0.0
        %2331 = vmatpush1.msra.mxu0 0.0
        %2332 = vmatprep.subr.mxu0 0.0
        %2333 = vmatpush1.msra.mxu0 0.0
        %2334 = vmatprep.subr.mxu0 0.0
        %2335 = vmatpush1.msra.mxu0 0.0
        %2336 = vmatprep.subr.mxu0 0.0
        %2337 = vmatpush1.msra.mxu0 0.0
        %2338 = vmatprep.subr.mxu0 0.0
        %2339 = vmatpush1.msra.mxu0 0.0
        %2340 = vmatprep.subr.mxu0 0.0
        %2341 = vmatpush1.msra.mxu0 0.0
        %2342 = vmatprep.subr.mxu0 0.0
        %2343 = vmatpush1.msra.mxu0 0.0
        %2344 = vmatprep.subr.mxu0 0.0
        %2345 = vmatpush1.msra.mxu0 0.0
        %2346 = vmatprep.subr.mxu0 0.0
        %2347 = vmatpush1.msra.mxu0 0.0
        %2348 = vmatprep.subr.mxu0 0.0
        %2349 = vmatpush1.msra.mxu0 0.0
        %2350 = vmatprep.subr.mxu0 0.0
        %2351 = vmatpush1.msra.mxu0 0.0
        %2352 = vmatprep.subr.mxu0 0.0
        %2353 = vmatpush1.msra.mxu0 0.0
        %2354 = vmatprep.subr.mxu0 0.0
        %2355 = vmatpush1.msra.mxu0 %v281
        %2356 = vmatprep.subr.mxu0 0.0
        %2357 = vmatpush1.msra.mxu0 %v280
        %2358 = vmatprep.subr.mxu0 0.0
        %2359 = vmatpush2.msra.mxu0 0.0
        %2360 = vmatprep.subr.mxu0 0.0
        %2361 = vmatpush2.msra.mxu0 0.0
        %2362 = vmatprep.subr.mxu0 0.0
        %2363 = vmatpush2.msra.mxu0 0.0
        %2364 = vmatprep.subr.mxu0 0.0
        %2365 = vmatpush2.msra.mxu0 0.0
        %2366 = vmatprep.subr.mxu0 0.0
        %2367 = vmatpush2.msra.mxu0 0.0
        %2368 = vmatprep.subr.mxu0 0.0
        %2369 = vmatpush2.msra.mxu0 0.0
        %2370 = vmatprep.subr.mxu0 0.0
        %2371 = vmatpush2.msra.mxu0 0.0
        %2372 = vmatprep.subr.mxu0 0.0
        %2373 = vmatpush2.msra.mxu0 0.0
        %2374 = vmatprep.subr.mxu0 0.0
        %2375 = vmatpush2.msra.mxu0 0.0
        %2376 = vmatprep.subr.mxu0 0.0
        %2377 = vmatpush2.msra.mxu0 0.0
        %2378 = vmatprep.subr.mxu0 0.0
        %2379 = vmatpush2.msra.mxu0 0.0
        %2380 = vmatprep.subr.mxu0 0.0
        %2381 = vmatpush2.msra.mxu0 0.0
        %2382 = vmatprep.subr.mxu0 0.0
        %2383 = vmatpush2.msra.mxu0 0.0
        %2384 = vmatprep.subr.mxu0 0.0
        %2385 = vmatpush2.msra.mxu0 0.0
        %2386 = vmatprep.subr.mxu0 0.0
        %2387 = vmatpush2.msra.mxu0 0.0
        %2388 = vmatprep.subr.mxu0 0.0
        %2389 = vmatpush2.msra.mxu0 0.0
        %2390 = vmatprep.mubr.f32.mxu0 0.0
        %2391 = vmatmul.mubr.f32.gmra.mxu0 %v2315
        %v2392 = vpop.f32.mrf.mxu0
        %v2393 = vadd.f32 0.0, %v2392
        %v2394 = vpop.f32.mrf.mxu0
        %2395 = vmatprep.mubr.f32.mxu0 0.0
        %2396 = vmatmul.mubr.f32.gmra.mxu0 %v2318
        %v2397 = vpop.f32.mrf.mxu0
        %v2398 = vadd.f32 0.0, %v2397
        %v2399 = vpop.f32.mrf.mxu0
        %2400 = vmatprep.mubr.f32.mxu0 0.0
        %2401 = vmatmul.mubr.f32.gmra.mxu0 %v2321
        %v2402 = vpop.f32.mrf.mxu0
        %v2403 = vadd.f32 0.0, %v2402
        %v2404 = vpop.f32.mrf.mxu0
        %2405 = vmatprep.mubr.f32.mxu0 0.0
        %2406 = vmatmul.mubr.f32.gmra.mxu0 %v2324
        %v2407 = vpop.f32.mrf.mxu0
        %v2408 = vadd.f32 0.0, %v2407
        %v2409 = vpop.f32.mrf.mxu0
        %2410 = vdwg.mxu0
        %s2411 = scalar_lea.vmem %s266, 192 [#allocation7]
        %2412 = vst.msk [vmem:[%s2411] sm:$0xff] %vm599, %v2393
        %2413 = vst.msk [vmem:[%s2411 + $0x8] sm:$0xff] %vm599, %v2398
        %2414 = vst.msk [vmem:[%s2411 + $0x10] sm:$0xff] %vm599, %v2403
        %2415 = vst.msk [vmem:[%s2411 + $0x18] sm:$0xff] %vm599, %v2408
        %s2416 = sadd.s32 %s282, 7
        %s2417 = sld [smem:[#allocation2 + %s2416]]
        %s2418 = sld [smem:[#allocation5 + %s2416]]
        %v2419 = vld [vmem:[%s274 + $0x7] sm:$0x1]
        %v2420 = vld [vmem:[%s274 + $0xf] sm:$0x1]
        %v2421 = vld [vmem:[%s274 + $0x17] sm:$0x1]
        %v2422 = vld [vmem:[%s274 + $0x1f] sm:$0x1]
        %v2423 = vld [vmem:[%s274 + $0x27] sm:$0x1]
        %v2424 = vld [vmem:[%s274 + $0x2f] sm:$0x1]
        %v2425 = vld [vmem:[%s274 + $0x37] sm:$0x1]
        %v2426 = vld [vmem:[%s274 + $0x3f] sm:$0x1]
        %v2427 = vld [vmem:[%s274 + $0x47] sm:$0x1]
        %v2428 = vld [vmem:[%s274 + $0x4f] sm:$0x1]
        %v2429 = vld [vmem:[%s274 + $0x57] sm:$0x1]
        %v2430 = vld [vmem:[%s274 + $0x5f] sm:$0x1]
        %v2431 = vld [vmem:[%s274 + $0x67] sm:$0x1]
        %v2432 = vld [vmem:[%s274 + $0x6f] sm:$0x1]
        %v2433 = vld [vmem:[%s274 + $0x77] sm:$0x1]
        %v2434 = vld [vmem:[%s274 + $0x7f] sm:$0x1]
        %v2435 = vstv %s2417
        %v2436 = vmul.f32 %v2419, %v2435
        %v2437 = vmul.f32 %v2420, %v2435
        %v2438 = vmul.f32 %v2421, %v2435
        %v2439 = vmul.f32 %v2422, %v2435
        %v2440 = vmul.f32 %v2423, %v2435
        %v2441 = vmul.f32 %v2424, %v2435
        %v2442 = vmul.f32 %v2425, %v2435
        %v2443 = vmul.f32 %v2426, %v2435
        %v2444 = vmul.f32 %v2427, %v2435
        %v2445 = vmul.f32 %v2428, %v2435
        %v2446 = vmul.f32 %v2429, %v2435
        %v2447 = vmul.f32 %v2430, %v2435
        %v2448 = vmul.f32 %v2431, %v2435
        %v2449 = vmul.f32 %v2432, %v2435
        %v2450 = vmul.f32 %v2433, %v2435
        %v2451 = vmul.f32 %v2434, %v2435
        %v2452 = vstv %s2418
        %v2453 = vadd.f32 %v2436, %v2452
        %v2454 = vadd.f32 %v2437, %v2452
        %v2455 = vadd.f32 %v2438, %v2452
        %v2456 = vadd.f32 %v2439, %v2452
        %v2457 = vadd.f32 %v2440, %v2452
        %v2458 = vadd.f32 %v2441, %v2452
        %v2459 = vadd.f32 %v2442, %v2452
        %v2460 = vadd.f32 %v2443, %v2452
        %v2461 = vadd.f32 %v2444, %v2452
        %v2462 = vadd.f32 %v2445, %v2452
        %v2463 = vadd.f32 %v2446, %v2452
        %v2464 = vadd.f32 %v2447, %v2452
        %v2465 = vadd.f32 %v2448, %v2452
        %v2466 = vadd.f32 %v2449, %v2452
        %v2467 = vadd.f32 %v2450, %v2452
        %v2468 = vadd.f32 %v2451, %v2452
        %v2469 = vmax.f32 %v2453, 0.0
        %v2470 = vmax.f32 %v2454, 0.0
        %v2471 = vmax.f32 %v2455, 0.0
        %v2472 = vmax.f32 %v2456, 0.0
        %v2473 = vmax.f32 %v2457, 0.0
        %v2474 = vmax.f32 %v2458, 0.0
        %v2475 = vmax.f32 %v2459, 0.0
        %v2476 = vmax.f32 %v2460, 0.0
        %v2477 = vmax.f32 %v2461, 0.0
        %v2478 = vmax.f32 %v2462, 0.0
        %v2479 = vmax.f32 %v2463, 0.0
        %v2480 = vmax.f32 %v2464, 0.0
        %v2481 = vmax.f32 %v2465, 0.0
        %v2482 = vmax.f32 %v2466, 0.0
        %v2483 = vmax.f32 %v2467, 0.0
        %v2484 = vmax.f32 %v2468, 0.0
        %v2501 = vrot.slane %v2470, 7
        %v2502 = vsel %vm368, %v2501, %v2469
        %v2503 = vrot.slane %v2471, 6
        %v2504 = vsel %vm371, %v2503, %v2502
        %v2505 = vrot.slane %v2472, 5
        %v2506 = vsel %vm374, %v2505, %v2504
        %v2507 = vrot.slane %v2473, 4
        %v2508 = vsel %vm377, %v2507, %v2506
        %v2509 = vrot.slane %v2474, 3
        %v2510 = vsel %vm380, %v2509, %v2508
        %v2511 = vrot.slane %v2475, 2
        %v2512 = vsel %vm383, %v2511, %v2510
        %v2513 = vrot.slane %v2476, 1
        %v2514 = vsel %vm386, %v2513, %v2512
        %v2515 = vrot.slane %v2478, 7
        %v2516 = vsel %vm368, %v2515, %v2477
        %v2517 = vrot.slane %v2479, 6
        %v2518 = vsel %vm371, %v2517, %v2516
        %v2519 = vrot.slane %v2480, 5
        %v2520 = vsel %vm374, %v2519, %v2518
        %v2521 = vrot.slane %v2481, 4
        %v2522 = vsel %vm377, %v2521, %v2520
        %v2523 = vrot.slane %v2482, 3
        %v2524 = vsel %vm380, %v2523, %v2522
        %v2525 = vrot.slane %v2483, 2
        %v2526 = vsel %vm383, %v2525, %v2524
        %v2527 = vrot.slane %v2484, 1
        %v2528 = vsel %vm386, %v2527, %v2526
        %2531 = vmatprep.subr.mxu0 0.0
        %2532 = vmatpush1.msra.mxu0 0.0
        %2533 = vmatprep.subr.mxu0 0.0
        %2534 = vmatpush1.msra.mxu0 0.0
        %2535 = vmatprep.subr.mxu0 0.0
        %2536 = vmatpush1.msra.mxu0 0.0
        %2537 = vmatprep.subr.mxu0 0.0
        %2538 = vmatpush1.msra.mxu0 0.0
        %2539 = vmatprep.subr.mxu0 0.0
        %2540 = vmatpush1.msra.mxu0 0.0
        %2541 = vmatprep.subr.mxu0 0.0
        %2542 = vmatpush1.msra.mxu0 0.0
        %2543 = vmatprep.subr.mxu0 0.0
        %2544 = vmatpush1.msra.mxu0 0.0
        %2545 = vmatprep.subr.mxu0 0.0
        %2546 = vmatpush1.msra.mxu0 0.0
        %2547 = vmatprep.subr.mxu0 0.0
        %2548 = vmatpush1.msra.mxu0 0.0
        %2549 = vmatprep.subr.mxu0 0.0
        %2550 = vmatpush1.msra.mxu0 0.0
        %2551 = vmatprep.subr.mxu0 0.0
        %2552 = vmatpush1.msra.mxu0 0.0
        %2553 = vmatprep.subr.mxu0 0.0
        %2554 = vmatpush1.msra.mxu0 0.0
        %2555 = vmatprep.subr.mxu0 0.0
        %2556 = vmatpush1.msra.mxu0 0.0
        %2557 = vmatprep.subr.mxu0 0.0
        %2558 = vmatpush1.msra.mxu0 0.0
        %2559 = vmatprep.subr.mxu0 0.0
        %2560 = vmatpush1.msra.mxu0 %v2528
        %2561 = vmatprep.subr.mxu0 0.0
        %2562 = vmatpush1.msra.mxu0 %v2514
        %2563 = vmatprep.subr.mxu0 0.0
        %2564 = vmatpush2.msra.mxu0 0.0
        %2565 = vmatprep.subr.mxu0 0.0
        %2566 = vmatpush2.msra.mxu0 0.0
        %2567 = vmatprep.subr.mxu0 0.0
        %2568 = vmatpush2.msra.mxu0 0.0
        %2569 = vmatprep.subr.mxu0 0.0
        %2570 = vmatpush2.msra.mxu0 0.0
        %2571 = vmatprep.subr.mxu0 0.0
        %2572 = vmatpush2.msra.mxu0 0.0
        %2573 = vmatprep.subr.mxu0 0.0
        %2574 = vmatpush2.msra.mxu0 0.0
        %2575 = vmatprep.subr.mxu0 0.0
        %2576 = vmatpush2.msra.mxu0 0.0
        %2577 = vmatprep.subr.mxu0 0.0
        %2578 = vmatpush2.msra.mxu0 0.0
        %2579 = vmatprep.subr.mxu0 0.0
        %2580 = vmatpush2.msra.mxu0 0.0
        %2581 = vmatprep.subr.mxu0 0.0
        %2582 = vmatpush2.msra.mxu0 0.0
        %2583 = vmatprep.subr.mxu0 0.0
        %2584 = vmatpush2.msra.mxu0 0.0
        %2585 = vmatprep.subr.mxu0 0.0
        %2586 = vmatpush2.msra.mxu0 0.0
        %2587 = vmatprep.subr.mxu0 0.0
        %2588 = vmatpush2.msra.mxu0 0.0
        %2589 = vmatprep.subr.mxu0 0.0
        %2590 = vmatpush2.msra.mxu0 0.0
        %2591 = vmatprep.subr.mxu0 0.0
        %2592 = vmatpush2.msra.mxu0 0.0
        %2593 = vmatprep.subr.mxu0 0.0
        %2594 = vmatpush2.msra.mxu0 0.0
        %2595 = vmatprep.mubr.f32.mxu0 0.0
        %2596 = vmatmul.mubr.f32.gmra.mxu0 %v406
        %v2597 = vpop.f32.mrf.mxu0
        %v2598 = vadd.f32 0.0, %v2597
        %v2599 = vpop.f32.mrf.mxu0
        %2600 = vmatprep.mubr.f32.mxu0 0.0
        %2601 = vmatmul.mubr.f32.gmra.mxu0 %v409
        %v2602 = vpop.f32.mrf.mxu0
        %v2603 = vadd.f32 0.0, %v2602
        %v2604 = vpop.f32.mrf.mxu0
        %2605 = vmatprep.mubr.f32.mxu0 0.0
        %2606 = vmatmul.mubr.f32.gmra.mxu0 %v412
        %v2607 = vpop.f32.mrf.mxu0
        %v2608 = vadd.f32 0.0, %v2607
        %v2609 = vpop.f32.mrf.mxu0
        %2610 = vmatprep.mubr.f32.mxu0 0.0
        %2611 = vmatmul.mubr.f32.gmra.mxu0 %v415
        %v2612 = vpop.f32.mrf.mxu0
        %v2613 = vadd.f32 0.0, %v2612
        %v2614 = vpop.f32.mrf.mxu0
        %2615 = vdwg.mxu0
        %v2617 = vsel %vm404, %v2598, 0
        %v2620 = vsel %vm404, %v2603, 0
        %v2623 = vsel %vm404, %v2608, 0
        %v2626 = vsel %vm404, %v2613, 0
        %2628 = vmatprep.subr.mxu0 0.0
        %2629 = vmatpush1.msra.mxu0 0.0
        %2630 = vmatprep.subr.mxu0 0.0
        %2631 = vmatpush1.msra.mxu0 0.0
        %2632 = vmatprep.subr.mxu0 0.0
        %2633 = vmatpush1.msra.mxu0 0.0
        %2634 = vmatprep.subr.mxu0 0.0
        %2635 = vmatpush1.msra.mxu0 0.0
        %2636 = vmatprep.subr.mxu0 0.0
        %2637 = vmatpush1.msra.mxu0 0.0
        %2638 = vmatprep.subr.mxu0 0.0
        %2639 = vmatpush1.msra.mxu0 0.0
        %2640 = vmatprep.subr.mxu0 0.0
        %2641 = vmatpush1.msra.mxu0 0.0
        %2642 = vmatprep.subr.mxu0 0.0
        %2643 = vmatpush1.msra.mxu0 0.0
        %2644 = vmatprep.subr.mxu0 0.0
        %2645 = vmatpush1.msra.mxu0 0.0
        %2646 = vmatprep.subr.mxu0 0.0
        %2647 = vmatpush1.msra.mxu0 0.0
        %2648 = vmatprep.subr.mxu0 0.0
        %2649 = vmatpush1.msra.mxu0 0.0
        %2650 = vmatprep.subr.mxu0 0.0
        %2651 = vmatpush1.msra.mxu0 0.0
        %2652 = vmatprep.subr.mxu0 0.0
        %2653 = vmatpush1.msra.mxu0 0.0
        %2654 = vmatprep.subr.mxu0 0.0
        %2655 = vmatpush1.msra.mxu0 0.0
        %2656 = vmatprep.subr.mxu0 0.0
        %2657 = vmatpush1.msra.mxu0 %v281
        %2658 = vmatprep.subr.mxu0 0.0
        %2659 = vmatpush1.msra.mxu0 %v280
        %2660 = vmatprep.subr.mxu0 0.0
        %2661 = vmatpush2.msra.mxu0 0.0
        %2662 = vmatprep.subr.mxu0 0.0
        %2663 = vmatpush2.msra.mxu0 0.0
        %2664 = vmatprep.subr.mxu0 0.0
        %2665 = vmatpush2.msra.mxu0 0.0
        %2666 = vmatprep.subr.mxu0 0.0
        %2667 = vmatpush2.msra.mxu0 0.0
        %2668 = vmatprep.subr.mxu0 0.0
        %2669 = vmatpush2.msra.mxu0 0.0
        %2670 = vmatprep.subr.mxu0 0.0
        %2671 = vmatpush2.msra.mxu0 0.0
        %2672 = vmatprep.subr.mxu0 0.0
        %2673 = vmatpush2.msra.mxu0 0.0
        %2674 = vmatprep.subr.mxu0 0.0
        %2675 = vmatpush2.msra.mxu0 0.0
        %2676 = vmatprep.subr.mxu0 0.0
        %2677 = vmatpush2.msra.mxu0 0.0
        %2678 = vmatprep.subr.mxu0 0.0
        %2679 = vmatpush2.msra.mxu0 0.0
        %2680 = vmatprep.subr.mxu0 0.0
        %2681 = vmatpush2.msra.mxu0 0.0
        %2682 = vmatprep.subr.mxu0 0.0
        %2683 = vmatpush2.msra.mxu0 0.0
        %2684 = vmatprep.subr.mxu0 0.0
        %2685 = vmatpush2.msra.mxu0 0.0
        %2686 = vmatprep.subr.mxu0 0.0
        %2687 = vmatpush2.msra.mxu0 0.0
        %2688 = vmatprep.subr.mxu0 0.0
        %2689 = vmatpush2.msra.mxu0 0.0
        %2690 = vmatprep.subr.mxu0 0.0
        %2691 = vmatpush2.msra.mxu0 0.0
        %2692 = vmatprep.mubr.f32.mxu0 0.0
        %2693 = vmatmul.mubr.f32.gmra.mxu0 %v2617
        %v2694 = vpop.f32.mrf.mxu0
        %v2695 = vadd.f32 0.0, %v2694
        %v2696 = vpop.f32.mrf.mxu0
        %2697 = vmatprep.mubr.f32.mxu0 0.0
        %2698 = vmatmul.mubr.f32.gmra.mxu0 %v2620
        %v2699 = vpop.f32.mrf.mxu0
        %v2700 = vadd.f32 0.0, %v2699
        %v2701 = vpop.f32.mrf.mxu0
        %2702 = vmatprep.mubr.f32.mxu0 0.0
        %2703 = vmatmul.mubr.f32.gmra.mxu0 %v2623
        %v2704 = vpop.f32.mrf.mxu0
        %v2705 = vadd.f32 0.0, %v2704
        %v2706 = vpop.f32.mrf.mxu0
        %2707 = vmatprep.mubr.f32.mxu0 0.0
        %2708 = vmatmul.mubr.f32.gmra.mxu0 %v2626
        %v2709 = vpop.f32.mrf.mxu0
        %v2710 = vadd.f32 0.0, %v2709
        %v2711 = vpop.f32.mrf.mxu0
        %2712 = vdwg.mxu0
        %s2713 = scalar_lea.vmem %s266, 224 [#allocation7]
        %2714 = vst.msk [vmem:[%s2713] sm:$0xff] %vm599, %v2695
        %2715 = vst.msk [vmem:[%s2713 + $0x8] sm:$0xff] %vm599, %v2700
        %2716 = vst.msk [vmem:[%s2713 + $0x10] sm:$0xff] %vm599, %v2705
        %2717 = vst.msk [vmem:[%s2713 + $0x18] sm:$0xff] %vm599, %v2710
        %s2718 = sand.u32 %s155, 1
        %s2719 = scalar_lea.sflag [#allocation3], %s2718
        %s2720 = sand.u32 %s155, 1
        %s2721 = smul.addr %s2720, 256
        %s2722 = scalar_lea.vmem [#allocation7], %s2721
        // Predicated region
        $region49: #{unet_up_forward.3} parent=39 // pred_check
          %p2723 = pneg %p165
        $region50: #{unet_up_forward.3} parent=39 // pred_check_branch
          %2725 = sbr.rel (%p2723) target = $region52
        $region51: #{unet_up_forward.3} parent=39 // pred_region
          %s2726 = smul.u32 8, %s26
          %s2728 = ssub.s32 4096, 4096
          %2729 = vsyncadd %s2719, %s2728
          %s2730 = smul.addr %s2726, 4
          %s2731 = smul.addr %s25, 32
          %s2732 = sadd.s32 %s2730, %s2731
          %s2733 = smul.addr %s2732, 128
          %s2734 = scalar_lea.hbm %s5, %s2733
          %s2735 = sshll.u32 %s2722, 4
          %s2736 = int_to_ptr.vmem [resolvable:$true] %s2735
          %2741 = dma.vmem_to_hbm [thread:$0]  %s2736, 4096, %s2734, %s2719, 128, 128, 8
        $region52: #{unet_up_forward.3} parent=39 // pred_fallthru
          _
      $region40: #{unet_up_forward.3} parent=5 // pred_fallthru
        _
      %p2742 = scmp.le.s32.totalorder 2, %s16
      // Predicated region
      $region53: #{unet_up_forward.3} parent=5 // pred_check
        %p2743 = pneg %p2742
      $region54: #{unet_up_forward.3} parent=5 // pred_check_branch
        %2745 = sbr.rel (%p2743) target = $region56
      $region55: #{unet_up_forward.3} parent=5 // pred_region
        %s2746 = ssub.s32 %s16, 2
        // Predicated region
        $region57: #{unet_up_forward.3} parent=55 // pred_check
          %p2747 = pneg %p171
        $region58: #{unet_up_forward.3} parent=55 // pred_check_branch
          %2749 = sbr.rel (%p2747) target = $region60
        $region59: #{unet_up_forward.3} parent=55 // pred_region
          %s2750 = sand.u32 %s156, 1
          %s2751 = scalar_lea.sflag [#allocation3], %s2750
          %s2752 = sand.u32 %s156, 1
          %s2753 = smul.addr %s2752, 256
          %s2754 = scalar_lea.vmem [#allocation7], %s2753
          %2755 = dma.done %s2751, 4096
        $region60: #{unet_up_forward.3} parent=55 // pred_fallthru
          _
      $region56: #{unet_up_forward.3} parent=5 // pred_fallthru
        _
    $region6: #{unet_up_forward.3} parent=1 // loop_footer
      %s20 = sadd.s32 1, %s16
    $region7: #{unet_up_forward.3} parent=1 // loop_footer_branch
      %15 = sbr.rel target = $region3
    $region8: #{unet_up_forward.3} parent=1 // loop_exit
      _
    %2756 = vsyncpa [#allocation3], 1
    %s2757 = scalar_lea.sflag [#allocation3], 1
    %2758 = vsyncpa %s2757, 1
    %2759 = vsyncpa [#allocation4], 1
    %s2760 = scalar_lea.sflag [#allocation4], 1
    %2761 = vsyncpa %s2760, 1
    %2762 = vsyncpa [#allocation6], 1

</llo_original>
